<compile_context>
chip_gen: v7x
topology: tpu7x:2x2x1
jax: 0.10.0
libtpu: 0.0.40
codegen_flags: <defaults>
</compile_context>

<pallas_src>
import jax
import jax.numpy as jnp
from jax.experimental import pallas as pl
from jax.experimental.pallas import tpu as pltpu


def _round_up(x, m):
    return (x + m - 1) // m * m


def make_res_af_group(n_feats, n_block, height, width, ksize=5):
    """Returns forward(x_nchw, snr, packed_params) -> (B, C, H, W)."""
    C = n_feats
    CP = _round_up(C, 8)                      # channel dim padded to a full sublane tile
    Nh = max(n_feats // 2, 1)
    H, W, K = height, width, ksize
    PAD = (K - 1) // 2
    WP = W + 2 * PAD
    HW = H * W
    KKCP = K * K * CP

    # Flat "slab" layout on the lane axis: slab index p = y*WP + x holds pixel (y, x);
    # the slab width is rounded up to a multiple of 128 lanes.
    LH = _round_up(H * WP, 128)
    SHIFT_CENTER = PAD * WP + PAD             # flat shift of the conv centre tap
    SHIFT_MAX = (K - 1) * WP + (K - 1)        # largest im2col shift
    ORG = _round_up(SHIFT_CENTER, 128)        # lane-ALIGNED slab origin inside xflat
    BASE = ORG - SHIFT_CENTER                 # xflat index of padded-image flat index 0
    LXF = _round_up(BASE + SHIFT_MAX + LH, 128)   # resident padded-activation scratch width

    # Depth-C matmuls (GDN / 1x1 conv): VPU outer-product accumulate when C is tiny,
    # MXU dot once C is large enough to use the contraction depth.
    if C >= 128:
        def small_mm(m, v):
            return jnp.dot(m, v, preferred_element_type=jnp.float32)
    else:
        def small_mm(m, v):
            # only the first C columns of m / rows of v can be non-zero (channel padding)
            out = m[:, 0:1] * v[0:1, :]
            for c in range(1, C):
                out = out + m[:, c:c + 1] * v[c:c + 1, :]
            return out

    def kernel(x_ref, mask_ref, snr_ref, alpha_ref,
               w1m_ref, w2m_ref, g1_ref, b1_ref, g2_ref, b2_ref,
               fw1t_ref, fw1s_ref, fb1_ref, fw2_ref, fb2_ref,
               out_ref, xflat_ref, col_ref):
        b = pl.program_id(0)

        # ---- per-batch prologue: tiny memset of the halo scratch + ONE dense,
        #      lane-aligned copy of the wrapper-prepared zero-padded input slab ----
        xflat_ref[...] = jnp.zeros_like(xflat_ref)
        xflat_ref[:, ORG:ORG + LH] = x_ref[...]

        mask = mask_ref[...]                  # (1, LH): 1.0 on valid pixels
        snr = snr_ref[b]                      # SMEM scalar

        def block(j, carry):
            # resident activation of the previous block == residual input (f32, aligned)
            res = xflat_ref[:, ORG:ORG + LH]                          # (CP, LH)

            # ---- im2col: K*K statically shifted copies into the bf16 scratch.
            #      Each tap write is a full, aligned 8-sublane store (CP = 8k). ----
            for t in range(K * K):
                s = (t // K) * WP + (t % K)
                col_ref[t * CP:(t + 1) * CP, :] = (
                    xflat_ref[:, BASE + s:BASE + s + LH].astype(jnp.bfloat16))

            # ---- conv1 (KxK) as ONE bf16 MXU matmul, f32 accumulation ----
            a = jnp.dot(w1m_ref[j], col_ref[...],
                        preferred_element_type=jnp.float32)           # (CP, LH)

            alpha = alpha_ref[j]                                      # PReLU slope

            # ---- GDN1: x * rsqrt(beta + gamma @ x^2)  (VPU matmul + EUP rsqrt) ----
            d1 = small_mm(g1_ref[j], a * a) + b1_ref[j]
            a = a * jax.lax.rsqrt(d1)
            a = jnp.where(a >= 0.0, a, alpha * a)                     # PReLU

            # ---- conv2 (1x1) + GDN2, both on the VPU in f32 ----
            z = small_mm(w2m_ref[j], a)
            d2 = small_mm(g2_ref[j], z * z) + b2_ref[j]
            z = z * jax.lax.rsqrt(d2)

            # ---- residual add + PReLU ----
            z = z + res
            z = jnp.where(z >= 0.0, z, alpha * z)

            # ---- AF block: SNR-conditioned channel attention (VPU/XLU only) ----
            mu = jnp.sum(z * mask, axis=1, keepdims=True) * (1.0 / HW)    # (CP, 1)
            h = (jnp.sum(fw1t_ref[j] * mu, axis=0, keepdims=True)
                 + snr * fw1s_ref[j] + fb1_ref[j])                        # (1, Nh)
            h = jnp.maximum(h, 0.0)
            s_att = jnp.sum(fw2_ref[j] * h, axis=1, keepdims=True) + fb2_ref[j]
            s_att = jax.nn.sigmoid(s_att)                                 # (CP, 1)

            # ---- lane-ALIGNED resident writeback (stays in VMEM for the next block);
            #      mask re-creates the zero halo of the padded layout. ----
            xflat_ref[:, ORG:ORG + LH] = z * s_att * mask
            return carry

        jax.lax.fori_loop(0, n_block, block, 0, unroll=True)

        # ---- lane-dense output store, once per batch element ----
        out_ref[...] = xflat_ref[:, ORG:ORG + LH].astype(out_ref.dtype)

    def forward(x_nchw, snr, kp):
        """x_nchw: (B, C, H, W); snr: (B,) or (B, 1). Returns (B, C, H, W)."""
        B = x_nchw.shape[0]
        x32 = x_nchw.astype(jnp.float32)
        # Flat zero-padded "slab" layout (cheap XLA pads, no in-kernel row copies):
        # slab element p = y*WP + x holds x[..., y, x]; zero elsewhere.
        xw = jnp.pad(x32, ((0, 0), (0, CP - C), (0, 0), (0, WP - W)))
        x_slab = jnp.pad(xw.reshape(B, CP, H * WP), ((0, 0), (0, 0), (0, LH - H * WP)))
        snr_vec = snr.reshape(B).astype(jnp.float32)

        pidx = jnp.arange(LH, dtype=jnp.int32)
        mask = ((pidx % WP < W) & (pidx // WP < H)).astype(jnp.float32).reshape(1, LH)

        # All per-block weights are stacked along a leading n_block axis and kept fully
        # resident in VMEM (index map is constant); only x / out stream per grid step.
        wspec = lambda shape: pl.BlockSpec(shape, lambda b: (0,) * len(shape))
        in_specs = [
            pl.BlockSpec((None, CP, LH), lambda b: (b, 0, 0)),     # x slab (per batch elt)
            pl.BlockSpec((1, LH), lambda b: (0, 0)),               # valid-pixel mask
            pl.BlockSpec(memory_space=pltpu.SMEM),                 # snr   (B,)
            pl.BlockSpec(memory_space=pltpu.SMEM),                 # alpha (n_block,)
            wspec((n_block, CP, KKCP)),                            # w1m  (bf16)
            wspec((n_block, CP, CP)),                              # w2m
            wspec((n_block, CP, CP)),                              # g1
            wspec((n_block, CP, 1)),                               # b1
            wspec((n_block, CP, CP)),                              # g2
            wspec((n_block, CP, 1)),                               # b2
            wspec((n_block, CP, Nh)),                              # fw1t
            wspec((n_block, 1, Nh)),                               # fw1s
            wspec((n_block, 1, Nh)),                               # fb1
            wspec((n_block, CP, Nh)),                              # fw2
            wspec((n_block, CP, 1)),                               # fb2
        ]
        out_spec = pl.BlockSpec((None, CP, LH), lambda b: (b, 0, 0))

        # NOTE: for production H/W/C add spatial tiling with an (n_block*PAD)-row halo and
        # re-budget the im2col scratch for v7x's 64 MiB VMEM (see header notes).
        out_flat = pl.pallas_call(
            kernel,
            out_shape=jax.ShapeDtypeStruct((B, CP, LH), jnp.float32),
            grid=(B,),
            in_specs=in_specs,
            out_specs=out_spec,
            scratch_shapes=[pltpu.VMEM((CP, LXF), jnp.float32),        # resident activation
                            pltpu.VMEM((KKCP, LH), jnp.bfloat16)],     # bf16 im2col
            compiler_params=pltpu.CompilerParams(
                dimension_semantics=("parallel",),
                vmem_limit_bytes=32 * 1024 * 1024),
        )(x_slab, mask, snr_vec, kp["alpha"],
          kp["w1m"], kp["w2m"], kp["g1"], kp["b1"], kp["g2"], kp["b2"],
          kp["fw1t"], kp["fw1s"], kp["fb1"], kp["fw2"], kp["fb2"])

        # un-pad on the XLA side (free slices/reshape)
        return out_flat[:, :C, :H * WP].reshape(B, C, H, WP)[:, :, :, :W]

    return forward


# --------------------------- parameters ------------------------------------------


def init_block_params(key, C, ksize=5):
    """Canonical (PyTorch-like) per-block parameters."""
    Nh = max(C // 2, 1)
    ks = jax.random.split(key, 6)
    return dict(
        w1=jax.random.normal(ks[0], (ksize, ksize, C, C), jnp.float32)
        / jnp.sqrt(C * ksize * ksize),                                    # (K,K,Cin,Cout)
        w2=jax.random.normal(ks[1], (C, C), jnp.float32) / jnp.sqrt(C),   # (Cout,Cin) 1x1
        g1=0.1 * jnp.eye(C, dtype=jnp.float32) + 1e-3,
        b1=jnp.ones((C,), jnp.float32),
        g2=0.1 * jnp.eye(C, dtype=jnp.float32) + 1e-3,
        b2=jnp.ones((C,), jnp.float32),
        alpha=jnp.array(0.25, dtype=jnp.float32),                         # nn.PReLU() default
        fc1_w=jax.random.normal(ks[2], (Nh, C + 1), jnp.float32) / jnp.sqrt(C + 1),
        fc1_b=0.01 * jax.random.normal(ks[3], (Nh,), jnp.float32),
        fc2_w=jax.random.normal(ks[4], (C, Nh), jnp.float32) / jnp.sqrt(Nh),
        fc2_b=0.01 * jax.random.normal(ks[5], (C,), jnp.float32),
    )


def pack_params(params_list, C, ksize=5):
    """Stack per-block params along n_block; pad channels to CP=8k sublane tiles;
    conv weight in bf16 for the MXU."""
    K = ksize
    CP = _round_up(C, 8)
    cpad = CP - C

    def stack(fn):
        return jnp.stack([fn(p) for p in params_list], axis=0)

    def pad_mat(m):                       # (C, C) -> (CP, CP), zero padded
        return jnp.pad(m, ((0, cpad), (0, cpad)))

    def pad_rows(m, value=0.0):           # (C, X) -> (CP, X)
        return jnp.pad(m, ((0, cpad), (0, 0)), constant_values=value)

    def w1_pack(p):
        w = jnp.transpose(p["w1"], (3, 0, 1, 2))                     # (Cout, K, K, Cin)
        w = jnp.pad(w, ((0, cpad), (0, 0), (0, 0), (0, cpad)))       # (CP, K, K, CP)
        return w.reshape(CP, K * K * CP).astype(jnp.bfloat16)        # bf16 MXU operand

    return dict(
        alpha=stack(lambda p: p["alpha"]),                                        # (nb,)
        w1m=stack(w1_pack),                                                       # (nb,CP,KKCP)
        w2m=stack(lambda p: pad_mat(p["w2"])),
        g1=stack(lambda p: pad_mat(p["g1"])),
        b1=stack(lambda p: pad_rows(p["b1"].reshape(C, 1), 1.0)),   # pad=1 keeps rsqrt finite
        g2=stack(lambda p: pad_mat(p["g2"])),
        b2=stack(lambda p: pad_rows(p["b2"].reshape(C, 1), 1.0)),
        fw1t=stack(lambda p: pad_rows(p["fc1_w"][:, :C].T)),                      # (nb,CP,Nh)
        fw1s=stack(lambda p: p["fc1_w"][:, C:].T),                                # (nb,1,Nh)
        fb1=stack(lambda p: p["fc1_b"].reshape(1, -1)),                           # (nb,1,Nh)
        fw2=stack(lambda p: pad_rows(p["fc2_w"])),                                # (nb,CP,Nh)
        fb2=stack(lambda p: pad_rows(p["fc2_b"].reshape(C, 1))),                  # (nb,CP,1)
    )


# --------------------------- pure-JAX reference -----------------------------------


def ref_res_af_group(x, snr, params_list, ksize=5):
    """Straight-line f32 JAX reference of ResAFGroup (same assumptions as the kernel)."""
    pad = (ksize - 1) // 2
    hp = jax.lax.Precision.HIGHEST
    out = x.astype(jnp.float32)
    snr_vec = snr.reshape(-1).astype(jnp.float32)
    for p in params_list:
        w_oihw = jnp.transpose(p["w1"], (3, 2, 0, 1))
        a = jax.lax.conv_general_dilated(
            out, w_oihw, (1, 1), ((pad, pad), (pad, pad)),
            dimension_numbers=("NCHW", "OIHW", "NCHW"), precision=hp)

        def gdn(v, g, beta):
            d = jnp.einsum("ij,bjhw->bihw", g, v * v, precision=hp) + beta.reshape(1, -1, 1, 1)
            return v / jnp.sqrt(d)

        a = gdn(a, p["g1"], p["b1"])
        a = jnp.where(a >= 0, a, p["alpha"] * a)
        a = jnp.einsum("oi,bihw->bohw", p["w2"], a, precision=hp)
        a = gdn(a, p["g2"], p["b2"])
        a = a + out
        a = jnp.where(a >= 0, a, p["alpha"] * a)
        mu = jnp.mean(a, axis=(2, 3))
        inp = jnp.concatenate([mu, snr_vec[:, None]], axis=1)
        h = jnp.maximum(jnp.matmul(inp, p["fc1_w"].T, precision=hp) + p["fc1_b"], 0.0)
        s = jax.nn.sigmoid(jnp.matmul(h, p["fc2_w"].T, precision=hp) + p["fc2_b"])
        out = a * s[:, :, None, None]
    return out


# --------------------------- demo -------------------------------------------------

if __name__ == "__main__":
    B, C, H, W = 2, 4, 16, 16          # n_feats = 4
    n_block = 2
    ksize = 5

    key = jax.random.PRNGKey(0)
    kx, ks, kp_ = jax.random.split(key, 3)
    x = jax.random.normal(kx, (B, C, H, W), jnp.float32)               # NCHW like PyTorch
    snr = jax.random.uniform(ks, (B, 1), jnp.float32, 0.0, 20.0)
    params_list = [init_block_params(k, C, ksize) for k in jax.random.split(kp_, n_block)]
    kparams = pack_params(params_list, C, ksize)

    fwd = make_res_af_group(C, n_block, H, W, ksize)
    fn = jax.jit(lambda xx, ss: fwd(xx, ss, kparams))
    out = jax.block_until_ready(fn(x, snr))

    assert out.shape == (B, C, H, W), out.shape
    assert bool(jnp.all(jnp.isfinite(out)))

    ref = ref_res_af_group(x, snr, params_list, ksize)
    max_err = float(jnp.max(jnp.abs(out - ref)))
    # 5e-2 tolerance accounts for the bf16 MXU operands of the KxK conv (reference is
    # all-f32 HIGHEST); indexing/layout bugs would produce O(1) errors.
    assert max_err < 5e-2, f"max abs err vs reference = {max_err}"

    print("KERNEL_OK")
</pallas_src>

<mosaic_0001>
module attributes {stable_mosaic.version = 11 : i64} {
  func.func @kernel(%arg0: i32, %arg1: memref<1x8x384xf32, #tpu.memory_space<vmem>>, %arg2: memref<1x384xf32, #tpu.memory_space<vmem>>, %arg3: memref<2xf32, #tpu.memory_space<smem>>, %arg4: memref<2xf32, #tpu.memory_space<smem>>, %arg5: memref<2x8x200xbf16, #tpu.memory_space<vmem>>, %arg6: memref<2x8x8xf32, #tpu.memory_space<vmem>>, %arg7: memref<2x8x8xf32, #tpu.memory_space<vmem>>, %arg8: memref<2x8x1xf32, #tpu.memory_space<vmem>>, %arg9: memref<2x8x8xf32, #tpu.memory_space<vmem>>, %arg10: memref<2x8x1xf32, #tpu.memory_space<vmem>>, %arg11: memref<2x8x2xf32, #tpu.memory_space<vmem>>, %arg12: memref<2x1x2xf32, #tpu.memory_space<vmem>>, %arg13: memref<2x1x2xf32, #tpu.memory_space<vmem>>, %arg14: memref<2x8x2xf32, #tpu.memory_space<vmem>>, %arg15: memref<2x8x1xf32, #tpu.memory_space<vmem>>, %arg16: memref<1x8x384xf32, #tpu.memory_space<vmem>>, %arg17: memref<8x640xf32, #tpu.memory_space<vmem>>, %arg18: memref<200x384xbf16, #tpu.memory_space<vmem>>) attributes {dimension_semantics = [#tpu.dimension_semantics<parallel>], iteration_bounds = array<i64: 2>, scalar_prefetch = 0 : i64, scratch_operands = 2 : i64, tpu.core_type = #tpu.core_type<tc>, window_params = [{transform_indices = @transform_0, window_bounds = array<i64: 1, 8, 384>}, {pipeline_mode = #tpu.pipeline_mode<synchronous>, transform_indices = @transform_1, window_bounds = array<i64: 1, 384>}, {transform_indices = @transform_2, window_bounds = array<i64: 2>}, {transform_indices = @transform_3, window_bounds = array<i64: 2>}, {pipeline_mode = #tpu.pipeline_mode<synchronous>, transform_indices = @transform_4, window_bounds = array<i64: 2, 8, 200>}, {pipeline_mode = #tpu.pipeline_mode<synchronous>, transform_indices = @transform_5, window_bounds = array<i64: 2, 8, 8>}, {pipeline_mode = #tpu.pipeline_mode<synchronous>, transform_indices = @transform_6, window_bounds = array<i64: 2, 8, 8>}, {pipeline_mode = #tpu.pipeline_mode<synchronous>, transform_indices = @transform_7, window_bounds = array<i64: 2, 8, 1>}, {pipeline_mode = #tpu.pipeline_mode<synchronous>, transform_indices = @transform_8, window_bounds = array<i64: 2, 8, 8>}, {pipeline_mode = #tpu.pipeline_mode<synchronous>, transform_indices = @transform_9, window_bounds = array<i64: 2, 8, 1>}, {pipeline_mode = #tpu.pipeline_mode<synchronous>, transform_indices = @transform_10, window_bounds = array<i64: 2, 8, 2>}, {pipeline_mode = #tpu.pipeline_mode<synchronous>, transform_indices = @transform_11, window_bounds = array<i64: 2, 1, 2>}, {pipeline_mode = #tpu.pipeline_mode<synchronous>, transform_indices = @transform_12, window_bounds = array<i64: 2, 1, 2>}, {pipeline_mode = #tpu.pipeline_mode<synchronous>, transform_indices = @transform_13, window_bounds = array<i64: 2, 8, 2>}, {pipeline_mode = #tpu.pipeline_mode<synchronous>, transform_indices = @transform_14, window_bounds = array<i64: 2, 8, 1>}, {transform_indices = @transform_15, window_bounds = array<i64: 1, 8, 384>}]} {
    %cst = arith.constant 0.000000e+00 : f32
    %0 = vector.broadcast %cst : f32 to vector<8x640xf32>
    %c0 = arith.constant 0 : index
    %c0_0 = arith.constant 0 : index
    %1 = vector.load %arg17[%c0, %c0_0] : memref<8x640xf32, #tpu.memory_space<vmem>>, vector<8x640xf32>
    tpu.vector_store %arg17[%c0, %c0_0], %0 {strides = array<i32>} : memref<8x640xf32, #tpu.memory_space<vmem>>, vector<8x640xf32>,
    %c0_1 = arith.constant 0 : index
    %c0_2 = arith.constant 0 : index
    %c0_3 = arith.constant 0 : index
    %2 = vector.load %arg1[%c0_1, %c0_2, %c0_3] : memref<1x8x384xf32, #tpu.memory_space<vmem>>, vector<1x8x384xf32>
    %3 = vector.shape_cast %2 : vector<1x8x384xf32> to vector<8x384xf32>
    %c0_4 = arith.constant 0 : index
    %c128 = arith.constant 128 : index
    %4 = vector.load %arg17[%c0_4, %c128] : memref<8x640xf32, #tpu.memory_space<vmem>>, vector<8x384xf32>
    tpu.vector_store %arg17[%c0_4, %c128], %3 {strides = array<i32>} : memref<8x640xf32, #tpu.memory_space<vmem>>, vector<8x384xf32>,
    %c0_5 = arith.constant 0 : index
    %c0_6 = arith.constant 0 : index
    %5 = vector.load %arg2[%c0_5, %c0_6] : memref<1x384xf32, #tpu.memory_space<vmem>>, vector<1x384xf32>
    %6 = arith.index_cast %arg0 : i32 to index
    %7 = memref.load %arg3[%6] : memref<2xf32, #tpu.memory_space<smem>>
    %c0_i32 = arith.constant 0 : i32
    %c0_7 = arith.constant 0 : index
    %c128_8 = arith.constant 128 : index
    %8 = vector.load %arg17[%c0_7, %c128_8] : memref<8x640xf32, #tpu.memory_space<vmem>>, vector<8x384xf32>
    %c0_9 = arith.constant 0 : index
    %c86 = arith.constant 86 : index
    %9 = vector.load %arg17[%c0_9, %c86] : memref<8x640xf32, #tpu.memory_space<vmem>>, vector<8x384xf32>
    %10 = arith.truncf %9 : vector<8x384xf32> to vector<8x384xbf16>
    %c0_10 = arith.constant 0 : index
    %c0_11 = arith.constant 0 : index
    %11 = vector.load %arg18[%c0_10, %c0_11] : memref<200x384xbf16, #tpu.memory_space<vmem>>, vector<8x384xbf16>
    tpu.vector_store %arg18[%c0_10, %c0_11], %10 {strides = array<i32>} : memref<200x384xbf16, #tpu.memory_space<vmem>>, vector<8x384xbf16>,
    %c0_12 = arith.constant 0 : index
    %c87 = arith.constant 87 : index
    %12 = vector.load %arg17[%c0_12, %c87] : memref<8x640xf32, #tpu.memory_space<vmem>>, vector<8x384xf32>
    %13 = arith.truncf %12 : vector<8x384xf32> to vector<8x384xbf16>
    %c8 = arith.constant 8 : index
    %c0_13 = arith.constant 0 : index
    %14 = vector.load %arg18[%c8, %c0_13] : memref<200x384xbf16, #tpu.memory_space<vmem>>, vector<8x384xbf16>
    tpu.vector_store %arg18[%c8, %c0_13], %13 {strides = array<i32>} : memref<200x384xbf16, #tpu.memory_space<vmem>>, vector<8x384xbf16>,
    %c0_14 = arith.constant 0 : index
    %c88 = arith.constant 88 : index
    %15 = vector.load %arg17[%c0_14, %c88] : memref<8x640xf32, #tpu.memory_space<vmem>>, vector<8x384xf32>
    %16 = arith.truncf %15 : vector<8x384xf32> to vector<8x384xbf16>
    %c16 = arith.constant 16 : index
    %c0_15 = arith.constant 0 : index
    %17 = vector.load %arg18[%c16, %c0_15] : memref<200x384xbf16, #tpu.memory_space<vmem>>, vector<8x384xbf16>
    tpu.vector_store %arg18[%c16, %c0_15], %16 {strides = array<i32>} : memref<200x384xbf16, #tpu.memory_space<vmem>>, vector<8x384xbf16>,
    %c0_16 = arith.constant 0 : index
    %c89 = arith.constant 89 : index
    %18 = vector.load %arg17[%c0_16, %c89] : memref<8x640xf32, #tpu.memory_space<vmem>>, vector<8x384xf32>
    %19 = arith.truncf %18 : vector<8x384xf32> to vector<8x384xbf16>
    %c24 = arith.constant 24 : index
    %c0_17 = arith.constant 0 : index
    %20 = vector.load %arg18[%c24, %c0_17] : memref<200x384xbf16, #tpu.memory_space<vmem>>, vector<8x384xbf16>
    tpu.vector_store %arg18[%c24, %c0_17], %19 {strides = array<i32>} : memref<200x384xbf16, #tpu.memory_space<vmem>>, vector<8x384xbf16>,
    %c0_18 = arith.constant 0 : index
    %c90 = arith.constant 90 : index
    %21 = vector.load %arg17[%c0_18, %c90] : memref<8x640xf32, #tpu.memory_space<vmem>>, vector<8x384xf32>
    %22 = arith.truncf %21 : vector<8x384xf32> to vector<8x384xbf16>
    %c32 = arith.constant 32 : index
    %c0_19 = arith.constant 0 : index
    %23 = vector.load %arg18[%c32, %c0_19] : memref<200x384xbf16, #tpu.memory_space<vmem>>, vector<8x384xbf16>
    tpu.vector_store %arg18[%c32, %c0_19], %22 {strides = array<i32>} : memref<200x384xbf16, #tpu.memory_space<vmem>>, vector<8x384xbf16>,
    %c0_20 = arith.constant 0 : index
    %c106 = arith.constant 106 : index
    %24 = vector.load %arg17[%c0_20, %c106] : memref<8x640xf32, #tpu.memory_space<vmem>>, vector<8x384xf32>
    %25 = arith.truncf %24 : vector<8x384xf32> to vector<8x384xbf16>
    %c40 = arith.constant 40 : index
    %c0_21 = arith.constant 0 : index
    %26 = vector.load %arg18[%c40, %c0_21] : memref<200x384xbf16, #tpu.memory_space<vmem>>, vector<8x384xbf16>
    tpu.vector_store %arg18[%c40, %c0_21], %25 {strides = array<i32>} : memref<200x384xbf16, #tpu.memory_space<vmem>>, vector<8x384xbf16>,
    %c0_22 = arith.constant 0 : index
    %c107 = arith.constant 107 : index
    %27 = vector.load %arg17[%c0_22, %c107] : memref<8x640xf32, #tpu.memory_space<vmem>>, vector<8x384xf32>
    %28 = arith.truncf %27 : vector<8x384xf32> to vector<8x384xbf16>
    %c48 = arith.constant 48 : index
    %c0_23 = arith.constant 0 : index
    %29 = vector.load %arg18[%c48, %c0_23] : memref<200x384xbf16, #tpu.memory_space<vmem>>, vector<8x384xbf16>
    tpu.vector_store %arg18[%c48, %c0_23], %28 {strides = array<i32>} : memref<200x384xbf16, #tpu.memory_space<vmem>>, vector<8x384xbf16>,
    %c0_24 = arith.constant 0 : index
    %c108 = arith.constant 108 : index
    %30 = vector.load %arg17[%c0_24, %c108] : memref<8x640xf32, #tpu.memory_space<vmem>>, vector<8x384xf32>
    %31 = arith.truncf %30 : vector<8x384xf32> to vector<8x384xbf16>
    %c56 = arith.constant 56 : index
    %c0_25 = arith.constant 0 : index
    %32 = vector.load %arg18[%c56, %c0_25] : memref<200x384xbf16, #tpu.memory_space<vmem>>, vector<8x384xbf16>
    tpu.vector_store %arg18[%c56, %c0_25], %31 {strides = array<i32>} : memref<200x384xbf16, #tpu.memory_space<vmem>>, vector<8x384xbf16>,
    %c0_26 = arith.constant 0 : index
    %c109 = arith.constant 109 : index
    %33 = vector.load %arg17[%c0_26, %c109] : memref<8x640xf32, #tpu.memory_space<vmem>>, vector<8x384xf32>
    %34 = arith.truncf %33 : vector<8x384xf32> to vector<8x384xbf16>
    %c64 = arith.constant 64 : index
    %c0_27 = arith.constant 0 : index
    %35 = vector.load %arg18[%c64, %c0_27] : memref<200x384xbf16, #tpu.memory_space<vmem>>, vector<8x384xbf16>
    tpu.vector_store %arg18[%c64, %c0_27], %34 {strides = array<i32>} : memref<200x384xbf16, #tpu.memory_space<vmem>>, vector<8x384xbf16>,
    %c0_28 = arith.constant 0 : index
    %c110 = arith.constant 110 : index
    %36 = vector.load %arg17[%c0_28, %c110] : memref<8x640xf32, #tpu.memory_space<vmem>>, vector<8x384xf32>
    %37 = arith.truncf %36 : vector<8x384xf32> to vector<8x384xbf16>
    %c72 = arith.constant 72 : index
    %c0_29 = arith.constant 0 : index
    %38 = vector.load %arg18[%c72, %c0_29] : memref<200x384xbf16, #tpu.memory_space<vmem>>, vector<8x384xbf16>
    tpu.vector_store %arg18[%c72, %c0_29], %37 {strides = array<i32>} : memref<200x384xbf16, #tpu.memory_space<vmem>>, vector<8x384xbf16>,
    %c0_30 = arith.constant 0 : index
    %c126 = arith.constant 126 : index
    %39 = vector.load %arg17[%c0_30, %c126] : memref<8x640xf32, #tpu.memory_space<vmem>>, vector<8x384xf32>
    %40 = arith.truncf %39 : vector<8x384xf32> to vector<8x384xbf16>
    %c80 = arith.constant 80 : index
    %c0_31 = arith.constant 0 : index
    %41 = vector.load %arg18[%c80, %c0_31] : memref<200x384xbf16, #tpu.memory_space<vmem>>, vector<8x384xbf16>
    tpu.vector_store %arg18[%c80, %c0_31], %40 {strides = array<i32>} : memref<200x384xbf16, #tpu.memory_space<vmem>>, vector<8x384xbf16>,
    %c0_32 = arith.constant 0 : index
    %c127 = arith.constant 127 : index
    %42 = vector.load %arg17[%c0_32, %c127] : memref<8x640xf32, #tpu.memory_space<vmem>>, vector<8x384xf32>
    %43 = arith.truncf %42 : vector<8x384xf32> to vector<8x384xbf16>
    %c88_33 = arith.constant 88 : index
    %c0_34 = arith.constant 0 : index
    %44 = vector.load %arg18[%c88_33, %c0_34] : memref<200x384xbf16, #tpu.memory_space<vmem>>, vector<8x384xbf16>
    tpu.vector_store %arg18[%c88_33, %c0_34], %43 {strides = array<i32>} : memref<200x384xbf16, #tpu.memory_space<vmem>>, vector<8x384xbf16>,
    %c0_35 = arith.constant 0 : index
    %c128_36 = arith.constant 128 : index
    %45 = vector.load %arg17[%c0_35, %c128_36] : memref<8x640xf32, #tpu.memory_space<vmem>>, vector<8x384xf32>
    %46 = arith.truncf %45 : vector<8x384xf32> to vector<8x384xbf16>
    %c96 = arith.constant 96 : index
    %c0_37 = arith.constant 0 : index
    %47 = vector.load %arg18[%c96, %c0_37] : memref<200x384xbf16, #tpu.memory_space<vmem>>, vector<8x384xbf16>
    tpu.vector_store %arg18[%c96, %c0_37], %46 {strides = array<i32>} : memref<200x384xbf16, #tpu.memory_space<vmem>>, vector<8x384xbf16>,
    %c0_38 = arith.constant 0 : index
    %c129 = arith.constant 129 : index
    %48 = vector.load %arg17[%c0_38, %c129] : memref<8x640xf32, #tpu.memory_space<vmem>>, vector<8x384xf32>
    %49 = arith.truncf %48 : vector<8x384xf32> to vector<8x384xbf16>
    %c104 = arith.constant 104 : index
    %c0_39 = arith.constant 0 : index
    %50 = vector.load %arg18[%c104, %c0_39] : memref<200x384xbf16, #tpu.memory_space<vmem>>, vector<8x384xbf16>
    tpu.vector_store %arg18[%c104, %c0_39], %49 {strides = array<i32>} : memref<200x384xbf16, #tpu.memory_space<vmem>>, vector<8x384xbf16>,
    %c0_40 = arith.constant 0 : index
    %c130 = arith.constant 130 : index
    %51 = vector.load %arg17[%c0_40, %c130] : memref<8x640xf32, #tpu.memory_space<vmem>>, vector<8x384xf32>
    %52 = arith.truncf %51 : vector<8x384xf32> to vector<8x384xbf16>
    %c112 = arith.constant 112 : index
    %c0_41 = arith.constant 0 : index
    %53 = vector.load %arg18[%c112, %c0_41] : memref<200x384xbf16, #tpu.memory_space<vmem>>, vector<8x384xbf16>
    tpu.vector_store %arg18[%c112, %c0_41], %52 {strides = array<i32>} : memref<200x384xbf16, #tpu.memory_space<vmem>>, vector<8x384xbf16>,
    %c0_42 = arith.constant 0 : index
    %c146 = arith.constant 146 : index
    %54 = vector.load %arg17[%c0_42, %c146] : memref<8x640xf32, #tpu.memory_space<vmem>>, vector<8x384xf32>
    %55 = arith.truncf %54 : vector<8x384xf32> to vector<8x384xbf16>
    %c120 = arith.constant 120 : index
    %c0_43 = arith.constant 0 : index
    %56 = vector.load %arg18[%c120, %c0_43] : memref<200x384xbf16, #tpu.memory_space<vmem>>, vector<8x384xbf16>
    tpu.vector_store %arg18[%c120, %c0_43], %55 {strides = array<i32>} : memref<200x384xbf16, #tpu.memory_space<vmem>>, vector<8x384xbf16>,
    %c0_44 = arith.constant 0 : index
    %c147 = arith.constant 147 : index
    %57 = vector.load %arg17[%c0_44, %c147] : memref<8x640xf32, #tpu.memory_space<vmem>>, vector<8x384xf32>
    %58 = arith.truncf %57 : vector<8x384xf32> to vector<8x384xbf16>
    %c128_45 = arith.constant 128 : index
    %c0_46 = arith.constant 0 : index
    %59 = vector.load %arg18[%c128_45, %c0_46] : memref<200x384xbf16, #tpu.memory_space<vmem>>, vector<8x384xbf16>
    tpu.vector_store %arg18[%c128_45, %c0_46], %58 {strides = array<i32>} : memref<200x384xbf16, #tpu.memory_space<vmem>>, vector<8x384xbf16>,
    %c0_47 = arith.constant 0 : index
    %c148 = arith.constant 148 : index
    %60 = vector.load %arg17[%c0_47, %c148] : memref<8x640xf32, #tpu.memory_space<vmem>>, vector<8x384xf32>
    %61 = arith.truncf %60 : vector<8x384xf32> to vector<8x384xbf16>
    %c136 = arith.constant 136 : index
    %c0_48 = arith.constant 0 : index
    %62 = vector.load %arg18[%c136, %c0_48] : memref<200x384xbf16, #tpu.memory_space<vmem>>, vector<8x384xbf16>
    tpu.vector_store %arg18[%c136, %c0_48], %61 {strides = array<i32>} : memref<200x384xbf16, #tpu.memory_space<vmem>>, vector<8x384xbf16>,
    %c0_49 = arith.constant 0 : index
    %c149 = arith.constant 149 : index
    %63 = vector.load %arg17[%c0_49, %c149] : memref<8x640xf32, #tpu.memory_space<vmem>>, vector<8x384xf32>
    %64 = arith.truncf %63 : vector<8x384xf32> to vector<8x384xbf16>
    %c144 = arith.constant 144 : index
    %c0_50 = arith.constant 0 : index
    %65 = vector.load %arg18[%c144, %c0_50] : memref<200x384xbf16, #tpu.memory_space<vmem>>, vector<8x384xbf16>
    tpu.vector_store %arg18[%c144, %c0_50], %64 {strides = array<i32>} : memref<200x384xbf16, #tpu.memory_space<vmem>>, vector<8x384xbf16>,
    %c0_51 = arith.constant 0 : index
    %c150 = arith.constant 150 : index
    %66 = vector.load %arg17[%c0_51, %c150] : memref<8x640xf32, #tpu.memory_space<vmem>>, vector<8x384xf32>
    %67 = arith.truncf %66 : vector<8x384xf32> to vector<8x384xbf16>
    %c152 = arith.constant 152 : index
    %c0_52 = arith.constant 0 : index
    %68 = vector.load %arg18[%c152, %c0_52] : memref<200x384xbf16, #tpu.memory_space<vmem>>, vector<8x384xbf16>
    tpu.vector_store %arg18[%c152, %c0_52], %67 {strides = array<i32>} : memref<200x384xbf16, #tpu.memory_space<vmem>>, vector<8x384xbf16>,
    %c0_53 = arith.constant 0 : index
    %c166 = arith.constant 166 : index
    %69 = vector.load %arg17[%c0_53, %c166] : memref<8x640xf32, #tpu.memory_space<vmem>>, vector<8x384xf32>
    %70 = arith.truncf %69 : vector<8x384xf32> to vector<8x384xbf16>
    %c160 = arith.constant 160 : index
    %c0_54 = arith.constant 0 : index
    %71 = vector.load %arg18[%c160, %c0_54] : memref<200x384xbf16, #tpu.memory_space<vmem>>, vector<8x384xbf16>
    tpu.vector_store %arg18[%c160, %c0_54], %70 {strides = array<i32>} : memref<200x384xbf16, #tpu.memory_space<vmem>>, vector<8x384xbf16>,
    %c0_55 = arith.constant 0 : index
    %c167 = arith.constant 167 : index
    %72 = vector.load %arg17[%c0_55, %c167] : memref<8x640xf32, #tpu.memory_space<vmem>>, vector<8x384xf32>
    %73 = arith.truncf %72 : vector<8x384xf32> to vector<8x384xbf16>
    %c168 = arith.constant 168 : index
    %c0_56 = arith.constant 0 : index
    %74 = vector.load %arg18[%c168, %c0_56] : memref<200x384xbf16, #tpu.memory_space<vmem>>, vector<8x384xbf16>
    tpu.vector_store %arg18[%c168, %c0_56], %73 {strides = array<i32>} : memref<200x384xbf16, #tpu.memory_space<vmem>>, vector<8x384xbf16>,
    %c0_57 = arith.constant 0 : index
    %c168_58 = arith.constant 168 : index
    %75 = vector.load %arg17[%c0_57, %c168_58] : memref<8x640xf32, #tpu.memory_space<vmem>>, vector<8x384xf32>
    %76 = arith.truncf %75 : vector<8x384xf32> to vector<8x384xbf16>
    %c176 = arith.constant 176 : index
    %c0_59 = arith.constant 0 : index
    %77 = vector.load %arg18[%c176, %c0_59] : memref<200x384xbf16, #tpu.memory_space<vmem>>, vector<8x384xbf16>
    tpu.vector_store %arg18[%c176, %c0_59], %76 {strides = array<i32>} : memref<200x384xbf16, #tpu.memory_space<vmem>>, vector<8x384xbf16>,
    %c0_60 = arith.constant 0 : index
    %c169 = arith.constant 169 : index
    %78 = vector.load %arg17[%c0_60, %c169] : memref<8x640xf32, #tpu.memory_space<vmem>>, vector<8x384xf32>
    %79 = arith.truncf %78 : vector<8x384xf32> to vector<8x384xbf16>
    %c184 = arith.constant 184 : index
    %c0_61 = arith.constant 0 : index
    %80 = vector.load %arg18[%c184, %c0_61] : memref<200x384xbf16, #tpu.memory_space<vmem>>, vector<8x384xbf16>
    tpu.vector_store %arg18[%c184, %c0_61], %79 {strides = array<i32>} : memref<200x384xbf16, #tpu.memory_space<vmem>>, vector<8x384xbf16>,
    %c0_62 = arith.constant 0 : index
    %c170 = arith.constant 170 : index
    %81 = vector.load %arg17[%c0_62, %c170] : memref<8x640xf32, #tpu.memory_space<vmem>>, vector<8x384xf32>
    %82 = arith.truncf %81 : vector<8x384xf32> to vector<8x384xbf16>
    %c192 = arith.constant 192 : index
    %c0_63 = arith.constant 0 : index
    %83 = vector.load %arg18[%c192, %c0_63] : memref<200x384xbf16, #tpu.memory_space<vmem>>, vector<8x384xbf16>
    tpu.vector_store %arg18[%c192, %c0_63], %82 {strides = array<i32>} : memref<200x384xbf16, #tpu.memory_space<vmem>>, vector<8x384xbf16>,
    %84 = arith.index_cast %c0_i32 : i32 to index
    %c0_64 = arith.constant 0 : index
    %c0_65 = arith.constant 0 : index
    %85 = vector.load %arg5[%84, %c0_64, %c0_65] : memref<2x8x200xbf16, #tpu.memory_space<vmem>>, vector<1x8x200xbf16>
    %86 = vector.shape_cast %85 : vector<1x8x200xbf16> to vector<8x200xbf16>
    %c0_66 = arith.constant 0 : index
    %c0_67 = arith.constant 0 : index
    %87 = vector.load %arg18[%c0_66, %c0_67] : memref<200x384xbf16, #tpu.memory_space<vmem>>, vector<200x384xbf16>
    %cst_68 = arith.constant dense<0.000000e+00> : vector<8x384xf32>
    %88 = tpu.matmul %86, %87, %cst_68 {dimension_numbers = #tpu.dot_dimension_numbers<[1], [0], [0], [1], [0, 0, 1, 1], [], []>} : vector<8x200xbf16>, vector<200x384xbf16>, vector<8x384xf32> -> vector<8x384xf32>
    %89 = arith.index_cast %c0_i32 : i32 to index
    %90 = memref.load %arg4[%89] : memref<2xf32, #tpu.memory_space<smem>>
    %91 = arith.index_cast %c0_i32 : i32 to index
    %c0_69 = arith.constant 0 : index
    %c0_70 = arith.constant 0 : index
    %92 = vector.load %arg7[%91, %c0_69, %c0_70] : memref<2x8x8xf32, #tpu.memory_space<vmem>>, vector<1x8x8xf32>
    %93 = vector.shape_cast %92 : vector<1x8x8xf32> to vector<8x8xf32>
    %94 = arith.mulf %88, %88 : vector<8x384xf32>
    %95 = vector.extract_strided_slice %93 {offsets = [0, 0], sizes = [8, 1], strides = [1, 1]} : vector<8x8xf32> to vector<8x1xf32>
    %96 = vector.extract_strided_slice %94 {offsets = [0, 0], sizes = [1, 384], strides = [1, 1]} : vector<8x384xf32> to vector<1x384xf32>
    %97 = vector.broadcast %95 : vector<8x1xf32> to vector<8x384xf32>
    %98 = vector.broadcast %96 : vector<1x384xf32> to vector<8x384xf32>
    %99 = arith.mulf %97, %98 : vector<8x384xf32>
    %100 = vector.extract_strided_slice %93 {offsets = [0, 1], sizes = [8, 1], strides = [1, 1]} : vector<8x8xf32> to vector<8x1xf32>
    %101 = vector.extract_strided_slice %94 {offsets = [1, 0], sizes = [1, 384], strides = [1, 1]} : vector<8x384xf32> to vector<1x384xf32>
    %102 = vector.broadcast %100 : vector<8x1xf32> to vector<8x384xf32>
    %103 = vector.broadcast %101 : vector<1x384xf32> to vector<8x384xf32>
    %104 = arith.mulf %102, %103 : vector<8x384xf32>
    %105 = arith.addf %99, %104 : vector<8x384xf32>
    %106 = vector.extract_strided_slice %93 {offsets = [0, 2], sizes = [8, 1], strides = [1, 1]} : vector<8x8xf32> to vector<8x1xf32>
    %107 = vector.extract_strided_slice %94 {offsets = [2, 0], sizes = [1, 384], strides = [1, 1]} : vector<8x384xf32> to vector<1x384xf32>
    %108 = vector.broadcast %106 : vector<8x1xf32> to vector<8x384xf32>
    %109 = vector.broadcast %107 : vector<1x384xf32> to vector<8x384xf32>
    %110 = arith.mulf %108, %109 : vector<8x384xf32>
    %111 = arith.addf %105, %110 : vector<8x384xf32>
    %112 = vector.extract_strided_slice %93 {offsets = [0, 3], sizes = [8, 1], strides = [1, 1]} : vector<8x8xf32> to vector<8x1xf32>
    %113 = vector.extract_strided_slice %94 {offsets = [3, 0], sizes = [1, 384], strides = [1, 1]} : vector<8x384xf32> to vector<1x384xf32>
    %114 = vector.broadcast %112 : vector<8x1xf32> to vector<8x384xf32>
    %115 = vector.broadcast %113 : vector<1x384xf32> to vector<8x384xf32>
    %116 = arith.mulf %114, %115 : vector<8x384xf32>
    %117 = arith.addf %111, %116 : vector<8x384xf32>
    %118 = arith.index_cast %c0_i32 : i32 to index
    %c0_71 = arith.constant 0 : index
    %c0_72 = arith.constant 0 : index
    %119 = vector.load %arg8[%118, %c0_71, %c0_72] : memref<2x8x1xf32, #tpu.memory_space<vmem>>, vector<1x8x1xf32>
    %120 = vector.shape_cast %119 : vector<1x8x1xf32> to vector<8x1xf32>
    %121 = vector.broadcast %120 : vector<8x1xf32> to vector<8x384xf32>
    %122 = arith.addf %117, %121 : vector<8x384xf32>
    %123 = math.rsqrt %122 : vector<8x384xf32>
    %124 = arith.mulf %88, %123 : vector<8x384xf32>
    %cst_73 = arith.constant 0.000000e+00 : f32
    %125 = vector.broadcast %cst_73 : f32 to vector<8x384xf32>
    %126 = arith.cmpf oge, %124, %125 : vector<8x384xf32>
    %127 = vector.broadcast %90 : f32 to vector<8x384xf32>
    %128 = arith.mulf %127, %124 : vector<8x384xf32>
    %129 = arith.select %126, %124, %128 : vector<8x384xi1>, vector<8x384xf32>
    %130 = arith.index_cast %c0_i32 : i32 to index
    %c0_74 = arith.constant 0 : index
    %c0_75 = arith.constant 0 : index
    %131 = vector.load %arg6[%130, %c0_74, %c0_75] : memref<2x8x8xf32, #tpu.memory_space<vmem>>, vector<1x8x8xf32>
    %132 = vector.shape_cast %131 : vector<1x8x8xf32> to vector<8x8xf32>
    %133 = vector.extract_strided_slice %132 {offsets = [0, 0], sizes = [8, 1], strides = [1, 1]} : vector<8x8xf32> to vector<8x1xf32>
    %134 = vector.extract_strided_slice %129 {offsets = [0, 0], sizes = [1, 384], strides = [1, 1]} : vector<8x384xf32> to vector<1x384xf32>
    %135 = vector.broadcast %133 : vector<8x1xf32> to vector<8x384xf32>
    %136 = vector.broadcast %134 : vector<1x384xf32> to vector<8x384xf32>
    %137 = arith.mulf %135, %136 : vector<8x384xf32>
    %138 = vector.extract_strided_slice %132 {offsets = [0, 1], sizes = [8, 1], strides = [1, 1]} : vector<8x8xf32> to vector<8x1xf32>
    %139 = vector.extract_strided_slice %129 {offsets = [1, 0], sizes = [1, 384], strides = [1, 1]} : vector<8x384xf32> to vector<1x384xf32>
    %140 = vector.broadcast %138 : vector<8x1xf32> to vector<8x384xf32>
    %141 = vector.broadcast %139 : vector<1x384xf32> to vector<8x384xf32>
    %142 = arith.mulf %140, %141 : vector<8x384xf32>
    %143 = arith.addf %137, %142 : vector<8x384xf32>
    %144 = vector.extract_strided_slice %132 {offsets = [0, 2], sizes = [8, 1], strides = [1, 1]} : vector<8x8xf32> to vector<8x1xf32>
    %145 = vector.extract_strided_slice %129 {offsets = [2, 0], sizes = [1, 384], strides = [1, 1]} : vector<8x384xf32> to vector<1x384xf32>
    %146 = vector.broadcast %144 : vector<8x1xf32> to vector<8x384xf32>
    %147 = vector.broadcast %145 : vector<1x384xf32> to vector<8x384xf32>
    %148 = arith.mulf %146, %147 : vector<8x384xf32>
    %149 = arith.addf %143, %148 : vector<8x384xf32>
    %150 = vector.extract_strided_slice %132 {offsets = [0, 3], sizes = [8, 1], strides = [1, 1]} : vector<8x8xf32> to vector<8x1xf32>
    %151 = vector.extract_strided_slice %129 {offsets = [3, 0], sizes = [1, 384], strides = [1, 1]} : vector<8x384xf32> to vector<1x384xf32>
    %152 = vector.broadcast %150 : vector<8x1xf32> to vector<8x384xf32>
    %153 = vector.broadcast %151 : vector<1x384xf32> to vector<8x384xf32>
    %154 = arith.mulf %152, %153 : vector<8x384xf32>
    %155 = arith.addf %149, %154 : vector<8x384xf32>
    %156 = arith.index_cast %c0_i32 : i32 to index
    %c0_76 = arith.constant 0 : index
    %c0_77 = arith.constant 0 : index
    %157 = vector.load %arg9[%156, %c0_76, %c0_77] : memref<2x8x8xf32, #tpu.memory_space<vmem>>, vector<1x8x8xf32>
    %158 = vector.shape_cast %157 : vector<1x8x8xf32> to vector<8x8xf32>
    %159 = arith.mulf %155, %155 : vector<8x384xf32>
    %160 = vector.extract_strided_slice %158 {offsets = [0, 0], sizes = [8, 1], strides = [1, 1]} : vector<8x8xf32> to vector<8x1xf32>
    %161 = vector.extract_strided_slice %159 {offsets = [0, 0], sizes = [1, 384], strides = [1, 1]} : vector<8x384xf32> to vector<1x384xf32>
    %162 = vector.broadcast %160 : vector<8x1xf32> to vector<8x384xf32>
    %163 = vector.broadcast %161 : vector<1x384xf32> to vector<8x384xf32>
    %164 = arith.mulf %162, %163 : vector<8x384xf32>
    %165 = vector.extract_strided_slice %158 {offsets = [0, 1], sizes = [8, 1], strides = [1, 1]} : vector<8x8xf32> to vector<8x1xf32>
    %166 = vector.extract_strided_slice %159 {offsets = [1, 0], sizes = [1, 384], strides = [1, 1]} : vector<8x384xf32> to vector<1x384xf32>
    %167 = vector.broadcast %165 : vector<8x1xf32> to vector<8x384xf32>
    %168 = vector.broadcast %166 : vector<1x384xf32> to vector<8x384xf32>
    %169 = arith.mulf %167, %168 : vector<8x384xf32>
    %170 = arith.addf %164, %169 : vector<8x384xf32>
    %171 = vector.extract_strided_slice %158 {offsets = [0, 2], sizes = [8, 1], strides = [1, 1]} : vector<8x8xf32> to vector<8x1xf32>
    %172 = vector.extract_strided_slice %159 {offsets = [2, 0], sizes = [1, 384], strides = [1, 1]} : vector<8x384xf32> to vector<1x384xf32>
    %173 = vector.broadcast %171 : vector<8x1xf32> to vector<8x384xf32>
    %174 = vector.broadcast %172 : vector<1x384xf32> to vector<8x384xf32>
    %175 = arith.mulf %173, %174 : vector<8x384xf32>
    %176 = arith.addf %170, %175 : vector<8x384xf32>
    %177 = vector.extract_strided_slice %158 {offsets = [0, 3], sizes = [8, 1], strides = [1, 1]} : vector<8x8xf32> to vector<8x1xf32>
    %178 = vector.extract_strided_slice %159 {offsets = [3, 0], sizes = [1, 384], strides = [1, 1]} : vector<8x384xf32> to vector<1x384xf32>
    %179 = vector.broadcast %177 : vector<8x1xf32> to vector<8x384xf32>
    %180 = vector.broadcast %178 : vector<1x384xf32> to vector<8x384xf32>
    %181 = arith.mulf %179, %180 : vector<8x384xf32>
    %182 = arith.addf %176, %181 : vector<8x384xf32>
    %183 = arith.index_cast %c0_i32 : i32 to index
    %c0_78 = arith.constant 0 : index
    %c0_79 = arith.constant 0 : index
    %184 = vector.load %arg10[%183, %c0_78, %c0_79] : memref<2x8x1xf32, #tpu.memory_space<vmem>>, vector<1x8x1xf32>
    %185 = vector.shape_cast %184 : vector<1x8x1xf32> to vector<8x1xf32>
    %186 = vector.broadcast %185 : vector<8x1xf32> to vector<8x384xf32>
    %187 = arith.addf %182, %186 : vector<8x384xf32>
    %188 = math.rsqrt %187 : vector<8x384xf32>
    %189 = arith.mulf %155, %188 : vector<8x384xf32>
    %190 = arith.addf %189, %8 : vector<8x384xf32>
    %cst_80 = arith.constant 0.000000e+00 : f32
    %191 = vector.broadcast %cst_80 : f32 to vector<8x384xf32>
    %192 = arith.cmpf oge, %190, %191 : vector<8x384xf32>
    %193 = vector.broadcast %90 : f32 to vector<8x384xf32>
    %194 = arith.mulf %193, %190 : vector<8x384xf32>
    %195 = arith.select %192, %190, %194 : vector<8x384xi1>, vector<8x384xf32>
    %196 = vector.broadcast %5 : vector<1x384xf32> to vector<8x384xf32>
    %197 = arith.mulf %195, %196 : vector<8x384xf32>
    %cst_81 = arith.constant dense<0.000000e+00> : vector<8xf32>
    %198 = vector.multi_reduction <add>, %197, %cst_81 [1] : vector<8x384xf32> to vector<8xf32>
    %199 = vector.shape_cast %198 : vector<8xf32> to vector<8x1xf32>
    %cst_82 = arith.constant 3.906250e-03 : f32
    %200 = vector.broadcast %cst_82 : f32 to vector<8x1xf32>
    %201 = arith.mulf %199, %200 : vector<8x1xf32>
    %202 = arith.index_cast %c0_i32 : i32 to index
    %c0_83 = arith.constant 0 : index
    %c0_84 = arith.constant 0 : index
    %203 = vector.load %arg11[%202, %c0_83, %c0_84] : memref<2x8x2xf32, #tpu.memory_space<vmem>>, vector<1x8x2xf32>
    %204 = vector.shape_cast %203 : vector<1x8x2xf32> to vector<8x2xf32>
    %205 = vector.broadcast %201 : vector<8x1xf32> to vector<8x2xf32>
    %206 = arith.mulf %204, %205 : vector<8x2xf32>
    %cst_85 = arith.constant dense<0.000000e+00> : vector<2xf32>
    %207 = vector.multi_reduction <add>, %206, %cst_85 [0] : vector<8x2xf32> to vector<2xf32>
    %208 = vector.shape_cast %207 : vector<2xf32> to vector<1x2xf32>
    %209 = arith.index_cast %c0_i32 : i32 to index
    %c0_86 = arith.constant 0 : index
    %c0_87 = arith.constant 0 : index
    %210 = vector.load %arg12[%209, %c0_86, %c0_87] : memref<2x1x2xf32, #tpu.memory_space<vmem>>, vector<1x1x2xf32>
    %211 = vector.shape_cast %210 : vector<1x1x2xf32> to vector<1x2xf32>
    %212 = vector.broadcast %7 : f32 to vector<1x2xf32>
    %213 = arith.mulf %212, %211 : vector<1x2xf32>
    %214 = arith.addf %208, %213 : vector<1x2xf32>
    %215 = arith.index_cast %c0_i32 : i32 to index
    %c0_88 = arith.constant 0 : index
    %c0_89 = arith.constant 0 : index
    %216 = vector.load %arg13[%215, %c0_88, %c0_89] : memref<2x1x2xf32, #tpu.memory_space<vmem>>, vector<1x1x2xf32>
    %217 = vector.shape_cast %216 : vector<1x1x2xf32> to vector<1x2xf32>
    %218 = arith.addf %214, %217 : vector<1x2xf32>
    %cst_90 = arith.constant 0.000000e+00 : f32
    %219 = vector.broadcast %cst_90 : f32 to vector<1x2xf32>
    %220 = arith.maximumf %218, %219 : vector<1x2xf32>
    %221 = arith.index_cast %c0_i32 : i32 to index
    %c0_91 = arith.constant 0 : index
    %c0_92 = arith.constant 0 : index
    %222 = vector.load %arg14[%221, %c0_91, %c0_92] : memref<2x8x2xf32, #tpu.memory_space<vmem>>, vector<1x8x2xf32>
    %223 = vector.shape_cast %222 : vector<1x8x2xf32> to vector<8x2xf32>
    %224 = vector.broadcast %220 : vector<1x2xf32> to vector<8x2xf32>
    %225 = arith.mulf %223, %224 : vector<8x2xf32>
    %cst_93 = arith.constant dense<0.000000e+00> : vector<8xf32>
    %226 = vector.multi_reduction <add>, %225, %cst_93 [1] : vector<8x2xf32> to vector<8xf32>
    %227 = vector.shape_cast %226 : vector<8xf32> to vector<8x1xf32>
    %228 = arith.index_cast %c0_i32 : i32 to index
    %c0_94 = arith.constant 0 : index
    %c0_95 = arith.constant 0 : index
    %229 = vector.load %arg15[%228, %c0_94, %c0_95] : memref<2x8x1xf32, #tpu.memory_space<vmem>>, vector<1x8x1xf32>
    %230 = vector.shape_cast %229 : vector<1x8x1xf32> to vector<8x1xf32>
    %231 = arith.addf %227, %230 : vector<8x1xf32>
    %232 = arith.negf %231 : vector<8x1xf32>
    %233 = math.exp %232 : vector<8x1xf32>
    %cst_96 = arith.constant 1.000000e+00 : f32
    %234 = vector.broadcast %cst_96 : f32 to vector<8x1xf32>
    %235 = arith.addf %234, %233 : vector<8x1xf32>
    %236 = arith.divf %234, %235 : vector<8x1xf32>
    %237 = vector.broadcast %236 : vector<8x1xf32> to vector<8x384xf32>
    %238 = arith.mulf %195, %237 : vector<8x384xf32>
    %239 = vector.broadcast %5 : vector<1x384xf32> to vector<8x384xf32>
    %240 = arith.mulf %238, %239 : vector<8x384xf32>
    %c0_97 = arith.constant 0 : index
    %c128_98 = arith.constant 128 : index
    %241 = vector.load %arg17[%c0_97, %c128_98] : memref<8x640xf32, #tpu.memory_space<vmem>>, vector<8x384xf32>
    tpu.vector_store %arg17[%c0_97, %c128_98], %240 {strides = array<i32>} : memref<8x640xf32, #tpu.memory_space<vmem>>, vector<8x384xf32>,
    %c1_i32 = arith.constant 1 : i32
    %c0_99 = arith.constant 0 : index
    %c128_100 = arith.constant 128 : index
    %242 = vector.load %arg17[%c0_99, %c128_100] : memref<8x640xf32, #tpu.memory_space<vmem>>, vector<8x384xf32>
    %c0_101 = arith.constant 0 : index
    %c86_102 = arith.constant 86 : index
    %243 = vector.load %arg17[%c0_101, %c86_102] : memref<8x640xf32, #tpu.memory_space<vmem>>, vector<8x384xf32>
    %244 = arith.truncf %243 : vector<8x384xf32> to vector<8x384xbf16>
    %c0_103 = arith.constant 0 : index
    %c0_104 = arith.constant 0 : index
    %245 = vector.load %arg18[%c0_103, %c0_104] : memref<200x384xbf16, #tpu.memory_space<vmem>>, vector<8x384xbf16>
    tpu.vector_store %arg18[%c0_103, %c0_104], %244 {strides = array<i32>} : memref<200x384xbf16, #tpu.memory_space<vmem>>, vector<8x384xbf16>,
    %c0_105 = arith.constant 0 : index
    %c87_106 = arith.constant 87 : index
    %246 = vector.load %arg17[%c0_105, %c87_106] : memref<8x640xf32, #tpu.memory_space<vmem>>, vector<8x384xf32>
    %247 = arith.truncf %246 : vector<8x384xf32> to vector<8x384xbf16>
    %c8_107 = arith.constant 8 : index
    %c0_108 = arith.constant 0 : index
    %248 = vector.load %arg18[%c8_107, %c0_108] : memref<200x384xbf16, #tpu.memory_space<vmem>>, vector<8x384xbf16>
    tpu.vector_store %arg18[%c8_107, %c0_108], %247 {strides = array<i32>} : memref<200x384xbf16, #tpu.memory_space<vmem>>, vector<8x384xbf16>,
    %c0_109 = arith.constant 0 : index
    %c88_110 = arith.constant 88 : index
    %249 = vector.load %arg17[%c0_109, %c88_110] : memref<8x640xf32, #tpu.memory_space<vmem>>, vector<8x384xf32>
    %250 = arith.truncf %249 : vector<8x384xf32> to vector<8x384xbf16>
    %c16_111 = arith.constant 16 : index
    %c0_112 = arith.constant 0 : index
    %251 = vector.load %arg18[%c16_111, %c0_112] : memref<200x384xbf16, #tpu.memory_space<vmem>>, vector<8x384xbf16>
    tpu.vector_store %arg18[%c16_111, %c0_112], %250 {strides = array<i32>} : memref<200x384xbf16, #tpu.memory_space<vmem>>, vector<8x384xbf16>,
    %c0_113 = arith.constant 0 : index
    %c89_114 = arith.constant 89 : index
    %252 = vector.load %arg17[%c0_113, %c89_114] : memref<8x640xf32, #tpu.memory_space<vmem>>, vector<8x384xf32>
    %253 = arith.truncf %252 : vector<8x384xf32> to vector<8x384xbf16>
    %c24_115 = arith.constant 24 : index
    %c0_116 = arith.constant 0 : index
    %254 = vector.load %arg18[%c24_115, %c0_116] : memref<200x384xbf16, #tpu.memory_space<vmem>>, vector<8x384xbf16>
    tpu.vector_store %arg18[%c24_115, %c0_116], %253 {strides = array<i32>} : memref<200x384xbf16, #tpu.memory_space<vmem>>, vector<8x384xbf16>,
    %c0_117 = arith.constant 0 : index
    %c90_118 = arith.constant 90 : index
    %255 = vector.load %arg17[%c0_117, %c90_118] : memref<8x640xf32, #tpu.memory_space<vmem>>, vector<8x384xf32>
    %256 = arith.truncf %255 : vector<8x384xf32> to vector<8x384xbf16>
    %c32_119 = arith.constant 32 : index
    %c0_120 = arith.constant 0 : index
    %257 = vector.load %arg18[%c32_119, %c0_120] : memref<200x384xbf16, #tpu.memory_space<vmem>>, vector<8x384xbf16>
    tpu.vector_store %arg18[%c32_119, %c0_120], %256 {strides = array<i32>} : memref<200x384xbf16, #tpu.memory_space<vmem>>, vector<8x384xbf16>,
    %c0_121 = arith.constant 0 : index
    %c106_122 = arith.constant 106 : index
    %258 = vector.load %arg17[%c0_121, %c106_122] : memref<8x640xf32, #tpu.memory_space<vmem>>, vector<8x384xf32>
    %259 = arith.truncf %258 : vector<8x384xf32> to vector<8x384xbf16>
    %c40_123 = arith.constant 40 : index
    %c0_124 = arith.constant 0 : index
    %260 = vector.load %arg18[%c40_123, %c0_124] : memref<200x384xbf16, #tpu.memory_space<vmem>>, vector<8x384xbf16>
    tpu.vector_store %arg18[%c40_123, %c0_124], %259 {strides = array<i32>} : memref<200x384xbf16, #tpu.memory_space<vmem>>, vector<8x384xbf16>,
    %c0_125 = arith.constant 0 : index
    %c107_126 = arith.constant 107 : index
    %261 = vector.load %arg17[%c0_125, %c107_126] : memref<8x640xf32, #tpu.memory_space<vmem>>, vector<8x384xf32>
    %262 = arith.truncf %261 : vector<8x384xf32> to vector<8x384xbf16>
    %c48_127 = arith.constant 48 : index
    %c0_128 = arith.constant 0 : index
    %263 = vector.load %arg18[%c48_127, %c0_128] : memref<200x384xbf16, #tpu.memory_space<vmem>>, vector<8x384xbf16>
    tpu.vector_store %arg18[%c48_127, %c0_128], %262 {strides = array<i32>} : memref<200x384xbf16, #tpu.memory_space<vmem>>, vector<8x384xbf16>,
    %c0_129 = arith.constant 0 : index
    %c108_130 = arith.constant 108 : index
    %264 = vector.load %arg17[%c0_129, %c108_130] : memref<8x640xf32, #tpu.memory_space<vmem>>, vector<8x384xf32>
    %265 = arith.truncf %264 : vector<8x384xf32> to vector<8x384xbf16>
    %c56_131 = arith.constant 56 : index
    %c0_132 = arith.constant 0 : index
    %266 = vector.load %arg18[%c56_131, %c0_132] : memref<200x384xbf16, #tpu.memory_space<vmem>>, vector<8x384xbf16>
    tpu.vector_store %arg18[%c56_131, %c0_132], %265 {strides = array<i32>} : memref<200x384xbf16, #tpu.memory_space<vmem>>, vector<8x384xbf16>,
    %c0_133 = arith.constant 0 : index
    %c109_134 = arith.constant 109 : index
    %267 = vector.load %arg17[%c0_133, %c109_134] : memref<8x640xf32, #tpu.memory_space<vmem>>, vector<8x384xf32>
    %268 = arith.truncf %267 : vector<8x384xf32> to vector<8x384xbf16>
    %c64_135 = arith.constant 64 : index
    %c0_136 = arith.constant 0 : index
    %269 = vector.load %arg18[%c64_135, %c0_136] : memref<200x384xbf16, #tpu.memory_space<vmem>>, vector<8x384xbf16>
    tpu.vector_store %arg18[%c64_135, %c0_136], %268 {strides = array<i32>} : memref<200x384xbf16, #tpu.memory_space<vmem>>, vector<8x384xbf16>,
    %c0_137 = arith.constant 0 : index
    %c110_138 = arith.constant 110 : index
    %270 = vector.load %arg17[%c0_137, %c110_138] : memref<8x640xf32, #tpu.memory_space<vmem>>, vector<8x384xf32>
    %271 = arith.truncf %270 : vector<8x384xf32> to vector<8x384xbf16>
    %c72_139 = arith.constant 72 : index
    %c0_140 = arith.constant 0 : index
    %272 = vector.load %arg18[%c72_139, %c0_140] : memref<200x384xbf16, #tpu.memory_space<vmem>>, vector<8x384xbf16>
    tpu.vector_store %arg18[%c72_139, %c0_140], %271 {strides = array<i32>} : memref<200x384xbf16, #tpu.memory_space<vmem>>, vector<8x384xbf16>,
    %c0_141 = arith.constant 0 : index
    %c126_142 = arith.constant 126 : index
    %273 = vector.load %arg17[%c0_141, %c126_142] : memref<8x640xf32, #tpu.memory_space<vmem>>, vector<8x384xf32>
    %274 = arith.truncf %273 : vector<8x384xf32> to vector<8x384xbf16>
    %c80_143 = arith.constant 80 : index
    %c0_144 = arith.constant 0 : index
    %275 = vector.load %arg18[%c80_143, %c0_144] : memref<200x384xbf16, #tpu.memory_space<vmem>>, vector<8x384xbf16>
    tpu.vector_store %arg18[%c80_143, %c0_144], %274 {strides = array<i32>} : memref<200x384xbf16, #tpu.memory_space<vmem>>, vector<8x384xbf16>,
    %c0_145 = arith.constant 0 : index
    %c127_146 = arith.constant 127 : index
    %276 = vector.load %arg17[%c0_145, %c127_146] : memref<8x640xf32, #tpu.memory_space<vmem>>, vector<8x384xf32>
    %277 = arith.truncf %276 : vector<8x384xf32> to vector<8x384xbf16>
    %c88_147 = arith.constant 88 : index
    %c0_148 = arith.constant 0 : index
    %278 = vector.load %arg18[%c88_147, %c0_148] : memref<200x384xbf16, #tpu.memory_space<vmem>>, vector<8x384xbf16>
    tpu.vector_store %arg18[%c88_147, %c0_148], %277 {strides = array<i32>} : memref<200x384xbf16, #tpu.memory_space<vmem>>, vector<8x384xbf16>,
    %c0_149 = arith.constant 0 : index
    %c128_150 = arith.constant 128 : index
    %279 = vector.load %arg17[%c0_149, %c128_150] : memref<8x640xf32, #tpu.memory_space<vmem>>, vector<8x384xf32>
    %280 = arith.truncf %279 : vector<8x384xf32> to vector<8x384xbf16>
    %c96_151 = arith.constant 96 : index
    %c0_152 = arith.constant 0 : index
    %281 = vector.load %arg18[%c96_151, %c0_152] : memref<200x384xbf16, #tpu.memory_space<vmem>>, vector<8x384xbf16>
    tpu.vector_store %arg18[%c96_151, %c0_152], %280 {strides = array<i32>} : memref<200x384xbf16, #tpu.memory_space<vmem>>, vector<8x384xbf16>,
    %c0_153 = arith.constant 0 : index
    %c129_154 = arith.constant 129 : index
    %282 = vector.load %arg17[%c0_153, %c129_154] : memref<8x640xf32, #tpu.memory_space<vmem>>, vector<8x384xf32>
    %283 = arith.truncf %282 : vector<8x384xf32> to vector<8x384xbf16>
    %c104_155 = arith.constant 104 : index
    %c0_156 = arith.constant 0 : index
    %284 = vector.load %arg18[%c104_155, %c0_156] : memref<200x384xbf16, #tpu.memory_space<vmem>>, vector<8x384xbf16>
    tpu.vector_store %arg18[%c104_155, %c0_156], %283 {strides = array<i32>} : memref<200x384xbf16, #tpu.memory_space<vmem>>, vector<8x384xbf16>,
    %c0_157 = arith.constant 0 : index
    %c130_158 = arith.constant 130 : index
    %285 = vector.load %arg17[%c0_157, %c130_158] : memref<8x640xf32, #tpu.memory_space<vmem>>, vector<8x384xf32>
    %286 = arith.truncf %285 : vector<8x384xf32> to vector<8x384xbf16>
    %c112_159 = arith.constant 112 : index
    %c0_160 = arith.constant 0 : index
    %287 = vector.load %arg18[%c112_159, %c0_160] : memref<200x384xbf16, #tpu.memory_space<vmem>>, vector<8x384xbf16>
    tpu.vector_store %arg18[%c112_159, %c0_160], %286 {strides = array<i32>} : memref<200x384xbf16, #tpu.memory_space<vmem>>, vector<8x384xbf16>,
    %c0_161 = arith.constant 0 : index
    %c146_162 = arith.constant 146 : index
    %288 = vector.load %arg17[%c0_161, %c146_162] : memref<8x640xf32, #tpu.memory_space<vmem>>, vector<8x384xf32>
    %289 = arith.truncf %288 : vector<8x384xf32> to vector<8x384xbf16>
    %c120_163 = arith.constant 120 : index
    %c0_164 = arith.constant 0 : index
    %290 = vector.load %arg18[%c120_163, %c0_164] : memref<200x384xbf16, #tpu.memory_space<vmem>>, vector<8x384xbf16>
    tpu.vector_store %arg18[%c120_163, %c0_164], %289 {strides = array<i32>} : memref<200x384xbf16, #tpu.memory_space<vmem>>, vector<8x384xbf16>,
    %c0_165 = arith.constant 0 : index
    %c147_166 = arith.constant 147 : index
    %291 = vector.load %arg17[%c0_165, %c147_166] : memref<8x640xf32, #tpu.memory_space<vmem>>, vector<8x384xf32>
    %292 = arith.truncf %291 : vector<8x384xf32> to vector<8x384xbf16>
    %c128_167 = arith.constant 128 : index
    %c0_168 = arith.constant 0 : index
    %293 = vector.load %arg18[%c128_167, %c0_168] : memref<200x384xbf16, #tpu.memory_space<vmem>>, vector<8x384xbf16>
    tpu.vector_store %arg18[%c128_167, %c0_168], %292 {strides = array<i32>} : memref<200x384xbf16, #tpu.memory_space<vmem>>, vector<8x384xbf16>,
    %c0_169 = arith.constant 0 : index
    %c148_170 = arith.constant 148 : index
    %294 = vector.load %arg17[%c0_169, %c148_170] : memref<8x640xf32, #tpu.memory_space<vmem>>, vector<8x384xf32>
    %295 = arith.truncf %294 : vector<8x384xf32> to vector<8x384xbf16>
    %c136_171 = arith.constant 136 : index
    %c0_172 = arith.constant 0 : index
    %296 = vector.load %arg18[%c136_171, %c0_172] : memref<200x384xbf16, #tpu.memory_space<vmem>>, vector<8x384xbf16>
    tpu.vector_store %arg18[%c136_171, %c0_172], %295 {strides = array<i32>} : memref<200x384xbf16, #tpu.memory_space<vmem>>, vector<8x384xbf16>,
    %c0_173 = arith.constant 0 : index
    %c149_174 = arith.constant 149 : index
    %297 = vector.load %arg17[%c0_173, %c149_174] : memref<8x640xf32, #tpu.memory_space<vmem>>, vector<8x384xf32>
    %298 = arith.truncf %297 : vector<8x384xf32> to vector<8x384xbf16>
    %c144_175 = arith.constant 144 : index
    %c0_176 = arith.constant 0 : index
    %299 = vector.load %arg18[%c144_175, %c0_176] : memref<200x384xbf16, #tpu.memory_space<vmem>>, vector<8x384xbf16>
    tpu.vector_store %arg18[%c144_175, %c0_176], %298 {strides = array<i32>} : memref<200x384xbf16, #tpu.memory_space<vmem>>, vector<8x384xbf16>,
    %c0_177 = arith.constant 0 : index
    %c150_178 = arith.constant 150 : index
    %300 = vector.load %arg17[%c0_177, %c150_178] : memref<8x640xf32, #tpu.memory_space<vmem>>, vector<8x384xf32>
    %301 = arith.truncf %300 : vector<8x384xf32> to vector<8x384xbf16>
    %c152_179 = arith.constant 152 : index
    %c0_180 = arith.constant 0 : index
    %302 = vector.load %arg18[%c152_179, %c0_180] : memref<200x384xbf16, #tpu.memory_space<vmem>>, vector<8x384xbf16>
    tpu.vector_store %arg18[%c152_179, %c0_180], %301 {strides = array<i32>} : memref<200x384xbf16, #tpu.memory_space<vmem>>, vector<8x384xbf16>,
    %c0_181 = arith.constant 0 : index
    %c166_182 = arith.constant 166 : index
    %303 = vector.load %arg17[%c0_181, %c166_182] : memref<8x640xf32, #tpu.memory_space<vmem>>, vector<8x384xf32>
    %304 = arith.truncf %303 : vector<8x384xf32> to vector<8x384xbf16>
    %c160_183 = arith.constant 160 : index
    %c0_184 = arith.constant 0 : index
    %305 = vector.load %arg18[%c160_183, %c0_184] : memref<200x384xbf16, #tpu.memory_space<vmem>>, vector<8x384xbf16>
    tpu.vector_store %arg18[%c160_183, %c0_184], %304 {strides = array<i32>} : memref<200x384xbf16, #tpu.memory_space<vmem>>, vector<8x384xbf16>,
    %c0_185 = arith.constant 0 : index
    %c167_186 = arith.constant 167 : index
    %306 = vector.load %arg17[%c0_185, %c167_186] : memref<8x640xf32, #tpu.memory_space<vmem>>, vector<8x384xf32>
    %307 = arith.truncf %306 : vector<8x384xf32> to vector<8x384xbf16>
    %c168_187 = arith.constant 168 : index
    %c0_188 = arith.constant 0 : index
    %308 = vector.load %arg18[%c168_187, %c0_188] : memref<200x384xbf16, #tpu.memory_space<vmem>>, vector<8x384xbf16>
    tpu.vector_store %arg18[%c168_187, %c0_188], %307 {strides = array<i32>} : memref<200x384xbf16, #tpu.memory_space<vmem>>, vector<8x384xbf16>,
    %c0_189 = arith.constant 0 : index
    %c168_190 = arith.constant 168 : index
    %309 = vector.load %arg17[%c0_189, %c168_190] : memref<8x640xf32, #tpu.memory_space<vmem>>, vector<8x384xf32>
    %310 = arith.truncf %309 : vector<8x384xf32> to vector<8x384xbf16>
    %c176_191 = arith.constant 176 : index
    %c0_192 = arith.constant 0 : index
    %311 = vector.load %arg18[%c176_191, %c0_192] : memref<200x384xbf16, #tpu.memory_space<vmem>>, vector<8x384xbf16>
    tpu.vector_store %arg18[%c176_191, %c0_192], %310 {strides = array<i32>} : memref<200x384xbf16, #tpu.memory_space<vmem>>, vector<8x384xbf16>,
    %c0_193 = arith.constant 0 : index
    %c169_194 = arith.constant 169 : index
    %312 = vector.load %arg17[%c0_193, %c169_194] : memref<8x640xf32, #tpu.memory_space<vmem>>, vector<8x384xf32>
    %313 = arith.truncf %312 : vector<8x384xf32> to vector<8x384xbf16>
    %c184_195 = arith.constant 184 : index
    %c0_196 = arith.constant 0 : index
    %314 = vector.load %arg18[%c184_195, %c0_196] : memref<200x384xbf16, #tpu.memory_space<vmem>>, vector<8x384xbf16>
    tpu.vector_store %arg18[%c184_195, %c0_196], %313 {strides = array<i32>} : memref<200x384xbf16, #tpu.memory_space<vmem>>, vector<8x384xbf16>,
    %c0_197 = arith.constant 0 : index
    %c170_198 = arith.constant 170 : index
    %315 = vector.load %arg17[%c0_197, %c170_198] : memref<8x640xf32, #tpu.memory_space<vmem>>, vector<8x384xf32>
    %316 = arith.truncf %315 : vector<8x384xf32> to vector<8x384xbf16>
    %c192_199 = arith.constant 192 : index
    %c0_200 = arith.constant 0 : index
    %317 = vector.load %arg18[%c192_199, %c0_200] : memref<200x384xbf16, #tpu.memory_space<vmem>>, vector<8x384xbf16>
    tpu.vector_store %arg18[%c192_199, %c0_200], %316 {strides = array<i32>} : memref<200x384xbf16, #tpu.memory_space<vmem>>, vector<8x384xbf16>,
    %318 = arith.index_cast %c1_i32 : i32 to index
    %c0_201 = arith.constant 0 : index
    %c0_202 = arith.constant 0 : index
    %319 = vector.load %arg5[%318, %c0_201, %c0_202] : memref<2x8x200xbf16, #tpu.memory_space<vmem>>, vector<1x8x200xbf16>
    %320 = vector.shape_cast %319 : vector<1x8x200xbf16> to vector<8x200xbf16>
    %c0_203 = arith.constant 0 : index
    %c0_204 = arith.constant 0 : index
    %321 = vector.load %arg18[%c0_203, %c0_204] : memref<200x384xbf16, #tpu.memory_space<vmem>>, vector<200x384xbf16>
    %cst_205 = arith.constant dense<0.000000e+00> : vector<8x384xf32>
    %322 = tpu.matmul %320, %321, %cst_205 {dimension_numbers = #tpu.dot_dimension_numbers<[1], [0], [0], [1], [0, 0, 1, 1], [], []>} : vector<8x200xbf16>, vector<200x384xbf16>, vector<8x384xf32> -> vector<8x384xf32>
    %323 = arith.index_cast %c1_i32 : i32 to index
    %324 = memref.load %arg4[%323] : memref<2xf32, #tpu.memory_space<smem>>
    %325 = arith.index_cast %c1_i32 : i32 to index
    %c0_206 = arith.constant 0 : index
    %c0_207 = arith.constant 0 : index
    %326 = vector.load %arg7[%325, %c0_206, %c0_207] : memref<2x8x8xf32, #tpu.memory_space<vmem>>, vector<1x8x8xf32>
    %327 = vector.shape_cast %326 : vector<1x8x8xf32> to vector<8x8xf32>
    %328 = arith.mulf %322, %322 : vector<8x384xf32>
    %329 = vector.extract_strided_slice %327 {offsets = [0, 0], sizes = [8, 1], strides = [1, 1]} : vector<8x8xf32> to vector<8x1xf32>
    %330 = vector.extract_strided_slice %328 {offsets = [0, 0], sizes = [1, 384], strides = [1, 1]} : vector<8x384xf32> to vector<1x384xf32>
    %331 = vector.broadcast %329 : vector<8x1xf32> to vector<8x384xf32>
    %332 = vector.broadcast %330 : vector<1x384xf32> to vector<8x384xf32>
    %333 = arith.mulf %331, %332 : vector<8x384xf32>
    %334 = vector.extract_strided_slice %327 {offsets = [0, 1], sizes = [8, 1], strides = [1, 1]} : vector<8x8xf32> to vector<8x1xf32>
    %335 = vector.extract_strided_slice %328 {offsets = [1, 0], sizes = [1, 384], strides = [1, 1]} : vector<8x384xf32> to vector<1x384xf32>
    %336 = vector.broadcast %334 : vector<8x1xf32> to vector<8x384xf32>
    %337 = vector.broadcast %335 : vector<1x384xf32> to vector<8x384xf32>
    %338 = arith.mulf %336, %337 : vector<8x384xf32>
    %339 = arith.addf %333, %338 : vector<8x384xf32>
    %340 = vector.extract_strided_slice %327 {offsets = [0, 2], sizes = [8, 1], strides = [1, 1]} : vector<8x8xf32> to vector<8x1xf32>
    %341 = vector.extract_strided_slice %328 {offsets = [2, 0], sizes = [1, 384], strides = [1, 1]} : vector<8x384xf32> to vector<1x384xf32>
    %342 = vector.broadcast %340 : vector<8x1xf32> to vector<8x384xf32>
    %343 = vector.broadcast %341 : vector<1x384xf32> to vector<8x384xf32>
    %344 = arith.mulf %342, %343 : vector<8x384xf32>
    %345 = arith.addf %339, %344 : vector<8x384xf32>
    %346 = vector.extract_strided_slice %327 {offsets = [0, 3], sizes = [8, 1], strides = [1, 1]} : vector<8x8xf32> to vector<8x1xf32>
    %347 = vector.extract_strided_slice %328 {offsets = [3, 0], sizes = [1, 384], strides = [1, 1]} : vector<8x384xf32> to vector<1x384xf32>
    %348 = vector.broadcast %346 : vector<8x1xf32> to vector<8x384xf32>
    %349 = vector.broadcast %347 : vector<1x384xf32> to vector<8x384xf32>
    %350 = arith.mulf %348, %349 : vector<8x384xf32>
    %351 = arith.addf %345, %350 : vector<8x384xf32>
    %352 = arith.index_cast %c1_i32 : i32 to index
    %c0_208 = arith.constant 0 : index
    %c0_209 = arith.constant 0 : index
    %353 = vector.load %arg8[%352, %c0_208, %c0_209] : memref<2x8x1xf32, #tpu.memory_space<vmem>>, vector<1x8x1xf32>
    %354 = vector.shape_cast %353 : vector<1x8x1xf32> to vector<8x1xf32>
    %355 = vector.broadcast %354 : vector<8x1xf32> to vector<8x384xf32>
    %356 = arith.addf %351, %355 : vector<8x384xf32>
    %357 = math.rsqrt %356 : vector<8x384xf32>
    %358 = arith.mulf %322, %357 : vector<8x384xf32>
    %cst_210 = arith.constant 0.000000e+00 : f32
    %359 = vector.broadcast %cst_210 : f32 to vector<8x384xf32>
    %360 = arith.cmpf oge, %358, %359 : vector<8x384xf32>
    %361 = vector.broadcast %324 : f32 to vector<8x384xf32>
    %362 = arith.mulf %361, %358 : vector<8x384xf32>
    %363 = arith.select %360, %358, %362 : vector<8x384xi1>, vector<8x384xf32>
    %364 = arith.index_cast %c1_i32 : i32 to index
    %c0_211 = arith.constant 0 : index
    %c0_212 = arith.constant 0 : index
    %365 = vector.load %arg6[%364, %c0_211, %c0_212] : memref<2x8x8xf32, #tpu.memory_space<vmem>>, vector<1x8x8xf32>
    %366 = vector.shape_cast %365 : vector<1x8x8xf32> to vector<8x8xf32>
    %367 = vector.extract_strided_slice %366 {offsets = [0, 0], sizes = [8, 1], strides = [1, 1]} : vector<8x8xf32> to vector<8x1xf32>
    %368 = vector.extract_strided_slice %363 {offsets = [0, 0], sizes = [1, 384], strides = [1, 1]} : vector<8x384xf32> to vector<1x384xf32>
    %369 = vector.broadcast %367 : vector<8x1xf32> to vector<8x384xf32>
    %370 = vector.broadcast %368 : vector<1x384xf32> to vector<8x384xf32>
    %371 = arith.mulf %369, %370 : vector<8x384xf32>
    %372 = vector.extract_strided_slice %366 {offsets = [0, 1], sizes = [8, 1], strides = [1, 1]} : vector<8x8xf32> to vector<8x1xf32>
    %373 = vector.extract_strided_slice %363 {offsets = [1, 0], sizes = [1, 384], strides = [1, 1]} : vector<8x384xf32> to vector<1x384xf32>
    %374 = vector.broadcast %372 : vector<8x1xf32> to vector<8x384xf32>
    %375 = vector.broadcast %373 : vector<1x384xf32> to vector<8x384xf32>
    %376 = arith.mulf %374, %375 : vector<8x384xf32>
    %377 = arith.addf %371, %376 : vector<8x384xf32>
    %378 = vector.extract_strided_slice %366 {offsets = [0, 2], sizes = [8, 1], strides = [1, 1]} : vector<8x8xf32> to vector<8x1xf32>
    %379 = vector.extract_strided_slice %363 {offsets = [2, 0], sizes = [1, 384], strides = [1, 1]} : vector<8x384xf32> to vector<1x384xf32>
    %380 = vector.broadcast %378 : vector<8x1xf32> to vector<8x384xf32>
    %381 = vector.broadcast %379 : vector<1x384xf32> to vector<8x384xf32>
    %382 = arith.mulf %380, %381 : vector<8x384xf32>
    %383 = arith.addf %377, %382 : vector<8x384xf32>
    %384 = vector.extract_strided_slice %366 {offsets = [0, 3], sizes = [8, 1], strides = [1, 1]} : vector<8x8xf32> to vector<8x1xf32>
    %385 = vector.extract_strided_slice %363 {offsets = [3, 0], sizes = [1, 384], strides = [1, 1]} : vector<8x384xf32> to vector<1x384xf32>
    %386 = vector.broadcast %384 : vector<8x1xf32> to vector<8x384xf32>
    %387 = vector.broadcast %385 : vector<1x384xf32> to vector<8x384xf32>
    %388 = arith.mulf %386, %387 : vector<8x384xf32>
    %389 = arith.addf %383, %388 : vector<8x384xf32>
    %390 = arith.index_cast %c1_i32 : i32 to index
    %c0_213 = arith.constant 0 : index
    %c0_214 = arith.constant 0 : index
    %391 = vector.load %arg9[%390, %c0_213, %c0_214] : memref<2x8x8xf32, #tpu.memory_space<vmem>>, vector<1x8x8xf32>
    %392 = vector.shape_cast %391 : vector<1x8x8xf32> to vector<8x8xf32>
    %393 = arith.mulf %389, %389 : vector<8x384xf32>
    %394 = vector.extract_strided_slice %392 {offsets = [0, 0], sizes = [8, 1], strides = [1, 1]} : vector<8x8xf32> to vector<8x1xf32>
    %395 = vector.extract_strided_slice %393 {offsets = [0, 0], sizes = [1, 384], strides = [1, 1]} : vector<8x384xf32> to vector<1x384xf32>
    %396 = vector.broadcast %394 : vector<8x1xf32> to vector<8x384xf32>
    %397 = vector.broadcast %395 : vector<1x384xf32> to vector<8x384xf32>
    %398 = arith.mulf %396, %397 : vector<8x384xf32>
    %399 = vector.extract_strided_slice %392 {offsets = [0, 1], sizes = [8, 1], strides = [1, 1]} : vector<8x8xf32> to vector<8x1xf32>
    %400 = vector.extract_strided_slice %393 {offsets = [1, 0], sizes = [1, 384], strides = [1, 1]} : vector<8x384xf32> to vector<1x384xf32>
    %401 = vector.broadcast %399 : vector<8x1xf32> to vector<8x384xf32>
    %402 = vector.broadcast %400 : vector<1x384xf32> to vector<8x384xf32>
    %403 = arith.mulf %401, %402 : vector<8x384xf32>
    %404 = arith.addf %398, %403 : vector<8x384xf32>
    %405 = vector.extract_strided_slice %392 {offsets = [0, 2], sizes = [8, 1], strides = [1, 1]} : vector<8x8xf32> to vector<8x1xf32>
    %406 = vector.extract_strided_slice %393 {offsets = [2, 0], sizes = [1, 384], strides = [1, 1]} : vector<8x384xf32> to vector<1x384xf32>
    %407 = vector.broadcast %405 : vector<8x1xf32> to vector<8x384xf32>
    %408 = vector.broadcast %406 : vector<1x384xf32> to vector<8x384xf32>
    %409 = arith.mulf %407, %408 : vector<8x384xf32>
    %410 = arith.addf %404, %409 : vector<8x384xf32>
    %411 = vector.extract_strided_slice %392 {offsets = [0, 3], sizes = [8, 1], strides = [1, 1]} : vector<8x8xf32> to vector<8x1xf32>
    %412 = vector.extract_strided_slice %393 {offsets = [3, 0], sizes = [1, 384], strides = [1, 1]} : vector<8x384xf32> to vector<1x384xf32>
    %413 = vector.broadcast %411 : vector<8x1xf32> to vector<8x384xf32>
    %414 = vector.broadcast %412 : vector<1x384xf32> to vector<8x384xf32>
    %415 = arith.mulf %413, %414 : vector<8x384xf32>
    %416 = arith.addf %410, %415 : vector<8x384xf32>
    %417 = arith.index_cast %c1_i32 : i32 to index
    %c0_215 = arith.constant 0 : index
    %c0_216 = arith.constant 0 : index
    %418 = vector.load %arg10[%417, %c0_215, %c0_216] : memref<2x8x1xf32, #tpu.memory_space<vmem>>, vector<1x8x1xf32>
    %419 = vector.shape_cast %418 : vector<1x8x1xf32> to vector<8x1xf32>
    %420 = vector.broadcast %419 : vector<8x1xf32> to vector<8x384xf32>
    %421 = arith.addf %416, %420 : vector<8x384xf32>
    %422 = math.rsqrt %421 : vector<8x384xf32>
    %423 = arith.mulf %389, %422 : vector<8x384xf32>
    %424 = arith.addf %423, %242 : vector<8x384xf32>
    %cst_217 = arith.constant 0.000000e+00 : f32
    %425 = vector.broadcast %cst_217 : f32 to vector<8x384xf32>
    %426 = arith.cmpf oge, %424, %425 : vector<8x384xf32>
    %427 = vector.broadcast %324 : f32 to vector<8x384xf32>
    %428 = arith.mulf %427, %424 : vector<8x384xf32>
    %429 = arith.select %426, %424, %428 : vector<8x384xi1>, vector<8x384xf32>
    %430 = vector.broadcast %5 : vector<1x384xf32> to vector<8x384xf32>
    %431 = arith.mulf %429, %430 : vector<8x384xf32>
    %cst_218 = arith.constant dense<0.000000e+00> : vector<8xf32>
    %432 = vector.multi_reduction <add>, %431, %cst_218 [1] : vector<8x384xf32> to vector<8xf32>
    %433 = vector.shape_cast %432 : vector<8xf32> to vector<8x1xf32>
    %cst_219 = arith.constant 3.906250e-03 : f32
    %434 = vector.broadcast %cst_219 : f32 to vector<8x1xf32>
    %435 = arith.mulf %433, %434 : vector<8x1xf32>
    %436 = arith.index_cast %c1_i32 : i32 to index
    %c0_220 = arith.constant 0 : index
    %c0_221 = arith.constant 0 : index
    %437 = vector.load %arg11[%436, %c0_220, %c0_221] : memref<2x8x2xf32, #tpu.memory_space<vmem>>, vector<1x8x2xf32>
    %438 = vector.shape_cast %437 : vector<1x8x2xf32> to vector<8x2xf32>
    %439 = vector.broadcast %435 : vector<8x1xf32> to vector<8x2xf32>
    %440 = arith.mulf %438, %439 : vector<8x2xf32>
    %cst_222 = arith.constant dense<0.000000e+00> : vector<2xf32>
    %441 = vector.multi_reduction <add>, %440, %cst_222 [0] : vector<8x2xf32> to vector<2xf32>
    %442 = vector.shape_cast %441 : vector<2xf32> to vector<1x2xf32>
    %443 = arith.index_cast %c1_i32 : i32 to index
    %c0_223 = arith.constant 0 : index
    %c0_224 = arith.constant 0 : index
    %444 = vector.load %arg12[%443, %c0_223, %c0_224] : memref<2x1x2xf32, #tpu.memory_space<vmem>>, vector<1x1x2xf32>
    %445 = vector.shape_cast %444 : vector<1x1x2xf32> to vector<1x2xf32>
    %446 = vector.broadcast %7 : f32 to vector<1x2xf32>
    %447 = arith.mulf %446, %445 : vector<1x2xf32>
    %448 = arith.addf %442, %447 : vector<1x2xf32>
    %449 = arith.index_cast %c1_i32 : i32 to index
    %c0_225 = arith.constant 0 : index
    %c0_226 = arith.constant 0 : index
    %450 = vector.load %arg13[%449, %c0_225, %c0_226] : memref<2x1x2xf32, #tpu.memory_space<vmem>>, vector<1x1x2xf32>
    %451 = vector.shape_cast %450 : vector<1x1x2xf32> to vector<1x2xf32>
    %452 = arith.addf %448, %451 : vector<1x2xf32>
    %cst_227 = arith.constant 0.000000e+00 : f32
    %453 = vector.broadcast %cst_227 : f32 to vector<1x2xf32>
    %454 = arith.maximumf %452, %453 : vector<1x2xf32>
    %455 = arith.index_cast %c1_i32 : i32 to index
    %c0_228 = arith.constant 0 : index
    %c0_229 = arith.constant 0 : index
    %456 = vector.load %arg14[%455, %c0_228, %c0_229] : memref<2x8x2xf32, #tpu.memory_space<vmem>>, vector<1x8x2xf32>
    %457 = vector.shape_cast %456 : vector<1x8x2xf32> to vector<8x2xf32>
    %458 = vector.broadcast %454 : vector<1x2xf32> to vector<8x2xf32>
    %459 = arith.mulf %457, %458 : vector<8x2xf32>
    %cst_230 = arith.constant dense<0.000000e+00> : vector<8xf32>
    %460 = vector.multi_reduction <add>, %459, %cst_230 [1] : vector<8x2xf32> to vector<8xf32>
    %461 = vector.shape_cast %460 : vector<8xf32> to vector<8x1xf32>
    %462 = arith.index_cast %c1_i32 : i32 to index
    %c0_231 = arith.constant 0 : index
    %c0_232 = arith.constant 0 : index
    %463 = vector.load %arg15[%462, %c0_231, %c0_232] : memref<2x8x1xf32, #tpu.memory_space<vmem>>, vector<1x8x1xf32>
    %464 = vector.shape_cast %463 : vector<1x8x1xf32> to vector<8x1xf32>
    %465 = arith.addf %461, %464 : vector<8x1xf32>
    %466 = arith.negf %465 : vector<8x1xf32>
    %467 = math.exp %466 : vector<8x1xf32>
    %cst_233 = arith.constant 1.000000e+00 : f32
    %468 = vector.broadcast %cst_233 : f32 to vector<8x1xf32>
    %469 = arith.addf %468, %467 : vector<8x1xf32>
    %470 = arith.divf %468, %469 : vector<8x1xf32>
    %471 = vector.broadcast %470 : vector<8x1xf32> to vector<8x384xf32>
    %472 = arith.mulf %429, %471 : vector<8x384xf32>
    %473 = vector.broadcast %5 : vector<1x384xf32> to vector<8x384xf32>
    %474 = arith.mulf %472, %473 : vector<8x384xf32>
    %c0_234 = arith.constant 0 : index
    %c128_235 = arith.constant 128 : index
    %475 = vector.load %arg17[%c0_234, %c128_235] : memref<8x640xf32, #tpu.memory_space<vmem>>, vector<8x384xf32>
    tpu.vector_store %arg17[%c0_234, %c128_235], %474 {strides = array<i32>} : memref<8x640xf32, #tpu.memory_space<vmem>>, vector<8x384xf32>,
    %c2_i32 = arith.constant 2 : i32
    %c0_236 = arith.constant 0 : index
    %c128_237 = arith.constant 128 : index
    %476 = vector.load %arg17[%c0_236, %c128_237] : memref<8x640xf32, #tpu.memory_space<vmem>>, vector<8x384xf32>
    %c0_238 = arith.constant 0 : index
    %c0_239 = arith.constant 0 : index
    %c0_240 = arith.constant 0 : index
    %477 = vector.load %arg16[%c0_238, %c0_239, %c0_240] : memref<1x8x384xf32, #tpu.memory_space<vmem>>, vector<1x8x384xf32>
    %478 = vector.shape_cast %477 : vector<1x8x384xf32> to vector<8x384xf32>
    %479 = vector.shape_cast %476 : vector<8x384xf32> to vector<1x8x384xf32>
    tpu.vector_store %arg16[%c0_238, %c0_239, %c0_240], %479 {strides = array<i32>} : memref<1x8x384xf32, #tpu.memory_space<vmem>>, vector<1x8x384xf32>,
    return
  }
  func.func @transform_0(%arg0: i32) -> (i32, i32, i32) {
    %c0_i32 = arith.constant 0 : i32
    %c0_i32_0 = arith.constant 0 : i32
    %c0_i32_1 = arith.constant 0 : i32
    return %arg0, %c0_i32, %c0_i32_0 : i32, i32, i32
  }
  func.func @transform_1(%arg0: i32) -> (i32, i32) {
    %c0_i32 = arith.constant 0 : i32
    %c0_i32_0 = arith.constant 0 : i32
    %c0_i32_1 = arith.constant 0 : i32
    return %c0_i32, %c0_i32_0 : i32, i32
  }
  func.func @transform_2(%arg0: i32) -> i32 {
    %c0_i32 = arith.constant 0 : i32
    %c0_i32_0 = arith.constant 0 : i32
    return %c0_i32 : i32
  }
  func.func @transform_3(%arg0: i32) -> i32 {
    %c0_i32 = arith.constant 0 : i32
    %c0_i32_0 = arith.constant 0 : i32
    return %c0_i32 : i32
  }
  func.func @transform_4(%arg0: i32) -> (i32, i32, i32) {
    %c0_i32 = arith.constant 0 : i32
    %c0_i32_0 = arith.constant 0 : i32
    %c0_i32_1 = arith.constant 0 : i32
    %c0_i32_2 = arith.constant 0 : i32
    return %c0_i32, %c0_i32_0, %c0_i32_1 : i32, i32, i32
  }
  func.func @transform_5(%arg0: i32) -> (i32, i32, i32) {
    %c0_i32 = arith.constant 0 : i32
    %c0_i32_0 = arith.constant 0 : i32
    %c0_i32_1 = arith.constant 0 : i32
    %c0_i32_2 = arith.constant 0 : i32
    return %c0_i32, %c0_i32_0, %c0_i32_1 : i32, i32, i32
  }
  func.func @transform_6(%arg0: i32) -> (i32, i32, i32) {
    %c0_i32 = arith.constant 0 : i32
    %c0_i32_0 = arith.constant 0 : i32
    %c0_i32_1 = arith.constant 0 : i32
    %c0_i32_2 = arith.constant 0 : i32
    return %c0_i32, %c0_i32_0, %c0_i32_1 : i32, i32, i32
  }
  func.func @transform_7(%arg0: i32) -> (i32, i32, i32) {
    %c0_i32 = arith.constant 0 : i32
    %c0_i32_0 = arith.constant 0 : i32
    %c0_i32_1 = arith.constant 0 : i32
    %c0_i32_2 = arith.constant 0 : i32
    return %c0_i32, %c0_i32_0, %c0_i32_1 : i32, i32, i32
  }
  func.func @transform_8(%arg0: i32) -> (i32, i32, i32) {
    %c0_i32 = arith.constant 0 : i32
    %c0_i32_0 = arith.constant 0 : i32
    %c0_i32_1 = arith.constant 0 : i32
    %c0_i32_2 = arith.constant 0 : i32
    return %c0_i32, %c0_i32_0, %c0_i32_1 : i32, i32, i32
  }
  func.func @transform_9(%arg0: i32) -> (i32, i32, i32) {
    %c0_i32 = arith.constant 0 : i32
    %c0_i32_0 = arith.constant 0 : i32
    %c0_i32_1 = arith.constant 0 : i32
    %c0_i32_2 = arith.constant 0 : i32
    return %c0_i32, %c0_i32_0, %c0_i32_1 : i32, i32, i32
  }
  func.func @transform_10(%arg0: i32) -> (i32, i32, i32) {
    %c0_i32 = arith.constant 0 : i32
    %c0_i32_0 = arith.constant 0 : i32
    %c0_i32_1 = arith.constant 0 : i32
    %c0_i32_2 = arith.constant 0 : i32
    return %c0_i32, %c0_i32_0, %c0_i32_1 : i32, i32, i32
  }
  func.func @transform_11(%arg0: i32) -> (i32, i32, i32) {
    %c0_i32 = arith.constant 0 : i32
    %c0_i32_0 = arith.constant 0 : i32
    %c0_i32_1 = arith.constant 0 : i32
    %c0_i32_2 = arith.constant 0 : i32
    return %c0_i32, %c0_i32_0, %c0_i32_1 : i32, i32, i32
  }
  func.func @transform_12(%arg0: i32) -> (i32, i32, i32) {
    %c0_i32 = arith.constant 0 : i32
    %c0_i32_0 = arith.constant 0 : i32
    %c0_i32_1 = arith.constant 0 : i32
    %c0_i32_2 = arith.constant 0 : i32
    return %c0_i32, %c0_i32_0, %c0_i32_1 : i32, i32, i32
  }
  func.func @transform_13(%arg0: i32) -> (i32, i32, i32) {
    %c0_i32 = arith.constant 0 : i32
    %c0_i32_0 = arith.constant 0 : i32
    %c0_i32_1 = arith.constant 0 : i32
    %c0_i32_2 = arith.constant 0 : i32
    return %c0_i32, %c0_i32_0, %c0_i32_1 : i32, i32, i32
  }
  func.func @transform_14(%arg0: i32) -> (i32, i32, i32) {
    %c0_i32 = arith.constant 0 : i32
    %c0_i32_0 = arith.constant 0 : i32
    %c0_i32_1 = arith.constant 0 : i32
    %c0_i32_2 = arith.constant 0 : i32
    return %c0_i32, %c0_i32_0, %c0_i32_1 : i32, i32, i32
  }
  func.func @transform_15(%arg0: i32) -> (i32, i32, i32) {
    %c0_i32 = arith.constant 0 : i32
    %c0_i32_0 = arith.constant 0 : i32
    %c0_i32_1 = arith.constant 0 : i32
    return %arg0, %c0_i32, %c0_i32_0 : i32, i32, i32
  }
}

</mosaic_0001>

<llo_original>
// kernel: _lambda_.1
$region0: #{_lambda_.1}
  #allocation0 [shape = 'u32[]', space=smem, size = 0x4, offset = 0x4, fixed_abs, tag = 'smem constant byte address 0x4 - core index']
  #allocation1 [shape = 'u32[144,128]{1,0:T(1,128)}', space=vmem, size = 0x12000, scoped, tag = 'internal scratch']
  #allocation2 [shape = 'f32[8,640]{1,0:T(8,128)}', space=vmem, size = 0x5000, scoped, tag = 'scratch operand']
  #allocation3 [shape = 'bf16[200,384]{1,0:T(8,128)(2,1)}', space=vmem, size = 0x25800, scoped, tag = 'scratch operand']
  %s0 = inlined_call_operand.vmem [shape: f32[2,8,384], index: 0, kind: input, shape index: {}]
  %s1 = inlined_call_operand.vmem [shape: f32[1,384], index: 1, kind: input, shape index: {}]
  %s2 = inlined_call_operand.vmem [shape: f32[2], index: 2, kind: input, shape index: {}]
  %s3 = inlined_call_operand.vmem [shape: f32[2], index: 3, kind: input, shape index: {}]
  %s4 = inlined_call_operand.vmem [shape: bf16[2,8,200], index: 4, kind: input, shape index: {}]
  %s5 = inlined_call_operand.vmem [shape: f32[2,8,8], index: 5, kind: input, shape index: {}]
  %s6 = inlined_call_operand.vmem [shape: f32[2,8,8], index: 6, kind: input, shape index: {}, may-alias: {6,8}]
  %s7 = inlined_call_operand.vmem [shape: f32[2,8,1], index: 7, kind: input, shape index: {}, may-alias: {7,9}]
  %s8 = inlined_call_operand.vmem [shape: f32[2,8,8], index: 8, kind: input, shape index: {}, may-alias: {6,8}]
  %s9 = inlined_call_operand.vmem [shape: f32[2,8,1], index: 9, kind: input, shape index: {}, may-alias: {7,9}]
  %s10 = inlined_call_operand.vmem [shape: f32[2,8,2], index: 10, kind: input, shape index: {}]
  %s11 = inlined_call_operand.vmem [shape: f32[2,1,2], index: 11, kind: input, shape index: {}]
  %s12 = inlined_call_operand.vmem [shape: f32[2,1,2], index: 12, kind: input, shape index: {}]
  %s13 = inlined_call_operand.vmem [shape: f32[2,8,2], index: 13, kind: input, shape index: {}]
  %s14 = inlined_call_operand.vmem [shape: f32[2,8,1], index: 14, kind: input, shape index: {}]
  %s15 = inlined_call_operand.vmem [shape: f32[2,8,384], index: 15, kind: output, shape index: {}]
  %s16 = sld [smem:[#allocation0]]
  $region101: #{_lambda_.1} parent=0
    _
  %s18 = ssub.s32 1, %s16
  %s19 = scalar_select 0, %s18, %s16
  $region1: #{_lambda_.1} parent=0
    #allocation4 [shape = 'u8[512]{0}', space=smem, size = 0x200, scoped, tag = 'input window, operand 2, single buffered']
    #allocation5 [shape = 's32[2]{0}', space=sflag, size = 0x8, scoped, tag = 'scoped memory for _lambda_.1']
    #allocation6 [shape = 'u8[512]{0}', space=smem, size = 0x200, scoped, tag = 'input window, operand 3, single buffered']
    #allocation7 [shape = 's32[1]{0}', space=sflag, size = 0x4, scoped, tag = 'scoped memory for _lambda_.1']
    %20 = vsyncpa [#allocation5], 0
    %21 = vsyncpa [#allocation7], 0
    loop: start=0, step=1, limit=4
    $region2: #{_lambda_.1} parent=1 // loop_pre_header
      _
    $region3: #{_lambda_.1} parent=1 // loop_header
      %s23 = sphi 0, %s27
      %p24 = scmp.ge.s32.totalorder %s23, 4
      %s33 = sphi 0, %s35
      %s36 = sphi 0, %s33
      %s37 = sphi 0, %s36
      %s53 = sphi 0, %s37
      %s57 = sphi 0, %s57
      %s59 = sphi 0, %s57
      %s60 = sphi 0, %s59
      %s74 = sphi 0, %s60
      %s78 = sphi 0, %s78
      %s80 = sphi 0, %s78
      %s81 = sphi 0, %s80
      %s95 = sphi 0, %s81
      %s99 = sphi 0, %s99
      %s101 = sphi 0, %s99
      %s102 = sphi 0, %s101
      %s116 = sphi 0, %s102
      %s120 = sphi 0, %s120
      %s122 = sphi 0, %s120
      %s123 = sphi 0, %s122
      %s137 = sphi 0, %s123
      %s141 = sphi 0, %s141
      %s143 = sphi 0, %s141
      %s144 = sphi 0, %s143
      %s158 = sphi 0, %s144
      %s162 = sphi 0, %s162
      %s164 = sphi 0, %s162
      %s165 = sphi 0, %s164
      %s179 = sphi 0, %s165
      %s183 = sphi 0, %s183
      %s185 = sphi 0, %s183
      %s186 = sphi 0, %s185
      %s200 = sphi 0, %s186
      %s204 = sphi 0, %s204
      %s206 = sphi 0, %s204
      %s207 = sphi 0, %s206
      %s221 = sphi 0, %s207
      %s225 = sphi 0, %s225
      %s227 = sphi 0, %s225
      %s228 = sphi 0, %s227
      %s242 = sphi 0, %s228
      %s246 = sphi 0, %s246
      %s248 = sphi 0, %s246
      %s249 = sphi 0, %s248
      %s263 = sphi 0, %s249
      %s267 = sphi 0, %s267
      %s269 = sphi 0, %s267
      %s270 = sphi 0, %s269
      %s284 = sphi 0, %s270
      %s288 = sphi 0, %s288
      %s290 = sphi 0, %s288
      %s291 = sphi 0, %s290
      %s305 = sphi 0, %s291
      %s309 = sphi 0, %s309
      %s311 = sphi 0, %s309
      %s312 = sphi 0, %s311
      %s326 = sphi 0, %s312
      %s330 = sphi 0, %s330
      %s332 = sphi 0, %s330
      %s333 = sphi 0, %s332
      %s347 = sphi 0, %s333
      %s353 = sphi 0, %s355
      %s356 = sphi 0, %s353
      %s357 = sphi 0, %s356
      %s373 = sphi 0, %s357
    $region4: #{_lambda_.1} parent=1 // loop_header_branch
      %26 = sbr.rel (%p24) target = $region8
    $region5: #{_lambda_.1} parent=1 // loop_body
      %s28 = ssub.s32 %s23, 1
      %s29 = ssub.s32 %s23, 2
      %s30 = sadd.s32 %s23, 1
      %s31 = ssub.s32 %s23, %s30
      %p32 = scmp.eq.s32.totalorder %s31, 0
      %s34 = sadd.s32 %s33, 1
      %s35 = scalar_select %p32, %s33, %s34
      %p38 = pneg %p32
      %p39 = scmp.eq.s32.totalorder %s23, 1
      %p40 = por %p38, %p39
      %p41 = scmp.ne.s32.totalorder %s33, %s36
      %p42 = scmp.eq.s32.totalorder %s23, 0
      %p43 = por %p41, %p42
      %p44 = scmp.ne.s32.totalorder %s33, %s36
      %p45 = scmp.eq.s32.totalorder %s28, 1
      %p46 = por %p44, %p45
      %p47 = scmp.ne.s32.totalorder %s36, %s37
      %p48 = scmp.eq.s32.totalorder %s28, 0
      %p49 = por %p47, %p48
      %p50 = scmp.ne.s32.totalorder %s36, %s37
      %p51 = scmp.eq.s32.totalorder %s29, 1
      %p52 = por %p50, %p51
      %p54 = scmp.ne.s32.totalorder %s37, %s53
      %p55 = scmp.eq.s32.totalorder %s29, 0
      %p56 = por %p54, %p55
      %s58 = sadd.s32 %s57, 1
      %p61 = scmp.eq.s32.totalorder %s23, 1
      %p62 = scmp.ne.s32.totalorder %s57, %s59
      %p63 = scmp.eq.s32.totalorder %s23, 0
      %p64 = por %p62, %p63
      %p65 = scmp.ne.s32.totalorder %s57, %s59
      %p66 = scmp.eq.s32.totalorder %s28, 1
      %p67 = por %p65, %p66
      %p68 = scmp.ne.s32.totalorder %s59, %s60
      %p69 = scmp.eq.s32.totalorder %s28, 0
      %p70 = por %p68, %p69
      %p71 = scmp.ne.s32.totalorder %s59, %s60
      %p72 = scmp.eq.s32.totalorder %s29, 1
      %p73 = por %p71, %p72
      %p75 = scmp.ne.s32.totalorder %s60, %s74
      %p76 = scmp.eq.s32.totalorder %s29, 0
      %p77 = por %p75, %p76
      %s79 = sadd.s32 %s78, 1
      %p82 = scmp.eq.s32.totalorder %s23, 1
      %p83 = scmp.ne.s32.totalorder %s78, %s80
      %p84 = scmp.eq.s32.totalorder %s23, 0
      %p85 = por %p83, %p84
      %p86 = scmp.ne.s32.totalorder %s78, %s80
      %p87 = scmp.eq.s32.totalorder %s28, 1
      %p88 = por %p86, %p87
      %p89 = scmp.ne.s32.totalorder %s80, %s81
      %p90 = scmp.eq.s32.totalorder %s28, 0
      %p91 = por %p89, %p90
      %p92 = scmp.ne.s32.totalorder %s80, %s81
      %p93 = scmp.eq.s32.totalorder %s29, 1
      %p94 = por %p92, %p93
      %p96 = scmp.ne.s32.totalorder %s81, %s95
      %p97 = scmp.eq.s32.totalorder %s29, 0
      %p98 = por %p96, %p97
      %s100 = sadd.s32 %s99, 1
      %p103 = scmp.eq.s32.totalorder %s23, 1
      %p104 = scmp.ne.s32.totalorder %s99, %s101
      %p105 = scmp.eq.s32.totalorder %s23, 0
      %p106 = por %p104, %p105
      %p107 = scmp.ne.s32.totalorder %s99, %s101
      %p108 = scmp.eq.s32.totalorder %s28, 1
      %p109 = por %p107, %p108
      %p110 = scmp.ne.s32.totalorder %s101, %s102
      %p111 = scmp.eq.s32.totalorder %s28, 0
      %p112 = por %p110, %p111
      %p113 = scmp.ne.s32.totalorder %s101, %s102
      %p114 = scmp.eq.s32.totalorder %s29, 1
      %p115 = por %p113, %p114
      %p117 = scmp.ne.s32.totalorder %s102, %s116
      %p118 = scmp.eq.s32.totalorder %s29, 0
      %p119 = por %p117, %p118
      %s121 = sadd.s32 %s120, 1
      %p124 = scmp.eq.s32.totalorder %s23, 1
      %p125 = scmp.ne.s32.totalorder %s120, %s122
      %p126 = scmp.eq.s32.totalorder %s23, 0
      %p127 = por %p125, %p126
      %p128 = scmp.ne.s32.totalorder %s120, %s122
      %p129 = scmp.eq.s32.totalorder %s28, 1
      %p130 = por %p128, %p129
      %p131 = scmp.ne.s32.totalorder %s122, %s123
      %p132 = scmp.eq.s32.totalorder %s28, 0
      %p133 = por %p131, %p132
      %p134 = scmp.ne.s32.totalorder %s122, %s123
      %p135 = scmp.eq.s32.totalorder %s29, 1
      %p136 = por %p134, %p135
      %p138 = scmp.ne.s32.totalorder %s123, %s137
      %p139 = scmp.eq.s32.totalorder %s29, 0
      %p140 = por %p138, %p139
      %s142 = sadd.s32 %s141, 1
      %p145 = scmp.eq.s32.totalorder %s23, 1
      %p146 = scmp.ne.s32.totalorder %s141, %s143
      %p147 = scmp.eq.s32.totalorder %s23, 0
      %p148 = por %p146, %p147
      %p149 = scmp.ne.s32.totalorder %s141, %s143
      %p150 = scmp.eq.s32.totalorder %s28, 1
      %p151 = por %p149, %p150
      %p152 = scmp.ne.s32.totalorder %s143, %s144
      %p153 = scmp.eq.s32.totalorder %s28, 0
      %p154 = por %p152, %p153
      %p155 = scmp.ne.s32.totalorder %s143, %s144
      %p156 = scmp.eq.s32.totalorder %s29, 1
      %p157 = por %p155, %p156
      %p159 = scmp.ne.s32.totalorder %s144, %s158
      %p160 = scmp.eq.s32.totalorder %s29, 0
      %p161 = por %p159, %p160
      %s163 = sadd.s32 %s162, 1
      %p166 = scmp.eq.s32.totalorder %s23, 1
      %p167 = scmp.ne.s32.totalorder %s162, %s164
      %p168 = scmp.eq.s32.totalorder %s23, 0
      %p169 = por %p167, %p168
      %p170 = scmp.ne.s32.totalorder %s162, %s164
      %p171 = scmp.eq.s32.totalorder %s28, 1
      %p172 = por %p170, %p171
      %p173 = scmp.ne.s32.totalorder %s164, %s165
      %p174 = scmp.eq.s32.totalorder %s28, 0
      %p175 = por %p173, %p174
      %p176 = scmp.ne.s32.totalorder %s164, %s165
      %p177 = scmp.eq.s32.totalorder %s29, 1
      %p178 = por %p176, %p177
      %p180 = scmp.ne.s32.totalorder %s165, %s179
      %p181 = scmp.eq.s32.totalorder %s29, 0
      %p182 = por %p180, %p181
      %s184 = sadd.s32 %s183, 1
      %p187 = scmp.eq.s32.totalorder %s23, 1
      %p188 = scmp.ne.s32.totalorder %s183, %s185
      %p189 = scmp.eq.s32.totalorder %s23, 0
      %p190 = por %p188, %p189
      %p191 = scmp.ne.s32.totalorder %s183, %s185
      %p192 = scmp.eq.s32.totalorder %s28, 1
      %p193 = por %p191, %p192
      %p194 = scmp.ne.s32.totalorder %s185, %s186
      %p195 = scmp.eq.s32.totalorder %s28, 0
      %p196 = por %p194, %p195
      %p197 = scmp.ne.s32.totalorder %s185, %s186
      %p198 = scmp.eq.s32.totalorder %s29, 1
      %p199 = por %p197, %p198
      %p201 = scmp.ne.s32.totalorder %s186, %s200
      %p202 = scmp.eq.s32.totalorder %s29, 0
      %p203 = por %p201, %p202
      %s205 = sadd.s32 %s204, 1
      %p208 = scmp.eq.s32.totalorder %s23, 1
      %p209 = scmp.ne.s32.totalorder %s204, %s206
      %p210 = scmp.eq.s32.totalorder %s23, 0
      %p211 = por %p209, %p210
      %p212 = scmp.ne.s32.totalorder %s204, %s206
      %p213 = scmp.eq.s32.totalorder %s28, 1
      %p214 = por %p212, %p213
      %p215 = scmp.ne.s32.totalorder %s206, %s207
      %p216 = scmp.eq.s32.totalorder %s28, 0
      %p217 = por %p215, %p216
      %p218 = scmp.ne.s32.totalorder %s206, %s207
      %p219 = scmp.eq.s32.totalorder %s29, 1
      %p220 = por %p218, %p219
      %p222 = scmp.ne.s32.totalorder %s207, %s221
      %p223 = scmp.eq.s32.totalorder %s29, 0
      %p224 = por %p222, %p223
      %s226 = sadd.s32 %s225, 1
      %p229 = scmp.eq.s32.totalorder %s23, 1
      %p230 = scmp.ne.s32.totalorder %s225, %s227
      %p231 = scmp.eq.s32.totalorder %s23, 0
      %p232 = por %p230, %p231
      %p233 = scmp.ne.s32.totalorder %s225, %s227
      %p234 = scmp.eq.s32.totalorder %s28, 1
      %p235 = por %p233, %p234
      %p236 = scmp.ne.s32.totalorder %s227, %s228
      %p237 = scmp.eq.s32.totalorder %s28, 0
      %p238 = por %p236, %p237
      %p239 = scmp.ne.s32.totalorder %s227, %s228
      %p240 = scmp.eq.s32.totalorder %s29, 1
      %p241 = por %p239, %p240
      %p243 = scmp.ne.s32.totalorder %s228, %s242
      %p244 = scmp.eq.s32.totalorder %s29, 0
      %p245 = por %p243, %p244
      %s247 = sadd.s32 %s246, 1
      %p250 = scmp.eq.s32.totalorder %s23, 1
      %p251 = scmp.ne.s32.totalorder %s246, %s248
      %p252 = scmp.eq.s32.totalorder %s23, 0
      %p253 = por %p251, %p252
      %p254 = scmp.ne.s32.totalorder %s246, %s248
      %p255 = scmp.eq.s32.totalorder %s28, 1
      %p256 = por %p254, %p255
      %p257 = scmp.ne.s32.totalorder %s248, %s249
      %p258 = scmp.eq.s32.totalorder %s28, 0
      %p259 = por %p257, %p258
      %p260 = scmp.ne.s32.totalorder %s248, %s249
      %p261 = scmp.eq.s32.totalorder %s29, 1
      %p262 = por %p260, %p261
      %p264 = scmp.ne.s32.totalorder %s249, %s263
      %p265 = scmp.eq.s32.totalorder %s29, 0
      %p266 = por %p264, %p265
      %s268 = sadd.s32 %s267, 1
      %p271 = scmp.eq.s32.totalorder %s23, 1
      %p272 = scmp.ne.s32.totalorder %s267, %s269
      %p273 = scmp.eq.s32.totalorder %s23, 0
      %p274 = por %p272, %p273
      %p275 = scmp.ne.s32.totalorder %s267, %s269
      %p276 = scmp.eq.s32.totalorder %s28, 1
      %p277 = por %p275, %p276
      %p278 = scmp.ne.s32.totalorder %s269, %s270
      %p279 = scmp.eq.s32.totalorder %s28, 0
      %p280 = por %p278, %p279
      %p281 = scmp.ne.s32.totalorder %s269, %s270
      %p282 = scmp.eq.s32.totalorder %s29, 1
      %p283 = por %p281, %p282
      %p285 = scmp.ne.s32.totalorder %s270, %s284
      %p286 = scmp.eq.s32.totalorder %s29, 0
      %p287 = por %p285, %p286
      %s289 = sadd.s32 %s288, 1
      %p292 = scmp.eq.s32.totalorder %s23, 1
      %p293 = scmp.ne.s32.totalorder %s288, %s290
      %p294 = scmp.eq.s32.totalorder %s23, 0
      %p295 = por %p293, %p294
      %p296 = scmp.ne.s32.totalorder %s288, %s290
      %p297 = scmp.eq.s32.totalorder %s28, 1
      %p298 = por %p296, %p297
      %p299 = scmp.ne.s32.totalorder %s290, %s291
      %p300 = scmp.eq.s32.totalorder %s28, 0
      %p301 = por %p299, %p300
      %p302 = scmp.ne.s32.totalorder %s290, %s291
      %p303 = scmp.eq.s32.totalorder %s29, 1
      %p304 = por %p302, %p303
      %p306 = scmp.ne.s32.totalorder %s291, %s305
      %p307 = scmp.eq.s32.totalorder %s29, 0
      %p308 = por %p306, %p307
      %s310 = sadd.s32 %s309, 1
      %p313 = scmp.eq.s32.totalorder %s23, 1
      %p314 = scmp.ne.s32.totalorder %s309, %s311
      %p315 = scmp.eq.s32.totalorder %s23, 0
      %p316 = por %p314, %p315
      %p317 = scmp.ne.s32.totalorder %s309, %s311
      %p318 = scmp.eq.s32.totalorder %s28, 1
      %p319 = por %p317, %p318
      %p320 = scmp.ne.s32.totalorder %s311, %s312
      %p321 = scmp.eq.s32.totalorder %s28, 0
      %p322 = por %p320, %p321
      %p323 = scmp.ne.s32.totalorder %s311, %s312
      %p324 = scmp.eq.s32.totalorder %s29, 1
      %p325 = por %p323, %p324
      %p327 = scmp.ne.s32.totalorder %s312, %s326
      %p328 = scmp.eq.s32.totalorder %s29, 0
      %p329 = por %p327, %p328
      %s331 = sadd.s32 %s330, 1
      %p334 = scmp.eq.s32.totalorder %s23, 1
      %p335 = scmp.ne.s32.totalorder %s330, %s332
      %p336 = scmp.eq.s32.totalorder %s23, 0
      %p337 = por %p335, %p336
      %p338 = scmp.ne.s32.totalorder %s330, %s332
      %p339 = scmp.eq.s32.totalorder %s28, 1
      %p340 = por %p338, %p339
      %p341 = scmp.ne.s32.totalorder %s332, %s333
      %p342 = scmp.eq.s32.totalorder %s28, 0
      %p343 = por %p341, %p342
      %p344 = scmp.ne.s32.totalorder %s332, %s333
      %p345 = scmp.eq.s32.totalorder %s29, 1
      %p346 = por %p344, %p345
      %p348 = scmp.ne.s32.totalorder %s333, %s347
      %p349 = scmp.eq.s32.totalorder %s29, 0
      %p350 = por %p348, %p349
      %s351 = ssub.s32 %s23, %s30
      %p352 = scmp.eq.s32.totalorder %s351, 0
      %s354 = sadd.s32 %s353, 1
      %s355 = scalar_select %p352, %s353, %s354
      %p358 = pneg %p352
      %p359 = scmp.eq.s32.totalorder %s23, 1
      %p360 = por %p358, %p359
      %p361 = scmp.ne.s32.totalorder %s353, %s356
      %p362 = scmp.eq.s32.totalorder %s23, 0
      %p363 = por %p361, %p362
      %p364 = scmp.ne.s32.totalorder %s353, %s356
      %p365 = scmp.eq.s32.totalorder %s28, 1
      %p366 = por %p364, %p365
      %p367 = scmp.ne.s32.totalorder %s356, %s357
      %p368 = scmp.eq.s32.totalorder %s28, 0
      %p369 = por %p367, %p368
      %p370 = scmp.ne.s32.totalorder %s356, %s357
      %p371 = scmp.eq.s32.totalorder %s29, 1
      %p372 = por %p370, %p371
      %p374 = scmp.ne.s32.totalorder %s357, %s373
      %p375 = scmp.eq.s32.totalorder %s29, 0
      %p376 = por %p374, %p375
      %p377 = scmp.le.s32.totalorder 1, %s23
      %p378 = scmp.lt.s32.totalorder %s23, 3
      %p379 = pnand %p377, %p378
      %p380 = pneg %p379
      // Predicated region
      $region9: #{_lambda_.1} parent=5 // pred_check
        _
      $region10: #{_lambda_.1} parent=5 // pred_check_branch
        %382 = sbr.rel (%p379) target = $region12
      $region11: #{_lambda_.1} parent=5 // pred_region
        %s383 = ssub.s32 %s23, 1
        // Predicated region
        $region13: #{_lambda_.1} parent=11 // pred_check
          %p384 = pneg %p70
        $region14: #{_lambda_.1} parent=11 // pred_check_branch
          %386 = sbr.rel (%p384) target = $region16
        $region15: #{_lambda_.1} parent=11 // pred_region
          _
        $region16: #{_lambda_.1} parent=11 // pred_fallthru
          _
        // Predicated region
        $region17: #{_lambda_.1} parent=11 // pred_check
          %p387 = pneg %p91
        $region18: #{_lambda_.1} parent=11 // pred_check_branch
          %389 = sbr.rel (%p387) target = $region20
        $region19: #{_lambda_.1} parent=11 // pred_region
          %s391 = ssub.s32 16, 16
          %392 = vsyncadd [#allocation5], %s391
          %s394 = sshll.u32 %s2, 4
          %s395 = int_to_ptr.vmem [resolvable:$true] %s394
          %397 = dma.vmem_to_smem %s395, 16, [#allocation4], [#allocation5]
        $region20: #{_lambda_.1} parent=11 // pred_fallthru
          _
        // Predicated region
        $region21: #{_lambda_.1} parent=11 // pred_check
          %p398 = pneg %p112
        $region22: #{_lambda_.1} parent=11 // pred_check_branch
          %400 = sbr.rel (%p398) target = $region24
        $region23: #{_lambda_.1} parent=11 // pred_region
          %s402 = ssub.s32 16, 16
          %403 = vsyncadd [#allocation7], %s402
          %s405 = sshll.u32 %s3, 4
          %s406 = int_to_ptr.vmem [resolvable:$true] %s405
          %408 = dma.vmem_to_smem %s406, 16, [#allocation6], [#allocation7]
        $region24: #{_lambda_.1} parent=11 // pred_fallthru
          _
        // Predicated region
        $region25: #{_lambda_.1} parent=11 // pred_check
          %p409 = pneg %p133
        $region26: #{_lambda_.1} parent=11 // pred_check_branch
          %411 = sbr.rel (%p409) target = $region28
        $region27: #{_lambda_.1} parent=11 // pred_region
          _
        $region28: #{_lambda_.1} parent=11 // pred_fallthru
          _
        // Predicated region
        $region29: #{_lambda_.1} parent=11 // pred_check
          %p412 = pneg %p154
        $region30: #{_lambda_.1} parent=11 // pred_check_branch
          %414 = sbr.rel (%p412) target = $region32
        $region31: #{_lambda_.1} parent=11 // pred_region
          _
        $region32: #{_lambda_.1} parent=11 // pred_fallthru
          _
        // Predicated region
        $region33: #{_lambda_.1} parent=11 // pred_check
          %p415 = pneg %p175
        $region34: #{_lambda_.1} parent=11 // pred_check_branch
          %417 = sbr.rel (%p415) target = $region36
        $region35: #{_lambda_.1} parent=11 // pred_region
          _
        $region36: #{_lambda_.1} parent=11 // pred_fallthru
          _
        // Predicated region
        $region37: #{_lambda_.1} parent=11 // pred_check
          %p418 = pneg %p196
        $region38: #{_lambda_.1} parent=11 // pred_check_branch
          %420 = sbr.rel (%p418) target = $region40
        $region39: #{_lambda_.1} parent=11 // pred_region
          _
        $region40: #{_lambda_.1} parent=11 // pred_fallthru
          _
        // Predicated region
        $region41: #{_lambda_.1} parent=11 // pred_check
          %p421 = pneg %p217
        $region42: #{_lambda_.1} parent=11 // pred_check_branch
          %423 = sbr.rel (%p421) target = $region44
        $region43: #{_lambda_.1} parent=11 // pred_region
          _
        $region44: #{_lambda_.1} parent=11 // pred_fallthru
          _
        // Predicated region
        $region45: #{_lambda_.1} parent=11 // pred_check
          %p424 = pneg %p238
        $region46: #{_lambda_.1} parent=11 // pred_check_branch
          %426 = sbr.rel (%p424) target = $region48
        $region47: #{_lambda_.1} parent=11 // pred_region
          _
        $region48: #{_lambda_.1} parent=11 // pred_fallthru
          _
        // Predicated region
        $region49: #{_lambda_.1} parent=11 // pred_check
          %p427 = pneg %p259
        $region50: #{_lambda_.1} parent=11 // pred_check_branch
          %429 = sbr.rel (%p427) target = $region52
        $region51: #{_lambda_.1} parent=11 // pred_region
          _
        $region52: #{_lambda_.1} parent=11 // pred_fallthru
          _
        // Predicated region
        $region53: #{_lambda_.1} parent=11 // pred_check
          %p430 = pneg %p280
        $region54: #{_lambda_.1} parent=11 // pred_check_branch
          %432 = sbr.rel (%p430) target = $region56
        $region55: #{_lambda_.1} parent=11 // pred_region
          _
        $region56: #{_lambda_.1} parent=11 // pred_fallthru
          _
        // Predicated region
        $region57: #{_lambda_.1} parent=11 // pred_check
          %p433 = pneg %p301
        $region58: #{_lambda_.1} parent=11 // pred_check_branch
          %435 = sbr.rel (%p433) target = $region60
        $region59: #{_lambda_.1} parent=11 // pred_region
          _
        $region60: #{_lambda_.1} parent=11 // pred_fallthru
          _
        // Predicated region
        $region61: #{_lambda_.1} parent=11 // pred_check
          %p436 = pneg %p322
        $region62: #{_lambda_.1} parent=11 // pred_check_branch
          %438 = sbr.rel (%p436) target = $region64
        $region63: #{_lambda_.1} parent=11 // pred_region
          _
        $region64: #{_lambda_.1} parent=11 // pred_fallthru
          _
        // Predicated region
        $region65: #{_lambda_.1} parent=11 // pred_check
          %p439 = pneg %p343
        $region66: #{_lambda_.1} parent=11 // pred_check_branch
          %441 = sbr.rel (%p439) target = $region68
        $region67: #{_lambda_.1} parent=11 // pred_region
          _
        $region68: #{_lambda_.1} parent=11 // pred_fallthru
          _
      $region12: #{_lambda_.1} parent=5 // pred_fallthru
        _
      %p442 = scmp.lt.s32.totalorder %s23, 2
      // Predicated region
      $region69: #{_lambda_.1} parent=5 // pred_check
        %p443 = pneg %p442
      $region70: #{_lambda_.1} parent=5 // pred_check_branch
        %445 = sbr.rel (%p443) target = $region72
      $region71: #{_lambda_.1} parent=5 // pred_region
        // Predicated region
        $region73: #{_lambda_.1} parent=71 // pred_check
          %p446 = pneg %p43
        $region74: #{_lambda_.1} parent=71 // pred_check_branch
          %448 = sbr.rel (%p446) target = $region76
        $region75: #{_lambda_.1} parent=71 // pred_region
          %p449 = scmp.lt.s32.totalorder %s23, 1
          %s450 = scalar_select %p449, %s23, 1
          %s451 = smul.addr %s450, 3
          %s452 = smul.addr %s451, 8
          %s453 = scalar_lea.vmem %s0, %s452
        $region76: #{_lambda_.1} parent=71 // pred_fallthru
          _
      $region72: #{_lambda_.1} parent=5 // pred_fallthru
        _
      %p454 = scmp.le.s32.totalorder 1, %s23
      %p455 = scmp.lt.s32.totalorder %s23, 3
      %p456 = pnand %p454, %p455
      %p457 = pneg %p456
      // Predicated region
      $region77: #{_lambda_.1} parent=5 // pred_check
        _
      $region78: #{_lambda_.1} parent=5 // pred_check_branch
        %459 = sbr.rel (%p456) target = $region80
      $region79: #{_lambda_.1} parent=5 // pred_region
        %s460 = ssub.s32 %s23, 1
        // Predicated region
        $region81: #{_lambda_.1} parent=79 // pred_check
          %p461 = pneg %p91
        $region82: #{_lambda_.1} parent=79 // pred_check_branch
          %463 = sbr.rel (%p461) target = $region84
        $region83: #{_lambda_.1} parent=79 // pred_region
          %464 = dma.done [#allocation5], 16
        $region84: #{_lambda_.1} parent=79 // pred_fallthru
          _
        // Predicated region
        $region85: #{_lambda_.1} parent=79 // pred_check
          %p465 = pneg %p112
        $region86: #{_lambda_.1} parent=79 // pred_check_branch
          %467 = sbr.rel (%p465) target = $region88
        $region87: #{_lambda_.1} parent=79 // pred_region
          %468 = dma.done [#allocation7], 16
        $region88: #{_lambda_.1} parent=79 // pred_fallthru
          _
        %469 = sfence
        %p470 = scmp.lt.s32.totalorder %s28, 1
        %s471 = scalar_select %p470, %s28, 1
        %s472 = smul.addr %s471, 3
        %s473 = smul.addr %s472, 8
        %s474 = scalar_lea.vmem %s0, %s473
        %p475 = pneg %p49
        %p476 = pneg %p46
        %p477 = pneg %p70
        %p478 = pneg %p67
        %p479 = pneg %p91
        %p480 = pneg %p88
        %p481 = pneg %p112
        %p482 = pneg %p109
        %p483 = pneg %p133
        %p484 = pneg %p130
        %p485 = pneg %p154
        %p486 = pneg %p151
        %p487 = pneg %p175
        %p488 = pneg %p172
        %p489 = pneg %p196
        %p490 = pneg %p193
        %p491 = pneg %p217
        %p492 = pneg %p214
        %p493 = pneg %p238
        %p494 = pneg %p235
        %p495 = pneg %p259
        %p496 = pneg %p256
        %p497 = pneg %p280
        %p498 = pneg %p277
        %p499 = pneg %p301
        %p500 = pneg %p298
        %p501 = pneg %p322
        %p502 = pneg %p319
        %p503 = pneg %p343
        %p504 = pneg %p340
        %p505 = pneg %p369
        %p506 = pneg %p366
        %p507 = scmp.lt.s32.totalorder %s28, 1
        %s508 = scalar_select %p507, %s28, 1
        %s509 = smul.addr %s508, 3
        %s510 = smul.addr %s509, 8
        %s511 = scalar_lea.vmem %s15, %s510
        %p512 = scmp.lt.s32.totalorder %s28, 1
        %s513 = scalar_select %p512, %s28, 1
        %s514 = smul.addr %s513, 3
        %s515 = smul.addr %s514, 8
        %s516 = scalar_lea.vmem %s0, %s515
        %p517 = scmp.lt.s32.totalorder %s28, 1
        %s518 = scalar_select %p517, %s28, 1
        %s519 = smul.addr %s518, 3
        %s520 = smul.addr %s519, 8
        %s521 = scalar_lea.vmem %s15, %s520
        %523 = vst [vmem:[#allocation2] sm:$0xff] 0.0
        %524 = vst [vmem:[#allocation2 + $0x8] sm:$0xff] 0.0
        %525 = vst [vmem:[#allocation2 + $0x10] sm:$0xff] 0.0
        %526 = vst [vmem:[#allocation2 + $0x18] sm:$0xff] 0.0
        %527 = vst [vmem:[#allocation2 + $0x20] sm:$0xff] 0.0
        %v528 = vld [vmem:[%s516] sm:$0xff]
        %v529 = vld [vmem:[%s516 + $0x8] sm:$0xff]
        %v530 = vld [vmem:[%s516 + $0x10] sm:$0xff]
        %531 = vst [vmem:[#allocation2 + $0x8] sm:$0xff] %v528
        %532 = vst [vmem:[#allocation2 + $0x10] sm:$0xff] %v529
        %533 = vst [vmem:[#allocation2 + $0x18] sm:$0xff] %v530
        %v534 = vld [vmem:[%s1] sm:$0x7]
        %s535 = sld [smem:[#allocation4 + %s28]]
        %v536 = vld [vmem:[#allocation2 + $0x8] sm:$0xff]
        %v537 = vld [vmem:[#allocation2 + $0x10] sm:$0xff]
        %v538 = vld [vmem:[#allocation2 + $0x18] sm:$0xff]
        %v539 = vld [vmem:[#allocation2] sm:$0xff]
        %v540 = vpack.c.bf16 %v539, %v539
        %v541 = vpack.c.bf16 %v536, %v536
        %v542 = vpack.c.bf16 %v537, %v537
        %v543 = vpack.c.bf16 %v538, %v538
        %v548 = vunpack.c.l.b16 %v540
        %v549 = vunpack.c.l.b16 %v541
        %v550 = vunpack.c.l.b16 %v542
        %v551 = vunpack.c.l.b16 %v543
        %v552 = vpack.c.b16 %v549, %v548
        %v553 = vpack.c.b16 %v551, %v550
        %554 = vrot.lane.b32.xlu0 %v552, 42
        %v555 = vpop.permute.xlu0 %554
        %556 = vrot.lane.b32.xlu0 %v553, 42
        %v557 = vpop.permute.xlu0 %556
        %v558 = vrot.slane %v555, 4
        %v559 = vrot.slane %v557, 4
        %vm560 = vcmask 1043456
        %v561 = vsel %vm560, %v558, %v559
        %vm562 = vcmask 343040
        %v563 = vsel %vm562, %v555, %v561
        %v564 = vsel %vm562, %v557, %v559
        %567 = vst [vmem:[#allocation3] sm:$0xff] %v563
        %568 = vst [vmem:[#allocation3 + $0x8] sm:$0xf] %v564
        %v569 = vld [vmem:[#allocation2] sm:$0xff]
        %v570 = vld [vmem:[#allocation2 + $0x8] sm:$0xff]
        %v571 = vld [vmem:[#allocation2 + $0x10] sm:$0xff]
        %v572 = vld [vmem:[#allocation2 + $0x18] sm:$0xff]
        %v573 = vpack.c.bf16 %v569, %v569
        %v574 = vpack.c.bf16 %v570, %v570
        %v575 = vpack.c.bf16 %v571, %v571
        %v576 = vpack.c.bf16 %v572, %v572
        %v581 = vunpack.c.l.b16 %v573
        %v582 = vunpack.c.l.b16 %v574
        %v583 = vunpack.c.l.b16 %v575
        %v584 = vunpack.c.l.b16 %v576
        %v585 = vpack.c.b16 %v582, %v581
        %v586 = vpack.c.b16 %v584, %v583
        %587 = vrot.lane.b32.xlu0 %v585, 41
        %v588 = vpop.permute.xlu0 %587
        %589 = vrot.lane.b32.xlu0 %v586, 41
        %v590 = vpop.permute.xlu0 %589
        %v591 = vrot.slane %v588, 4
        %v592 = vrot.slane %v590, 4
        %v593 = vsel %vm560, %v591, %v592
        %vm594 = vcmask 334848
        %v595 = vsel %vm594, %v588, %v593
        %v596 = vsel %vm594, %v590, %v592
        %599 = vst [vmem:[#allocation3 + $0xc] sm:$0xff] %v595
        %600 = vst [vmem:[#allocation3 + $0x14] sm:$0xf] %v596
        %v601 = vld [vmem:[#allocation2] sm:$0xff]
        %v602 = vld [vmem:[#allocation2 + $0x8] sm:$0xff]
        %v603 = vld [vmem:[#allocation2 + $0x10] sm:$0xff]
        %v604 = vld [vmem:[#allocation2 + $0x18] sm:$0xff]
        %v605 = vpack.c.bf16 %v601, %v601
        %v606 = vpack.c.bf16 %v602, %v602
        %v607 = vpack.c.bf16 %v603, %v603
        %v608 = vpack.c.bf16 %v604, %v604
        %v613 = vunpack.c.l.b16 %v605
        %v614 = vunpack.c.l.b16 %v606
        %v615 = vunpack.c.l.b16 %v607
        %v616 = vunpack.c.l.b16 %v608
        %v617 = vpack.c.b16 %v614, %v613
        %v618 = vpack.c.b16 %v616, %v615
        %619 = vrot.lane.b32.xlu0 %v617, 40
        %v620 = vpop.permute.xlu0 %619
        %621 = vrot.lane.b32.xlu0 %v618, 40
        %v622 = vpop.permute.xlu0 %621
        %v623 = vrot.slane %v620, 4
        %v624 = vrot.slane %v622, 4
        %v625 = vsel %vm560, %v623, %v624
        %vm626 = vcmask 326656
        %v627 = vsel %vm626, %v620, %v625
        %v628 = vsel %vm626, %v622, %v624
        %631 = vst [vmem:[#allocation3 + $0x18] sm:$0xff] %v627
        %632 = vst [vmem:[#allocation3 + $0x20] sm:$0xf] %v628
        %v633 = vld [vmem:[#allocation2] sm:$0xff]
        %v634 = vld [vmem:[#allocation2 + $0x8] sm:$0xff]
        %v635 = vld [vmem:[#allocation2 + $0x10] sm:$0xff]
        %v636 = vld [vmem:[#allocation2 + $0x18] sm:$0xff]
        %v637 = vpack.c.bf16 %v633, %v633
        %v638 = vpack.c.bf16 %v634, %v634
        %v639 = vpack.c.bf16 %v635, %v635
        %v640 = vpack.c.bf16 %v636, %v636
        %v645 = vunpack.c.l.b16 %v637
        %v646 = vunpack.c.l.b16 %v638
        %v647 = vunpack.c.l.b16 %v639
        %v648 = vunpack.c.l.b16 %v640
        %v649 = vpack.c.b16 %v646, %v645
        %v650 = vpack.c.b16 %v648, %v647
        %651 = vrot.lane.b32.xlu0 %v649, 39
        %v652 = vpop.permute.xlu0 %651
        %653 = vrot.lane.b32.xlu0 %v650, 39
        %v654 = vpop.permute.xlu0 %653
        %v655 = vrot.slane %v652, 4
        %v656 = vrot.slane %v654, 4
        %v657 = vsel %vm560, %v655, %v656
        %vm658 = vcmask 318464
        %v659 = vsel %vm658, %v652, %v657
        %v660 = vsel %vm658, %v654, %v656
        %663 = vst [vmem:[#allocation3 + $0x24] sm:$0xff] %v659
        %664 = vst [vmem:[#allocation3 + $0x2c] sm:$0xf] %v660
        %v665 = vld [vmem:[#allocation2] sm:$0xff]
        %v666 = vld [vmem:[#allocation2 + $0x8] sm:$0xff]
        %v667 = vld [vmem:[#allocation2 + $0x10] sm:$0xff]
        %v668 = vld [vmem:[#allocation2 + $0x18] sm:$0xff]
        %v669 = vpack.c.bf16 %v665, %v665
        %v670 = vpack.c.bf16 %v666, %v666
        %v671 = vpack.c.bf16 %v667, %v667
        %v672 = vpack.c.bf16 %v668, %v668
        %v677 = vunpack.c.l.b16 %v669
        %v678 = vunpack.c.l.b16 %v670
        %v679 = vunpack.c.l.b16 %v671
        %v680 = vunpack.c.l.b16 %v672
        %v681 = vpack.c.b16 %v678, %v677
        %v682 = vpack.c.b16 %v680, %v679
        %683 = vrot.lane.b32.xlu0 %v681, 38
        %v684 = vpop.permute.xlu0 %683
        %685 = vrot.lane.b32.xlu0 %v682, 38
        %v686 = vpop.permute.xlu0 %685
        %v687 = vrot.slane %v684, 4
        %v688 = vrot.slane %v686, 4
        %v689 = vsel %vm560, %v687, %v688
        %vm690 = vcmask 310272
        %v691 = vsel %vm690, %v684, %v689
        %v692 = vsel %vm690, %v686, %v688
        %695 = vst [vmem:[#allocation3 + $0x30] sm:$0xff] %v691
        %696 = vst [vmem:[#allocation3 + $0x38] sm:$0xf] %v692
        %v697 = vld [vmem:[#allocation2] sm:$0xff]
        %v698 = vld [vmem:[#allocation2 + $0x8] sm:$0xff]
        %v699 = vld [vmem:[#allocation2 + $0x10] sm:$0xff]
        %v700 = vld [vmem:[#allocation2 + $0x18] sm:$0xff]
        %v701 = vpack.c.bf16 %v697, %v697
        %v702 = vpack.c.bf16 %v698, %v698
        %v703 = vpack.c.bf16 %v699, %v699
        %v704 = vpack.c.bf16 %v700, %v700
        %v709 = vunpack.c.l.b16 %v701
        %v710 = vunpack.c.l.b16 %v702
        %v711 = vunpack.c.l.b16 %v703
        %v712 = vunpack.c.l.b16 %v704
        %v713 = vpack.c.b16 %v710, %v709
        %v714 = vpack.c.b16 %v712, %v711
        %715 = vrot.lane.b32.xlu0 %v713, 22
        %v716 = vpop.permute.xlu0 %715
        %717 = vrot.lane.b32.xlu0 %v714, 22
        %v718 = vpop.permute.xlu0 %717
        %v719 = vrot.slane %v716, 4
        %v720 = vrot.slane %v718, 4
        %v721 = vsel %vm560, %v719, %v720
        %vm722 = vcmask 179200
        %v723 = vsel %vm722, %v716, %v721
        %v724 = vsel %vm722, %v718, %v720
        %727 = vst [vmem:[#allocation3 + $0x3c] sm:$0xff] %v723
        %728 = vst [vmem:[#allocation3 + $0x44] sm:$0xf] %v724
        %v729 = vld [vmem:[#allocation2] sm:$0xff]
        %v730 = vld [vmem:[#allocation2 + $0x8] sm:$0xff]
        %v731 = vld [vmem:[#allocation2 + $0x10] sm:$0xff]
        %v732 = vld [vmem:[#allocation2 + $0x18] sm:$0xff]
        %v733 = vpack.c.bf16 %v729, %v729
        %v734 = vpack.c.bf16 %v730, %v730
        %v735 = vpack.c.bf16 %v731, %v731
        %v736 = vpack.c.bf16 %v732, %v732
        %v741 = vunpack.c.l.b16 %v733
        %v742 = vunpack.c.l.b16 %v734
        %v743 = vunpack.c.l.b16 %v735
        %v744 = vunpack.c.l.b16 %v736
        %v745 = vpack.c.b16 %v742, %v741
        %v746 = vpack.c.b16 %v744, %v743
        %747 = vrot.lane.b32.xlu0 %v745, 21
        %v748 = vpop.permute.xlu0 %747
        %749 = vrot.lane.b32.xlu0 %v746, 21
        %v750 = vpop.permute.xlu0 %749
        %v751 = vrot.slane %v748, 4
        %v752 = vrot.slane %v750, 4
        %v753 = vsel %vm560, %v751, %v752
        %vm754 = vcmask 171008
        %v755 = vsel %vm754, %v748, %v753
        %v756 = vsel %vm754, %v750, %v752
        %759 = vst [vmem:[#allocation3 + $0x48] sm:$0xff] %v755
        %760 = vst [vmem:[#allocation3 + $0x50] sm:$0xf] %v756
        %v761 = vld [vmem:[#allocation2] sm:$0xff]
        %v762 = vld [vmem:[#allocation2 + $0x8] sm:$0xff]
        %v763 = vld [vmem:[#allocation2 + $0x10] sm:$0xff]
        %v764 = vld [vmem:[#allocation2 + $0x18] sm:$0xff]
        %v765 = vpack.c.bf16 %v761, %v761
        %v766 = vpack.c.bf16 %v762, %v762
        %v767 = vpack.c.bf16 %v763, %v763
        %v768 = vpack.c.bf16 %v764, %v764
        %v773 = vunpack.c.l.b16 %v765
        %v774 = vunpack.c.l.b16 %v766
        %v775 = vunpack.c.l.b16 %v767
        %v776 = vunpack.c.l.b16 %v768
        %v777 = vpack.c.b16 %v774, %v773
        %v778 = vpack.c.b16 %v776, %v775
        %779 = vrot.lane.b32.xlu0 %v777, 20
        %v780 = vpop.permute.xlu0 %779
        %781 = vrot.lane.b32.xlu0 %v778, 20
        %v782 = vpop.permute.xlu0 %781
        %v783 = vrot.slane %v780, 4
        %v784 = vrot.slane %v782, 4
        %v785 = vsel %vm560, %v783, %v784
        %vm786 = vcmask 162816
        %v787 = vsel %vm786, %v780, %v785
        %v788 = vsel %vm786, %v782, %v784
        %791 = vst [vmem:[#allocation3 + $0x54] sm:$0xff] %v787
        %792 = vst [vmem:[#allocation3 + $0x5c] sm:$0xf] %v788
        %v793 = vld [vmem:[#allocation2] sm:$0xff]
        %v794 = vld [vmem:[#allocation2 + $0x8] sm:$0xff]
        %v795 = vld [vmem:[#allocation2 + $0x10] sm:$0xff]
        %v796 = vld [vmem:[#allocation2 + $0x18] sm:$0xff]
        %v797 = vpack.c.bf16 %v793, %v793
        %v798 = vpack.c.bf16 %v794, %v794
        %v799 = vpack.c.bf16 %v795, %v795
        %v800 = vpack.c.bf16 %v796, %v796
        %v805 = vunpack.c.l.b16 %v797
        %v806 = vunpack.c.l.b16 %v798
        %v807 = vunpack.c.l.b16 %v799
        %v808 = vunpack.c.l.b16 %v800
        %v809 = vpack.c.b16 %v806, %v805
        %v810 = vpack.c.b16 %v808, %v807
        %811 = vrot.lane.b32.xlu0 %v809, 19
        %v812 = vpop.permute.xlu0 %811
        %813 = vrot.lane.b32.xlu0 %v810, 19
        %v814 = vpop.permute.xlu0 %813
        %v815 = vrot.slane %v812, 4
        %v816 = vrot.slane %v814, 4
        %v817 = vsel %vm560, %v815, %v816
        %vm818 = vcmask 154624
        %v819 = vsel %vm818, %v812, %v817
        %v820 = vsel %vm818, %v814, %v816
        %823 = vst [vmem:[#allocation3 + $0x60] sm:$0xff] %v819
        %824 = vst [vmem:[#allocation3 + $0x68] sm:$0xf] %v820
        %v825 = vld [vmem:[#allocation2] sm:$0xff]
        %v826 = vld [vmem:[#allocation2 + $0x8] sm:$0xff]
        %v827 = vld [vmem:[#allocation2 + $0x10] sm:$0xff]
        %v828 = vld [vmem:[#allocation2 + $0x18] sm:$0xff]
        %v829 = vpack.c.bf16 %v825, %v825
        %v830 = vpack.c.bf16 %v826, %v826
        %v831 = vpack.c.bf16 %v827, %v827
        %v832 = vpack.c.bf16 %v828, %v828
        %v837 = vunpack.c.l.b16 %v829
        %v838 = vunpack.c.l.b16 %v830
        %v839 = vunpack.c.l.b16 %v831
        %v840 = vunpack.c.l.b16 %v832
        %v841 = vpack.c.b16 %v838, %v837
        %v842 = vpack.c.b16 %v840, %v839
        %843 = vrot.lane.b32.xlu0 %v841, 18
        %v844 = vpop.permute.xlu0 %843
        %845 = vrot.lane.b32.xlu0 %v842, 18
        %v846 = vpop.permute.xlu0 %845
        %v847 = vrot.slane %v844, 4
        %v848 = vrot.slane %v846, 4
        %v849 = vsel %vm560, %v847, %v848
        %vm850 = vcmask 146432
        %v851 = vsel %vm850, %v844, %v849
        %v852 = vsel %vm850, %v846, %v848
        %855 = vst [vmem:[#allocation3 + $0x6c] sm:$0xff] %v851
        %856 = vst [vmem:[#allocation3 + $0x74] sm:$0xf] %v852
        %v857 = vld [vmem:[#allocation2] sm:$0xff]
        %v858 = vld [vmem:[#allocation2 + $0x8] sm:$0xff]
        %v859 = vld [vmem:[#allocation2 + $0x10] sm:$0xff]
        %v860 = vld [vmem:[#allocation2 + $0x18] sm:$0xff]
        %v861 = vpack.c.bf16 %v857, %v857
        %v862 = vpack.c.bf16 %v858, %v858
        %v863 = vpack.c.bf16 %v859, %v859
        %v864 = vpack.c.bf16 %v860, %v860
        %v869 = vunpack.c.l.b16 %v861
        %v870 = vunpack.c.l.b16 %v862
        %v871 = vunpack.c.l.b16 %v863
        %v872 = vunpack.c.l.b16 %v864
        %v873 = vpack.c.b16 %v870, %v869
        %v874 = vpack.c.b16 %v872, %v871
        %875 = vrot.lane.b32.xlu0 %v873, 2
        %v876 = vpop.permute.xlu0 %875
        %877 = vrot.lane.b32.xlu0 %v874, 2
        %v878 = vpop.permute.xlu0 %877
        %v879 = vrot.slane %v876, 4
        %v880 = vrot.slane %v878, 4
        %v881 = vsel %vm560, %v879, %v880
        %vm882 = vcmask 15360
        %v883 = vsel %vm882, %v876, %v881
        %v884 = vsel %vm882, %v878, %v880
        %887 = vst [vmem:[#allocation3 + $0x78] sm:$0xff] %v883
        %888 = vst [vmem:[#allocation3 + $0x80] sm:$0xf] %v884
        %v889 = vld [vmem:[#allocation2] sm:$0xff]
        %v890 = vld [vmem:[#allocation2 + $0x8] sm:$0xff]
        %v891 = vld [vmem:[#allocation2 + $0x10] sm:$0xff]
        %v892 = vld [vmem:[#allocation2 + $0x18] sm:$0xff]
        %v893 = vpack.c.bf16 %v889, %v889
        %v894 = vpack.c.bf16 %v890, %v890
        %v895 = vpack.c.bf16 %v891, %v891
        %v896 = vpack.c.bf16 %v892, %v892
        %v901 = vunpack.c.l.b16 %v893
        %v902 = vunpack.c.l.b16 %v894
        %v903 = vunpack.c.l.b16 %v895
        %v904 = vunpack.c.l.b16 %v896
        %v905 = vpack.c.b16 %v902, %v901
        %v906 = vpack.c.b16 %v904, %v903
        %907 = vrot.lane.b32.xlu0 %v905, 1
        %v908 = vpop.permute.xlu0 %907
        %909 = vrot.lane.b32.xlu0 %v906, 1
        %v910 = vpop.permute.xlu0 %909
        %v911 = vrot.slane %v908, 4
        %v912 = vrot.slane %v910, 4
        %v913 = vsel %vm560, %v911, %v912
        %vm914 = vcmask 7168
        %v915 = vsel %vm914, %v908, %v913
        %v916 = vsel %vm914, %v910, %v912
        %919 = vst [vmem:[#allocation3 + $0x84] sm:$0xff] %v915
        %920 = vst [vmem:[#allocation3 + $0x8c] sm:$0xf] %v916
        %v921 = vld [vmem:[#allocation2 + $0x8] sm:$0xff]
        %v922 = vld [vmem:[#allocation2 + $0x10] sm:$0xff]
        %v923 = vld [vmem:[#allocation2 + $0x18] sm:$0xff]
        %v924 = vpack.c.bf16 %v921, %v921
        %v925 = vpack.c.bf16 %v922, %v922
        %v926 = vpack.c.bf16 %v923, %v923
        %v930 = vunpack.c.l.b16 %v924
        %v931 = vunpack.c.l.b16 %v925
        %v932 = vunpack.c.l.b16 %v926
        %v933 = vpack.c.b16 %v931, %v930
        %v934 = vpack.c.b16 %v932, %v932
        %937 = vst [vmem:[#allocation3 + $0x90] sm:$0xff] %v933
        %938 = vst [vmem:[#allocation3 + $0x98] sm:$0xf] %v934
        %v939 = vld [vmem:[#allocation2 + $0x8] sm:$0xff]
        %v940 = vld [vmem:[#allocation2 + $0x10] sm:$0xff]
        %v941 = vld [vmem:[#allocation2 + $0x18] sm:$0xff]
        %v942 = vld [vmem:[#allocation2 + $0x20] sm:$0xff]
        %v943 = vpack.c.bf16 %v939, %v939
        %v944 = vpack.c.bf16 %v940, %v940
        %v945 = vpack.c.bf16 %v941, %v941
        %v946 = vpack.c.bf16 %v942, %v942
        %v951 = vunpack.c.l.b16 %v943
        %v952 = vunpack.c.l.b16 %v944
        %v953 = vunpack.c.l.b16 %v945
        %v954 = vunpack.c.l.b16 %v946
        %v955 = vpack.c.b16 %v952, %v951
        %v956 = vpack.c.b16 %v954, %v953
        %957 = vrot.lane.b32.xlu0 %v955, 127
        %v958 = vpop.permute.xlu0 %957
        %959 = vrot.lane.b32.xlu0 %v956, 127
        %v960 = vpop.permute.xlu0 %959
        %v961 = vrot.slane %v958, 4
        %v962 = vrot.slane %v960, 4
        %v963 = vsel %vm560, %v961, %v962
        %vm964 = vcmask 1039360
        %v965 = vsel %vm964, %v958, %v963
        %v966 = vsel %vm964, %v960, %v962
        %969 = vst [vmem:[#allocation3 + $0x9c] sm:$0xff] %v965
        %970 = vst [vmem:[#allocation3 + $0xa4] sm:$0xf] %v966
        %v971 = vld [vmem:[#allocation2 + $0x8] sm:$0xff]
        %v972 = vld [vmem:[#allocation2 + $0x10] sm:$0xff]
        %v973 = vld [vmem:[#allocation2 + $0x18] sm:$0xff]
        %v974 = vld [vmem:[#allocation2 + $0x20] sm:$0xff]
        %v975 = vpack.c.bf16 %v971, %v971
        %v976 = vpack.c.bf16 %v972, %v972
        %v977 = vpack.c.bf16 %v973, %v973
        %v978 = vpack.c.bf16 %v974, %v974
        %v983 = vunpack.c.l.b16 %v975
        %v984 = vunpack.c.l.b16 %v976
        %v985 = vunpack.c.l.b16 %v977
        %v986 = vunpack.c.l.b16 %v978
        %v987 = vpack.c.b16 %v984, %v983
        %v988 = vpack.c.b16 %v986, %v985
        %989 = vrot.lane.b32.xlu0 %v987, 126
        %v990 = vpop.permute.xlu0 %989
        %991 = vrot.lane.b32.xlu0 %v988, 126
        %v992 = vpop.permute.xlu0 %991
        %v993 = vrot.slane %v990, 4
        %v994 = vrot.slane %v992, 4
        %v995 = vsel %vm560, %v993, %v994
        %vm996 = vcmask 1031168
        %v997 = vsel %vm996, %v990, %v995
        %v998 = vsel %vm996, %v992, %v994
        %1001 = vst [vmem:[#allocation3 + $0xa8] sm:$0xff] %v997
        %1002 = vst [vmem:[#allocation3 + $0xb0] sm:$0xf] %v998
        %v1003 = vld [vmem:[#allocation2 + $0x8] sm:$0xff]
        %v1004 = vld [vmem:[#allocation2 + $0x10] sm:$0xff]
        %v1005 = vld [vmem:[#allocation2 + $0x18] sm:$0xff]
        %v1006 = vld [vmem:[#allocation2 + $0x20] sm:$0xff]
        %v1007 = vpack.c.bf16 %v1003, %v1003
        %v1008 = vpack.c.bf16 %v1004, %v1004
        %v1009 = vpack.c.bf16 %v1005, %v1005
        %v1010 = vpack.c.bf16 %v1006, %v1006
        %v1015 = vunpack.c.l.b16 %v1007
        %v1016 = vunpack.c.l.b16 %v1008
        %v1017 = vunpack.c.l.b16 %v1009
        %v1018 = vunpack.c.l.b16 %v1010
        %v1019 = vpack.c.b16 %v1016, %v1015
        %v1020 = vpack.c.b16 %v1018, %v1017
        %1021 = vrot.lane.b32.xlu0 %v1019, 110
        %v1022 = vpop.permute.xlu0 %1021
        %1023 = vrot.lane.b32.xlu0 %v1020, 110
        %v1024 = vpop.permute.xlu0 %1023
        %v1025 = vrot.slane %v1022, 4
        %v1026 = vrot.slane %v1024, 4
        %v1027 = vsel %vm560, %v1025, %v1026
        %vm1028 = vcmask 900096
        %v1029 = vsel %vm1028, %v1022, %v1027
        %v1030 = vsel %vm1028, %v1024, %v1026
        %1033 = vst [vmem:[#allocation3 + $0xb4] sm:$0xff] %v1029
        %1034 = vst [vmem:[#allocation3 + $0xbc] sm:$0xf] %v1030
        %v1035 = vld [vmem:[#allocation2 + $0x8] sm:$0xff]
        %v1036 = vld [vmem:[#allocation2 + $0x10] sm:$0xff]
        %v1037 = vld [vmem:[#allocation2 + $0x18] sm:$0xff]
        %v1038 = vld [vmem:[#allocation2 + $0x20] sm:$0xff]
        %v1039 = vpack.c.bf16 %v1035, %v1035
        %v1040 = vpack.c.bf16 %v1036, %v1036
        %v1041 = vpack.c.bf16 %v1037, %v1037
        %v1042 = vpack.c.bf16 %v1038, %v1038
        %v1047 = vunpack.c.l.b16 %v1039
        %v1048 = vunpack.c.l.b16 %v1040
        %v1049 = vunpack.c.l.b16 %v1041
        %v1050 = vunpack.c.l.b16 %v1042
        %v1051 = vpack.c.b16 %v1048, %v1047
        %v1052 = vpack.c.b16 %v1050, %v1049
        %1053 = vrot.lane.b32.xlu0 %v1051, 109
        %v1054 = vpop.permute.xlu0 %1053
        %1055 = vrot.lane.b32.xlu0 %v1052, 109
        %v1056 = vpop.permute.xlu0 %1055
        %v1057 = vrot.slane %v1054, 4
        %v1058 = vrot.slane %v1056, 4
        %v1059 = vsel %vm560, %v1057, %v1058
        %vm1060 = vcmask 891904
        %v1061 = vsel %vm1060, %v1054, %v1059
        %v1062 = vsel %vm1060, %v1056, %v1058
        %1065 = vst [vmem:[#allocation3 + $0xc0] sm:$0xff] %v1061
        %1066 = vst [vmem:[#allocation3 + $0xc8] sm:$0xf] %v1062
        %v1067 = vld [vmem:[#allocation2 + $0x8] sm:$0xff]
        %v1068 = vld [vmem:[#allocation2 + $0x10] sm:$0xff]
        %v1069 = vld [vmem:[#allocation2 + $0x18] sm:$0xff]
        %v1070 = vld [vmem:[#allocation2 + $0x20] sm:$0xff]
        %v1071 = vpack.c.bf16 %v1067, %v1067
        %v1072 = vpack.c.bf16 %v1068, %v1068
        %v1073 = vpack.c.bf16 %v1069, %v1069
        %v1074 = vpack.c.bf16 %v1070, %v1070
        %v1079 = vunpack.c.l.b16 %v1071
        %v1080 = vunpack.c.l.b16 %v1072
        %v1081 = vunpack.c.l.b16 %v1073
        %v1082 = vunpack.c.l.b16 %v1074
        %v1083 = vpack.c.b16 %v1080, %v1079
        %v1084 = vpack.c.b16 %v1082, %v1081
        %1085 = vrot.lane.b32.xlu0 %v1083, 108
        %v1086 = vpop.permute.xlu0 %1085
        %1087 = vrot.lane.b32.xlu0 %v1084, 108
        %v1088 = vpop.permute.xlu0 %1087
        %v1089 = vrot.slane %v1086, 4
        %v1090 = vrot.slane %v1088, 4
        %v1091 = vsel %vm560, %v1089, %v1090
        %vm1092 = vcmask 883712
        %v1093 = vsel %vm1092, %v1086, %v1091
        %v1094 = vsel %vm1092, %v1088, %v1090
        %1097 = vst [vmem:[#allocation3 + $0xcc] sm:$0xff] %v1093
        %1098 = vst [vmem:[#allocation3 + $0xd4] sm:$0xf] %v1094
        %v1099 = vld [vmem:[#allocation2 + $0x8] sm:$0xff]
        %v1100 = vld [vmem:[#allocation2 + $0x10] sm:$0xff]
        %v1101 = vld [vmem:[#allocation2 + $0x18] sm:$0xff]
        %v1102 = vld [vmem:[#allocation2 + $0x20] sm:$0xff]
        %v1103 = vpack.c.bf16 %v1099, %v1099
        %v1104 = vpack.c.bf16 %v1100, %v1100
        %v1105 = vpack.c.bf16 %v1101, %v1101
        %v1106 = vpack.c.bf16 %v1102, %v1102
        %v1111 = vunpack.c.l.b16 %v1103
        %v1112 = vunpack.c.l.b16 %v1104
        %v1113 = vunpack.c.l.b16 %v1105
        %v1114 = vunpack.c.l.b16 %v1106
        %v1115 = vpack.c.b16 %v1112, %v1111
        %v1116 = vpack.c.b16 %v1114, %v1113
        %1117 = vrot.lane.b32.xlu0 %v1115, 107
        %v1118 = vpop.permute.xlu0 %1117
        %1119 = vrot.lane.b32.xlu0 %v1116, 107
        %v1120 = vpop.permute.xlu0 %1119
        %v1121 = vrot.slane %v1118, 4
        %v1122 = vrot.slane %v1120, 4
        %v1123 = vsel %vm560, %v1121, %v1122
        %vm1124 = vcmask 875520
        %v1125 = vsel %vm1124, %v1118, %v1123
        %v1126 = vsel %vm1124, %v1120, %v1122
        %1129 = vst [vmem:[#allocation3 + $0xd8] sm:$0xff] %v1125
        %1130 = vst [vmem:[#allocation3 + $0xe0] sm:$0xf] %v1126
        %v1131 = vld [vmem:[#allocation2 + $0x8] sm:$0xff]
        %v1132 = vld [vmem:[#allocation2 + $0x10] sm:$0xff]
        %v1133 = vld [vmem:[#allocation2 + $0x18] sm:$0xff]
        %v1134 = vld [vmem:[#allocation2 + $0x20] sm:$0xff]
        %v1135 = vpack.c.bf16 %v1131, %v1131
        %v1136 = vpack.c.bf16 %v1132, %v1132
        %v1137 = vpack.c.bf16 %v1133, %v1133
        %v1138 = vpack.c.bf16 %v1134, %v1134
        %v1143 = vunpack.c.l.b16 %v1135
        %v1144 = vunpack.c.l.b16 %v1136
        %v1145 = vunpack.c.l.b16 %v1137
        %v1146 = vunpack.c.l.b16 %v1138
        %v1147 = vpack.c.b16 %v1144, %v1143
        %v1148 = vpack.c.b16 %v1146, %v1145
        %1149 = vrot.lane.b32.xlu0 %v1147, 106
        %v1150 = vpop.permute.xlu0 %1149
        %1151 = vrot.lane.b32.xlu0 %v1148, 106
        %v1152 = vpop.permute.xlu0 %1151
        %v1153 = vrot.slane %v1150, 4
        %v1154 = vrot.slane %v1152, 4
        %v1155 = vsel %vm560, %v1153, %v1154
        %vm1156 = vcmask 867328
        %v1157 = vsel %vm1156, %v1150, %v1155
        %v1158 = vsel %vm1156, %v1152, %v1154
        %1161 = vst [vmem:[#allocation3 + $0xe4] sm:$0xff] %v1157
        %1162 = vst [vmem:[#allocation3 + $0xec] sm:$0xf] %v1158
        %v1163 = vld [vmem:[#allocation2 + $0x8] sm:$0xff]
        %v1164 = vld [vmem:[#allocation2 + $0x10] sm:$0xff]
        %v1165 = vld [vmem:[#allocation2 + $0x18] sm:$0xff]
        %v1166 = vld [vmem:[#allocation2 + $0x20] sm:$0xff]
        %v1167 = vpack.c.bf16 %v1163, %v1163
        %v1168 = vpack.c.bf16 %v1164, %v1164
        %v1169 = vpack.c.bf16 %v1165, %v1165
        %v1170 = vpack.c.bf16 %v1166, %v1166
        %v1175 = vunpack.c.l.b16 %v1167
        %v1176 = vunpack.c.l.b16 %v1168
        %v1177 = vunpack.c.l.b16 %v1169
        %v1178 = vunpack.c.l.b16 %v1170
        %v1179 = vpack.c.b16 %v1176, %v1175
        %v1180 = vpack.c.b16 %v1178, %v1177
        %1181 = vrot.lane.b32.xlu0 %v1179, 90
        %v1182 = vpop.permute.xlu0 %1181
        %1183 = vrot.lane.b32.xlu0 %v1180, 90
        %v1184 = vpop.permute.xlu0 %1183
        %v1185 = vrot.slane %v1182, 4
        %v1186 = vrot.slane %v1184, 4
        %v1187 = vsel %vm560, %v1185, %v1186
        %vm1188 = vcmask 736256
        %v1189 = vsel %vm1188, %v1182, %v1187
        %v1190 = vsel %vm1188, %v1184, %v1186
        %1193 = vst [vmem:[#allocation3 + $0xf0] sm:$0xff] %v1189
        %1194 = vst [vmem:[#allocation3 + $0xf8] sm:$0xf] %v1190
        %v1195 = vld [vmem:[#allocation2 + $0x8] sm:$0xff]
        %v1196 = vld [vmem:[#allocation2 + $0x10] sm:$0xff]
        %v1197 = vld [vmem:[#allocation2 + $0x18] sm:$0xff]
        %v1198 = vld [vmem:[#allocation2 + $0x20] sm:$0xff]
        %v1199 = vpack.c.bf16 %v1195, %v1195
        %v1200 = vpack.c.bf16 %v1196, %v1196
        %v1201 = vpack.c.bf16 %v1197, %v1197
        %v1202 = vpack.c.bf16 %v1198, %v1198
        %v1207 = vunpack.c.l.b16 %v1199
        %v1208 = vunpack.c.l.b16 %v1200
        %v1209 = vunpack.c.l.b16 %v1201
        %v1210 = vunpack.c.l.b16 %v1202
        %v1211 = vpack.c.b16 %v1208, %v1207
        %v1212 = vpack.c.b16 %v1210, %v1209
        %1213 = vrot.lane.b32.xlu0 %v1211, 89
        %v1214 = vpop.permute.xlu0 %1213
        %1215 = vrot.lane.b32.xlu0 %v1212, 89
        %v1216 = vpop.permute.xlu0 %1215
        %v1217 = vrot.slane %v1214, 4
        %v1218 = vrot.slane %v1216, 4
        %v1219 = vsel %vm560, %v1217, %v1218
        %vm1220 = vcmask 728064
        %v1221 = vsel %vm1220, %v1214, %v1219
        %v1222 = vsel %vm1220, %v1216, %v1218
        %1225 = vst [vmem:[#allocation3 + $0xfc] sm:$0xff] %v1221
        %1226 = vst [vmem:[#allocation3 + $0x104] sm:$0xf] %v1222
        %v1227 = vld [vmem:[#allocation2 + $0x8] sm:$0xff]
        %v1228 = vld [vmem:[#allocation2 + $0x10] sm:$0xff]
        %v1229 = vld [vmem:[#allocation2 + $0x18] sm:$0xff]
        %v1230 = vld [vmem:[#allocation2 + $0x20] sm:$0xff]
        %v1231 = vpack.c.bf16 %v1227, %v1227
        %v1232 = vpack.c.bf16 %v1228, %v1228
        %v1233 = vpack.c.bf16 %v1229, %v1229
        %v1234 = vpack.c.bf16 %v1230, %v1230
        %v1239 = vunpack.c.l.b16 %v1231
        %v1240 = vunpack.c.l.b16 %v1232
        %v1241 = vunpack.c.l.b16 %v1233
        %v1242 = vunpack.c.l.b16 %v1234
        %v1243 = vpack.c.b16 %v1240, %v1239
        %v1244 = vpack.c.b16 %v1242, %v1241
        %1245 = vrot.lane.b32.xlu0 %v1243, 88
        %v1246 = vpop.permute.xlu0 %1245
        %1247 = vrot.lane.b32.xlu0 %v1244, 88
        %v1248 = vpop.permute.xlu0 %1247
        %v1249 = vrot.slane %v1246, 4
        %v1250 = vrot.slane %v1248, 4
        %v1251 = vsel %vm560, %v1249, %v1250
        %vm1252 = vcmask 719872
        %v1253 = vsel %vm1252, %v1246, %v1251
        %v1254 = vsel %vm1252, %v1248, %v1250
        %1257 = vst [vmem:[#allocation3 + $0x108] sm:$0xff] %v1253
        %1258 = vst [vmem:[#allocation3 + $0x110] sm:$0xf] %v1254
        %v1259 = vld [vmem:[#allocation2 + $0x8] sm:$0xff]
        %v1260 = vld [vmem:[#allocation2 + $0x10] sm:$0xff]
        %v1261 = vld [vmem:[#allocation2 + $0x18] sm:$0xff]
        %v1262 = vld [vmem:[#allocation2 + $0x20] sm:$0xff]
        %v1263 = vpack.c.bf16 %v1259, %v1259
        %v1264 = vpack.c.bf16 %v1260, %v1260
        %v1265 = vpack.c.bf16 %v1261, %v1261
        %v1266 = vpack.c.bf16 %v1262, %v1262
        %v1271 = vunpack.c.l.b16 %v1263
        %v1272 = vunpack.c.l.b16 %v1264
        %v1273 = vunpack.c.l.b16 %v1265
        %v1274 = vunpack.c.l.b16 %v1266
        %v1275 = vpack.c.b16 %v1272, %v1271
        %v1276 = vpack.c.b16 %v1274, %v1273
        %1277 = vrot.lane.b32.xlu0 %v1275, 87
        %v1278 = vpop.permute.xlu0 %1277
        %1279 = vrot.lane.b32.xlu0 %v1276, 87
        %v1280 = vpop.permute.xlu0 %1279
        %v1281 = vrot.slane %v1278, 4
        %v1282 = vrot.slane %v1280, 4
        %v1283 = vsel %vm560, %v1281, %v1282
        %vm1284 = vcmask 711680
        %v1285 = vsel %vm1284, %v1278, %v1283
        %v1286 = vsel %vm1284, %v1280, %v1282
        %1289 = vst [vmem:[#allocation3 + $0x114] sm:$0xff] %v1285
        %1290 = vst [vmem:[#allocation3 + $0x11c] sm:$0xf] %v1286
        %v1291 = vld [vmem:[#allocation2 + $0x8] sm:$0xff]
        %v1292 = vld [vmem:[#allocation2 + $0x10] sm:$0xff]
        %v1293 = vld [vmem:[#allocation2 + $0x18] sm:$0xff]
        %v1294 = vld [vmem:[#allocation2 + $0x20] sm:$0xff]
        %v1295 = vpack.c.bf16 %v1291, %v1291
        %v1296 = vpack.c.bf16 %v1292, %v1292
        %v1297 = vpack.c.bf16 %v1293, %v1293
        %v1298 = vpack.c.bf16 %v1294, %v1294
        %v1303 = vunpack.c.l.b16 %v1295
        %v1304 = vunpack.c.l.b16 %v1296
        %v1305 = vunpack.c.l.b16 %v1297
        %v1306 = vunpack.c.l.b16 %v1298
        %v1307 = vpack.c.b16 %v1304, %v1303
        %v1308 = vpack.c.b16 %v1306, %v1305
        %1309 = vrot.lane.b32.xlu0 %v1307, 86
        %v1310 = vpop.permute.xlu0 %1309
        %1311 = vrot.lane.b32.xlu0 %v1308, 86
        %v1312 = vpop.permute.xlu0 %1311
        %v1313 = vrot.slane %v1310, 4
        %v1314 = vrot.slane %v1312, 4
        %v1315 = vsel %vm560, %v1313, %v1314
        %vm1316 = vcmask 703488
        %v1317 = vsel %vm1316, %v1310, %v1315
        %v1318 = vsel %vm1316, %v1312, %v1314
        %1321 = vst [vmem:[#allocation3 + $0x120] sm:$0xff] %v1317
        %1322 = vst [vmem:[#allocation3 + $0x128] sm:$0xf] %v1318
        %v1323 = vld [vmem:[%s4] sm:$0xff]
        %v1324 = vld [vmem:[#allocation3] sm:$0xff]
        %v1325 = vld [vmem:[#allocation3 + $0x8] sm:$0xf]
        %v1326 = vld [vmem:[#allocation3 + $0xc] sm:$0xff]
        %v1327 = vld [vmem:[#allocation3 + $0x14] sm:$0xf]
        %v1328 = vld [vmem:[#allocation3 + $0x18] sm:$0xff]
        %v1329 = vld [vmem:[#allocation3 + $0x20] sm:$0xf]
        %v1330 = vld [vmem:[#allocation3 + $0x24] sm:$0xff]
        %v1331 = vld [vmem:[#allocation3 + $0x2c] sm:$0xf]
        %v1332 = vld [vmem:[#allocation3 + $0x30] sm:$0xff]
        %v1333 = vld [vmem:[#allocation3 + $0x38] sm:$0xf]
        %v1334 = vld [vmem:[#allocation3 + $0x3c] sm:$0xff]
        %v1335 = vld [vmem:[#allocation3 + $0x44] sm:$0xf]
        %v1336 = vld [vmem:[#allocation3 + $0x48] sm:$0xff]
        %v1337 = vld [vmem:[#allocation3 + $0x50] sm:$0xf]
        %v1338 = vld [vmem:[#allocation3 + $0x54] sm:$0xff]
        %v1339 = vld [vmem:[#allocation3 + $0x5c] sm:$0xf]
        %v1340 = vld [vmem:[#allocation3 + $0x60] sm:$0xff]
        %v1341 = vld [vmem:[#allocation3 + $0x68] sm:$0xf]
        %v1342 = vld [vmem:[#allocation3 + $0x6c] sm:$0xff]
        %v1343 = vld [vmem:[#allocation3 + $0x74] sm:$0xf]
        %v1344 = vld [vmem:[#allocation3 + $0x78] sm:$0xff]
        %v1345 = vld [vmem:[#allocation3 + $0x80] sm:$0xf]
        %v1346 = vld [vmem:[#allocation3 + $0x84] sm:$0xff]
        %v1347 = vld [vmem:[#allocation3 + $0x8c] sm:$0xf]
        %v1348 = vld [vmem:[#allocation3 + $0x90] sm:$0xff]
        %v1349 = vld [vmem:[#allocation3 + $0x98] sm:$0xf]
        %v1350 = vld [vmem:[#allocation3 + $0x9c] sm:$0xff]
        %v1351 = vld [vmem:[#allocation3 + $0xa4] sm:$0xf]
        %v1352 = vld [vmem:[#allocation3 + $0xa8] sm:$0xff]
        %v1353 = vld [vmem:[#allocation3 + $0xb0] sm:$0xf]
        %v1354 = vld [vmem:[#allocation3 + $0xb4] sm:$0xff]
        %v1355 = vld [vmem:[#allocation3 + $0xbc] sm:$0xf]
        %v1356 = vld [vmem:[#allocation3 + $0xc0] sm:$0xff]
        %v1357 = vld [vmem:[#allocation3 + $0xc8] sm:$0xf]
        %v1358 = vld [vmem:[#allocation3 + $0xcc] sm:$0xff]
        %v1359 = vld [vmem:[#allocation3 + $0xd4] sm:$0xf]
        %v1360 = vld [vmem:[#allocation3 + $0xd8] sm:$0xff]
        %v1361 = vld [vmem:[#allocation3 + $0xe0] sm:$0xf]
        %v1362 = vld [vmem:[#allocation3 + $0xe4] sm:$0xff]
        %v1363 = vld [vmem:[#allocation3 + $0xec] sm:$0xf]
        %v1364 = vld [vmem:[#allocation3 + $0xf0] sm:$0xff]
        %v1365 = vld [vmem:[#allocation3 + $0xf8] sm:$0xf]
        %v1366 = vld [vmem:[#allocation3 + $0xfc] sm:$0xff]
        %v1367 = vld [vmem:[#allocation3 + $0x104] sm:$0xf]
        %v1368 = vld [vmem:[#allocation3 + $0x108] sm:$0xff]
        %v1369 = vld [vmem:[#allocation3 + $0x110] sm:$0xf]
        %v1370 = vld [vmem:[#allocation3 + $0x114] sm:$0xff]
        %v1371 = vld [vmem:[#allocation3 + $0x11c] sm:$0xf]
        %v1372 = vld [vmem:[#allocation3 + $0x120] sm:$0xff]
        %v1373 = vld [vmem:[#allocation3 + $0x128] sm:$0xf]
        %v1375 = vunpack.c.l.b16 %v1323
        %v1376 = vunpack.c.h.b16 %v1323
        %v1377 = vpack.c.b16 %v1375, %v1375
        %v1378 = vpack.c.b16 %v1376, %v1376
        %v1430 = vunpack.c.l.b16 %v1324
        %v1431 = vunpack.c.h.b16 %v1324
        %v1432 = vunpack.c.l.b16 %v1325
        %v1433 = vunpack.c.l.b16 %v1326
        %v1434 = vunpack.c.h.b16 %v1326
        %v1435 = vunpack.c.l.b16 %v1327
        %v1436 = vunpack.c.l.b16 %v1328
        %v1437 = vunpack.c.h.b16 %v1328
        %v1438 = vunpack.c.l.b16 %v1329
        %v1439 = vunpack.c.l.b16 %v1330
        %v1440 = vunpack.c.h.b16 %v1330
        %v1441 = vunpack.c.l.b16 %v1331
        %v1442 = vunpack.c.l.b16 %v1332
        %v1443 = vunpack.c.h.b16 %v1332
        %v1444 = vunpack.c.l.b16 %v1333
        %v1445 = vunpack.c.l.b16 %v1334
        %v1446 = vunpack.c.h.b16 %v1334
        %v1447 = vunpack.c.l.b16 %v1335
        %v1448 = vunpack.c.l.b16 %v1336
        %v1449 = vunpack.c.h.b16 %v1336
        %v1450 = vunpack.c.l.b16 %v1337
        %v1451 = vunpack.c.l.b16 %v1338
        %v1452 = vunpack.c.h.b16 %v1338
        %v1453 = vunpack.c.l.b16 %v1339
        %v1454 = vunpack.c.l.b16 %v1340
        %v1455 = vunpack.c.h.b16 %v1340
        %v1456 = vunpack.c.l.b16 %v1341
        %v1457 = vunpack.c.l.b16 %v1342
        %v1458 = vunpack.c.h.b16 %v1342
        %v1459 = vunpack.c.l.b16 %v1343
        %v1460 = vunpack.c.l.b16 %v1344
        %v1461 = vunpack.c.h.b16 %v1344
        %v1462 = vunpack.c.l.b16 %v1345
        %v1463 = vunpack.c.l.b16 %v1346
        %v1464 = vunpack.c.h.b16 %v1346
        %v1465 = vunpack.c.l.b16 %v1347
        %v1466 = vunpack.c.l.b16 %v1348
        %v1467 = vunpack.c.h.b16 %v1348
        %v1468 = vunpack.c.l.b16 %v1349
        %v1469 = vunpack.c.l.b16 %v1350
        %v1470 = vunpack.c.h.b16 %v1350
        %v1471 = vunpack.c.l.b16 %v1351
        %v1472 = vunpack.c.l.b16 %v1352
        %v1473 = vunpack.c.h.b16 %v1352
        %v1474 = vunpack.c.l.b16 %v1353
        %v1475 = vunpack.c.l.b16 %v1354
        %v1476 = vunpack.c.h.b16 %v1354
        %v1477 = vunpack.c.l.b16 %v1355
        %v1478 = vunpack.c.l.b16 %v1356
        %v1479 = vunpack.c.h.b16 %v1356
        %v1480 = vunpack.c.l.b16 %v1357
        %v1481 = vunpack.c.l.b16 %v1358
        %v1482 = vunpack.c.h.b16 %v1358
        %v1483 = vunpack.c.l.b16 %v1359
        %v1484 = vunpack.c.l.b16 %v1360
        %v1485 = vunpack.c.h.b16 %v1360
        %v1486 = vunpack.c.l.b16 %v1361
        %v1487 = vunpack.c.l.b16 %v1362
        %v1488 = vunpack.c.h.b16 %v1362
        %v1489 = vunpack.c.l.b16 %v1363
        %v1490 = vunpack.c.l.b16 %v1364
        %v1491 = vunpack.c.h.b16 %v1364
        %v1492 = vunpack.c.l.b16 %v1365
        %v1493 = vunpack.c.l.b16 %v1366
        %v1494 = vunpack.c.h.b16 %v1366
        %v1495 = vunpack.c.l.b16 %v1367
        %v1496 = vunpack.c.l.b16 %v1368
        %v1497 = vunpack.c.h.b16 %v1368
        %v1498 = vunpack.c.l.b16 %v1369
        %v1499 = vunpack.c.l.b16 %v1370
        %v1500 = vunpack.c.h.b16 %v1370
        %v1501 = vunpack.c.l.b16 %v1371
        %v1502 = vunpack.c.l.b16 %v1372
        %v1503 = vunpack.c.h.b16 %v1372
        %v1504 = vunpack.c.l.b16 %v1373
        %v1505 = vpack.c.b16 %v1433, %v1430
        %v1506 = vpack.c.b16 %v1434, %v1431
        %v1507 = vpack.c.b16 %v1435, %v1432
        %v1508 = vpack.c.b16 %v1439, %v1436
        %v1509 = vpack.c.b16 %v1440, %v1437
        %v1510 = vpack.c.b16 %v1441, %v1438
        %v1511 = vpack.c.b16 %v1445, %v1442
        %v1512 = vpack.c.b16 %v1446, %v1443
        %v1513 = vpack.c.b16 %v1447, %v1444
        %v1514 = vpack.c.b16 %v1451, %v1448
        %v1515 = vpack.c.b16 %v1452, %v1449
        %v1516 = vpack.c.b16 %v1453, %v1450
        %v1517 = vpack.c.b16 %v1457, %v1454
        %v1518 = vpack.c.b16 %v1458, %v1455
        %v1519 = vpack.c.b16 %v1459, %v1456
        %v1520 = vpack.c.b16 %v1463, %v1460
        %v1521 = vpack.c.b16 %v1464, %v1461
        %v1522 = vpack.c.b16 %v1465, %v1462
        %v1523 = vpack.c.b16 %v1469, %v1466
        %v1524 = vpack.c.b16 %v1470, %v1467
        %v1525 = vpack.c.b16 %v1471, %v1468
        %v1526 = vpack.c.b16 %v1475, %v1472
        %v1527 = vpack.c.b16 %v1476, %v1473
        %v1528 = vpack.c.b16 %v1477, %v1474
        %v1529 = vpack.c.b16 %v1481, %v1478
        %v1530 = vpack.c.b16 %v1482, %v1479
        %v1531 = vpack.c.b16 %v1483, %v1480
        %v1532 = vpack.c.b16 %v1487, %v1484
        %v1533 = vpack.c.b16 %v1488, %v1485
        %v1534 = vpack.c.b16 %v1489, %v1486
        %v1535 = vpack.c.b16 %v1493, %v1490
        %v1536 = vpack.c.b16 %v1494, %v1491
        %v1537 = vpack.c.b16 %v1495, %v1492
        %v1538 = vpack.c.b16 %v1499, %v1496
        %v1539 = vpack.c.b16 %v1500, %v1497
        %v1540 = vpack.c.b16 %v1501, %v1498
        %v1541 = vpack.c.b16 %v1502, %v1502
        %v1542 = vpack.c.b16 %v1503, %v1503
        %v1543 = vpack.c.b16 %v1504, %v1504
        %vm1580 = vcmask 588800
        %v1582 = vsel %vm1580, %v1378, 0
        %vm1584 = vcmask 1043456
        %v1586 = vsel %vm1584, %v1541, 0
        %v1589 = vsel %vm1584, %v1542, 0
        %v1592 = vsel %vm1584, %v1543, 0
        %1594 = vmatprep.subr.bf16.mxu0 %v1506
        %1595 = vmatpush1.bf16.msra.mxu0 %v1505
        %1596 = vmatprep.subr.bf16.mxu0 %v1509
        %1597 = vmatpush1.bf16.msra.mxu0 %v1508
        %1598 = vmatprep.subr.bf16.mxu0 %v1512
        %1599 = vmatpush1.bf16.msra.mxu0 %v1511
        %1600 = vmatprep.subr.bf16.mxu0 %v1515
        %1601 = vmatpush1.bf16.msra.mxu0 %v1514
        %1602 = vmatprep.subr.bf16.mxu0 %v1518
        %1603 = vmatpush1.bf16.msra.mxu0 %v1517
        %1604 = vmatprep.subr.bf16.mxu0 %v1521
        %1605 = vmatpush1.bf16.msra.mxu0 %v1520
        %1606 = vmatprep.subr.bf16.mxu0 %v1524
        %1607 = vmatpush1.bf16.msra.mxu0 %v1523
        %1608 = vmatprep.subr.bf16.mxu0 %v1527
        %1609 = vmatpush1.bf16.msra.mxu0 %v1526
        %1610 = vmatprep.subr.bf16.mxu0 %v1530
        %1611 = vmatpush1.bf16.msra.mxu0 %v1529
        %1612 = vmatprep.subr.bf16.mxu0 %v1533
        %1613 = vmatpush1.bf16.msra.mxu0 %v1532
        %1614 = vmatprep.subr.bf16.mxu0 %v1536
        %1615 = vmatpush1.bf16.msra.mxu0 %v1535
        %1616 = vmatprep.subr.bf16.mxu0 %v1539
        %1617 = vmatpush1.bf16.msra.mxu0 %v1538
        %1618 = vmatprep.subr.bf16.mxu0 %v1589
        %1619 = vmatpush1.bf16.msra.mxu0 %v1586
        %1620 = vmatprep.subr.bf16.mxu0 0
        %1621 = vmatpush1.bf16.msra.mxu0 0
        %1622 = vmatprep.subr.bf16.mxu0 0
        %1623 = vmatpush1.bf16.msra.mxu0 0
        %1624 = vmatprep.subr.bf16.mxu0 0
        %1625 = vmatpush1.bf16.msra.mxu0 0
        %1626 = vmatprep.mubr.bf16.mxu0 %v1582
        %1627 = vmatmul.mubr.bf16.gmra.mrb[0].mxu0 %v1377
        %v1628 = vpop.f32.mrb[0].mxu0
        %v1629 = vadd.f32 0.0, %v1628
        %v1630 = vpop.f32.mrb[0].mxu0
        %v1631 = vadd.f32 0.0, %v1630
        %v1632 = vpop.f32.mrb[0].mxu0
        %v1633 = vpop.f32.mrb[0].mxu0
        %1634 = vdwg.mxu0
        %1635 = vmatprep.subr.bf16.mxu0 0
        %1636 = vmatpush1.bf16.msra.mxu0 %v1507
        %1637 = vmatprep.subr.bf16.mxu0 0
        %1638 = vmatpush1.bf16.msra.mxu0 %v1510
        %1639 = vmatprep.subr.bf16.mxu0 0
        %1640 = vmatpush1.bf16.msra.mxu0 %v1513
        %1641 = vmatprep.subr.bf16.mxu0 0
        %1642 = vmatpush1.bf16.msra.mxu0 %v1516
        %1643 = vmatprep.subr.bf16.mxu0 0
        %1644 = vmatpush1.bf16.msra.mxu0 %v1519
        %1645 = vmatprep.subr.bf16.mxu0 0
        %1646 = vmatpush1.bf16.msra.mxu0 %v1522
        %1647 = vmatprep.subr.bf16.mxu0 0
        %1648 = vmatpush1.bf16.msra.mxu0 %v1525
        %1649 = vmatprep.subr.bf16.mxu0 0
        %1650 = vmatpush1.bf16.msra.mxu0 %v1528
        %1651 = vmatprep.subr.bf16.mxu0 0
        %1652 = vmatpush1.bf16.msra.mxu0 %v1531
        %1653 = vmatprep.subr.bf16.mxu0 0
        %1654 = vmatpush1.bf16.msra.mxu0 %v1534
        %1655 = vmatprep.subr.bf16.mxu0 0
        %1656 = vmatpush1.bf16.msra.mxu0 %v1537
        %1657 = vmatprep.subr.bf16.mxu0 0
        %1658 = vmatpush1.bf16.msra.mxu0 %v1540
        %1659 = vmatprep.subr.bf16.mxu0 0
        %1660 = vmatpush1.bf16.msra.mxu0 %v1592
        %1661 = vmatprep.subr.bf16.mxu0 0
        %1662 = vmatpush1.bf16.msra.mxu0 0
        %1663 = vmatprep.subr.bf16.mxu0 0
        %1664 = vmatpush1.bf16.msra.mxu0 0
        %1665 = vmatprep.subr.bf16.mxu0 0
        %1666 = vmatpush1.bf16.msra.mxu0 0
        %1667 = vmatprep.mubr.bf16.mxu0 %v1582
        %1668 = vmatmul.mubr.bf16.gmra.mrb[0].mxu0 %v1377
        %v1669 = vpop.f32.mrb[0].mxu0
        %v1670 = vadd.f32 0.0, %v1669
        %v1671 = vpop.f32.mrb[0].mxu0
        %v1672 = vpop.f32.mrb[0].mxu0
        %v1673 = vpop.f32.mrb[0].mxu0
        %1674 = vdwg.mxu0
        %s1675 = sld [smem:[#allocation6]]
        %v1676 = vld [vmem:[%s6] sm:$0xff]
        %v1677 = vmul.f32 %v1629, %v1629
        %v1678 = vmul.f32 %v1631, %v1631
        %v1679 = vmul.f32 %v1670, %v1670
        %1681 = vset.pattern.permute.xlu0 0
        %1682 = vperm.xlu0 %1681, %v1676
        %v1683 = vpop.permute.xlu0 %1682
        %v1685 = vlaneseq
        %v1686 = vshrl.u32 %v1685, 7
        %v1687 = vsub.s32 0, %v1686
        %v1688 = vrot.slane %v1677, %v1687
        %v1689 = vlaneseq
        %v1690 = vshrl.u32 %v1689, 7
        %v1691 = vsub.s32 0, %v1690
        %v1692 = vrot.slane %v1678, %v1691
        %v1693 = vlaneseq
        %v1694 = vshrl.u32 %v1693, 7
        %v1695 = vsub.s32 0, %v1694
        %v1696 = vrot.slane %v1679, %v1695
        %v1697 = vmul.f32 %v1683, %v1688
        %v1698 = vmul.f32 %v1683, %v1692
        %v1699 = vmul.f32 %v1683, %v1696
        %1700 = vset.pattern.permute.xlu0 1
        %1701 = vperm.xlu0 %1700, %v1676
        %v1702 = vpop.permute.xlu0 %1701
        %v1704 = vlaneseq
        %v1705 = vshrl.u32 %v1704, 7
        %v1706 = vsub.s32 1, %v1705
        %v1707 = vrot.slane %v1677, %v1706
        %v1708 = vlaneseq
        %v1709 = vshrl.u32 %v1708, 7
        %v1710 = vsub.s32 1, %v1709
        %v1711 = vrot.slane %v1678, %v1710
        %v1712 = vlaneseq
        %v1713 = vshrl.u32 %v1712, 7
        %v1714 = vsub.s32 1, %v1713
        %v1715 = vrot.slane %v1679, %v1714
        %v1716 = vmul.f32 %v1702, %v1707
        %v1717 = vmul.f32 %v1702, %v1711
        %v1718 = vmul.f32 %v1702, %v1715
        %v1719 = vadd.f32 %v1697, %v1716
        %v1720 = vadd.f32 %v1698, %v1717
        %v1721 = vadd.f32 %v1699, %v1718
        %1722 = vset.pattern.permute.xlu0 2
        %1723 = vperm.xlu0 %1722, %v1676
        %v1724 = vpop.permute.xlu0 %1723
        %v1726 = vlaneseq
        %v1727 = vshrl.u32 %v1726, 7
        %v1728 = vsub.s32 2, %v1727
        %v1729 = vrot.slane %v1677, %v1728
        %v1730 = vlaneseq
        %v1731 = vshrl.u32 %v1730, 7
        %v1732 = vsub.s32 2, %v1731
        %v1733 = vrot.slane %v1678, %v1732
        %v1734 = vlaneseq
        %v1735 = vshrl.u32 %v1734, 7
        %v1736 = vsub.s32 2, %v1735
        %v1737 = vrot.slane %v1679, %v1736
        %v1738 = vmul.f32 %v1724, %v1729
        %v1739 = vmul.f32 %v1724, %v1733
        %v1740 = vmul.f32 %v1724, %v1737
        %v1741 = vadd.f32 %v1719, %v1738
        %v1742 = vadd.f32 %v1720, %v1739
        %v1743 = vadd.f32 %v1721, %v1740
        %1744 = vset.pattern.permute.xlu0 3
        %1745 = vperm.xlu0 %1744, %v1676
        %v1746 = vpop.permute.xlu0 %1745
        %v1748 = vlaneseq
        %v1749 = vshrl.u32 %v1748, 7
        %v1750 = vsub.s32 3, %v1749
        %v1751 = vrot.slane %v1677, %v1750
        %v1752 = vlaneseq
        %v1753 = vshrl.u32 %v1752, 7
        %v1754 = vsub.s32 3, %v1753
        %v1755 = vrot.slane %v1678, %v1754
        %v1756 = vlaneseq
        %v1757 = vshrl.u32 %v1756, 7
        %v1758 = vsub.s32 3, %v1757
        %v1759 = vrot.slane %v1679, %v1758
        %v1760 = vmul.f32 %v1746, %v1751
        %v1761 = vmul.f32 %v1746, %v1755
        %v1762 = vmul.f32 %v1746, %v1759
        %v1763 = vadd.f32 %v1741, %v1760
        %v1764 = vadd.f32 %v1742, %v1761
        %v1765 = vadd.f32 %v1743, %v1762
        %v1766 = vld [vmem:[%s7] sm:$0xff]
        %1768 = vset.pattern.permute.xlu0 0
        %1769 = vperm.xlu0 %1768, %v1766
        %v1770 = vpop.permute.xlu0 %1769
        %v1772 = vadd.f32 %v1763, %v1770
        %v1773 = vadd.f32 %v1764, %v1770
        %v1774 = vadd.f32 %v1765, %v1770
        %v1775 = vrsqrt.pop %v1772
        %v1776 = vrsqrt.pop %v1773
        %v1777 = vrsqrt.pop %v1774
        %v1778 = vmul.f32 %v1629, %v1775
        %v1779 = vmul.f32 %v1631, %v1776
        %v1780 = vmul.f32 %v1670, %v1777
        %vm1781 = vcmp.ge.f32.partialorder %v1778, 0.0
        %vm1782 = vcmp.ge.f32.partialorder %v1779, 0.0
        %vm1783 = vcmp.ge.f32.partialorder %v1780, 0.0
        %v1784 = vstv %s1675
        %v1785 = vmul.f32 %v1784, %v1778
        %v1786 = vmul.f32 %v1784, %v1779
        %v1787 = vmul.f32 %v1784, %v1780
        %v1788 = vsel %vm1781, %v1778, %v1785
        %v1789 = vsel %vm1782, %v1779, %v1786
        %v1790 = vsel %vm1783, %v1780, %v1787
        %v1791 = vld [vmem:[%s5] sm:$0xff]
        %1793 = vset.pattern.permute.xlu0 0
        %1794 = vperm.xlu0 %1793, %v1791
        %v1795 = vpop.permute.xlu0 %1794
        %v1797 = vlaneseq
        %v1798 = vshrl.u32 %v1797, 7
        %v1799 = vsub.s32 0, %v1798
        %v1800 = vrot.slane %v1788, %v1799
        %v1801 = vlaneseq
        %v1802 = vshrl.u32 %v1801, 7
        %v1803 = vsub.s32 0, %v1802
        %v1804 = vrot.slane %v1789, %v1803
        %v1805 = vlaneseq
        %v1806 = vshrl.u32 %v1805, 7
        %v1807 = vsub.s32 0, %v1806
        %v1808 = vrot.slane %v1790, %v1807
        %v1809 = vmul.f32 %v1795, %v1800
        %v1810 = vmul.f32 %v1795, %v1804
        %v1811 = vmul.f32 %v1795, %v1808
        %1812 = vset.pattern.permute.xlu0 1
        %1813 = vperm.xlu0 %1812, %v1791
        %v1814 = vpop.permute.xlu0 %1813
        %v1816 = vlaneseq
        %v1817 = vshrl.u32 %v1816, 7
        %v1818 = vsub.s32 1, %v1817
        %v1819 = vrot.slane %v1788, %v1818
        %v1820 = vlaneseq
        %v1821 = vshrl.u32 %v1820, 7
        %v1822 = vsub.s32 1, %v1821
        %v1823 = vrot.slane %v1789, %v1822
        %v1824 = vlaneseq
        %v1825 = vshrl.u32 %v1824, 7
        %v1826 = vsub.s32 1, %v1825
        %v1827 = vrot.slane %v1790, %v1826
        %v1828 = vmul.f32 %v1814, %v1819
        %v1829 = vmul.f32 %v1814, %v1823
        %v1830 = vmul.f32 %v1814, %v1827
        %v1831 = vadd.f32 %v1809, %v1828
        %v1832 = vadd.f32 %v1810, %v1829
        %v1833 = vadd.f32 %v1811, %v1830
        %1834 = vset.pattern.permute.xlu0 2
        %1835 = vperm.xlu0 %1834, %v1791
        %v1836 = vpop.permute.xlu0 %1835
        %v1838 = vlaneseq
        %v1839 = vshrl.u32 %v1838, 7
        %v1840 = vsub.s32 2, %v1839
        %v1841 = vrot.slane %v1788, %v1840
        %v1842 = vlaneseq
        %v1843 = vshrl.u32 %v1842, 7
        %v1844 = vsub.s32 2, %v1843
        %v1845 = vrot.slane %v1789, %v1844
        %v1846 = vlaneseq
        %v1847 = vshrl.u32 %v1846, 7
        %v1848 = vsub.s32 2, %v1847
        %v1849 = vrot.slane %v1790, %v1848
        %v1850 = vmul.f32 %v1836, %v1841
        %v1851 = vmul.f32 %v1836, %v1845
        %v1852 = vmul.f32 %v1836, %v1849
        %v1853 = vadd.f32 %v1831, %v1850
        %v1854 = vadd.f32 %v1832, %v1851
        %v1855 = vadd.f32 %v1833, %v1852
        %1856 = vset.pattern.permute.xlu0 3
        %1857 = vperm.xlu0 %1856, %v1791
        %v1858 = vpop.permute.xlu0 %1857
        %v1860 = vlaneseq
        %v1861 = vshrl.u32 %v1860, 7
        %v1862 = vsub.s32 3, %v1861
        %v1863 = vrot.slane %v1788, %v1862
        %v1864 = vlaneseq
        %v1865 = vshrl.u32 %v1864, 7
        %v1866 = vsub.s32 3, %v1865
        %v1867 = vrot.slane %v1789, %v1866
        %v1868 = vlaneseq
        %v1869 = vshrl.u32 %v1868, 7
        %v1870 = vsub.s32 3, %v1869
        %v1871 = vrot.slane %v1790, %v1870
        %v1872 = vmul.f32 %v1858, %v1863
        %v1873 = vmul.f32 %v1858, %v1867
        %v1874 = vmul.f32 %v1858, %v1871
        %v1875 = vadd.f32 %v1853, %v1872
        %v1876 = vadd.f32 %v1854, %v1873
        %v1877 = vadd.f32 %v1855, %v1874
        %v1878 = vld [vmem:[%s8] sm:$0xff]
        %v1879 = vmul.f32 %v1875, %v1875
        %v1880 = vmul.f32 %v1876, %v1876
        %v1881 = vmul.f32 %v1877, %v1877
        %1883 = vset.pattern.permute.xlu0 0
        %1884 = vperm.xlu0 %1883, %v1878
        %v1885 = vpop.permute.xlu0 %1884
        %v1887 = vlaneseq
        %v1888 = vshrl.u32 %v1887, 7
        %v1889 = vsub.s32 0, %v1888
        %v1890 = vrot.slane %v1879, %v1889
        %v1891 = vlaneseq
        %v1892 = vshrl.u32 %v1891, 7
        %v1893 = vsub.s32 0, %v1892
        %v1894 = vrot.slane %v1880, %v1893
        %v1895 = vlaneseq
        %v1896 = vshrl.u32 %v1895, 7
        %v1897 = vsub.s32 0, %v1896
        %v1898 = vrot.slane %v1881, %v1897
        %v1899 = vmul.f32 %v1885, %v1890
        %v1900 = vmul.f32 %v1885, %v1894
        %v1901 = vmul.f32 %v1885, %v1898
        %1902 = vset.pattern.permute.xlu0 1
        %1903 = vperm.xlu0 %1902, %v1878
        %v1904 = vpop.permute.xlu0 %1903
        %v1906 = vlaneseq
        %v1907 = vshrl.u32 %v1906, 7
        %v1908 = vsub.s32 1, %v1907
        %v1909 = vrot.slane %v1879, %v1908
        %v1910 = vlaneseq
        %v1911 = vshrl.u32 %v1910, 7
        %v1912 = vsub.s32 1, %v1911
        %v1913 = vrot.slane %v1880, %v1912
        %v1914 = vlaneseq
        %v1915 = vshrl.u32 %v1914, 7
        %v1916 = vsub.s32 1, %v1915
        %v1917 = vrot.slane %v1881, %v1916
        %v1918 = vmul.f32 %v1904, %v1909
        %v1919 = vmul.f32 %v1904, %v1913
        %v1920 = vmul.f32 %v1904, %v1917
        %v1921 = vadd.f32 %v1899, %v1918
        %v1922 = vadd.f32 %v1900, %v1919
        %v1923 = vadd.f32 %v1901, %v1920
        %1924 = vset.pattern.permute.xlu0 2
        %1925 = vperm.xlu0 %1924, %v1878
        %v1926 = vpop.permute.xlu0 %1925
        %v1928 = vlaneseq
        %v1929 = vshrl.u32 %v1928, 7
        %v1930 = vsub.s32 2, %v1929
        %v1931 = vrot.slane %v1879, %v1930
        %v1932 = vlaneseq
        %v1933 = vshrl.u32 %v1932, 7
        %v1934 = vsub.s32 2, %v1933
        %v1935 = vrot.slane %v1880, %v1934
        %v1936 = vlaneseq
        %v1937 = vshrl.u32 %v1936, 7
        %v1938 = vsub.s32 2, %v1937
        %v1939 = vrot.slane %v1881, %v1938
        %v1940 = vmul.f32 %v1926, %v1931
        %v1941 = vmul.f32 %v1926, %v1935
        %v1942 = vmul.f32 %v1926, %v1939
        %v1943 = vadd.f32 %v1921, %v1940
        %v1944 = vadd.f32 %v1922, %v1941
        %v1945 = vadd.f32 %v1923, %v1942
        %1946 = vset.pattern.permute.xlu0 3
        %1947 = vperm.xlu0 %1946, %v1878
        %v1948 = vpop.permute.xlu0 %1947
        %v1950 = vlaneseq
        %v1951 = vshrl.u32 %v1950, 7
        %v1952 = vsub.s32 3, %v1951
        %v1953 = vrot.slane %v1879, %v1952
        %v1954 = vlaneseq
        %v1955 = vshrl.u32 %v1954, 7
        %v1956 = vsub.s32 3, %v1955
        %v1957 = vrot.slane %v1880, %v1956
        %v1958 = vlaneseq
        %v1959 = vshrl.u32 %v1958, 7
        %v1960 = vsub.s32 3, %v1959
        %v1961 = vrot.slane %v1881, %v1960
        %v1962 = vmul.f32 %v1948, %v1953
        %v1963 = vmul.f32 %v1948, %v1957
        %v1964 = vmul.f32 %v1948, %v1961
        %v1965 = vadd.f32 %v1943, %v1962
        %v1966 = vadd.f32 %v1944, %v1963
        %v1967 = vadd.f32 %v1945, %v1964
        %v1968 = vld [vmem:[%s9] sm:$0xff]
        %1970 = vset.pattern.permute.xlu0 0
        %1971 = vperm.xlu0 %1970, %v1968
        %v1972 = vpop.permute.xlu0 %1971
        %v1974 = vadd.f32 %v1965, %v1972
        %v1975 = vadd.f32 %v1966, %v1972
        %v1976 = vadd.f32 %v1967, %v1972
        %v1977 = vrsqrt.pop %v1974
        %v1978 = vrsqrt.pop %v1975
        %v1979 = vrsqrt.pop %v1976
        %v1980 = vmul.f32 %v1875, %v1977
        %v1981 = vmul.f32 %v1876, %v1978
        %v1982 = vmul.f32 %v1877, %v1979
        %v1983 = vadd.f32 %v1980, %v536
        %v1984 = vadd.f32 %v1981, %v537
        %v1985 = vadd.f32 %v1982, %v538
        %vm1986 = vcmp.ge.f32.partialorder %v1983, 0.0
        %vm1987 = vcmp.ge.f32.partialorder %v1984, 0.0
        %vm1988 = vcmp.ge.f32.partialorder %v1985, 0.0
        %v1989 = vmul.f32 %v1784, %v1983
        %v1990 = vmul.f32 %v1784, %v1984
        %v1991 = vmul.f32 %v1784, %v1985
        %v1992 = vsel %vm1986, %v1983, %v1989
        %v1993 = vsel %vm1987, %v1984, %v1990
        %v1994 = vsel %vm1988, %v1985, %v1991
        %v1996 = vlaneseq
        %v1997 = vshrl.u32 %v1996, 7
        %v1998 = vsub.s32 0, %v1997
        %v1999 = vrot.slane %v534, %v1998
        %v2000 = vlaneseq
        %v2001 = vshrl.u32 %v2000, 7
        %v2002 = vsub.s32 1, %v2001
        %v2003 = vrot.slane %v534, %v2002
        %v2004 = vlaneseq
        %v2005 = vshrl.u32 %v2004, 7
        %v2006 = vsub.s32 2, %v2005
        %v2007 = vrot.slane %v534, %v2006
        %v2011 = vmul.f32 %v1992, %v1999
        %v2012 = vmul.f32 %v1993, %v2003
        %v2013 = vmul.f32 %v1994, %v2007
        %v2014 = vadd.f32 %v2011, %v2012
        %v2015 = vadd.f32 %v2014, %v2013
        %2016 = vadd.xlane.f32.xlu0 %v2015
        %v2017 = vpop.xlane.xlu0 %2016
        %v2018 = vmul.f32 %v2017, 0.00390625
        %v2019 = vld [vmem:[%s10] sm:$0xff]
        %v2020 = vmul.f32 %v2019, %v2018
        %vm2021 = vcmask 15360
        %v2022 = vsel %vm2021, %v2020, 0.0
        %v2023 = vrot.slane %v2022, 4
        %v2024 = vadd.f32 %v2022, %v2023
        %v2025 = vrot.slane %v2024, 2
        %v2026 = vadd.f32 %v2024, %v2025
        %v2027 = vrot.slane %v2026, 1
        %v2028 = vadd.f32 %v2026, %v2027
        %v2029 = vld [vmem:[%s11] sm:$0x1]
        %v2030 = vstv %s535
        %v2031 = vmul.f32 %v2030, %v2029
        %v2032 = vadd.f32 %v2028, %v2031
        %v2033 = vld [vmem:[%s12] sm:$0x1]
        %v2034 = vadd.f32 %v2032, %v2033
        %v2035 = vmax.f32 %v2034, 0.0
        %v2036 = vld [vmem:[%s13] sm:$0xff]
        %v2037 = vlaneseq
        %v2038 = vshrl.u32 %v2037, 7
        %v2039 = vsub.s32 0, %v2038
        %v2040 = vrot.slane %v2035, %v2039
        %v2041 = vmul.f32 %v2036, %v2040
        %v2042 = vsel %vm2021, %v2041, 0.0
        %2043 = vadd.xlane.f32.xlu0 %v2042
        %v2044 = vpop.xlane.xlu0 %2043
        %v2045 = vld [vmem:[%s14] sm:$0xff]
        %v2046 = vadd.f32 %v2044, %v2045
        %v2047 = vxor.u32 %v2046, 2147483648
        %v2048 = vmul.f32 %v2047, 1.442695
        %v2049 = vpow.pop %v2048
        %v2050 = vadd.f32 %v2049, 1.0
        %v2051 = vrcp.pop %v2050
        %v2052 = vmul.f32 1.0, %v2051
        %2054 = vset.pattern.permute.xlu0 0
        %2055 = vperm.xlu0 %2054, %v2052
        %v2056 = vpop.permute.xlu0 %2055
        %v2058 = vmul.f32 %v1992, %v2056
        %v2059 = vmul.f32 %v1993, %v2056
        %v2060 = vmul.f32 %v1994, %v2056
        %v2061 = vmul.f32 %v2058, %v1999
        %v2062 = vmul.f32 %v2059, %v2003
        %v2063 = vmul.f32 %v2060, %v2007
        %2064 = vst [vmem:[#allocation2 + $0x8] sm:$0xff] %v2061
        %2065 = vst [vmem:[#allocation2 + $0x10] sm:$0xff] %v2062
        %2066 = vst [vmem:[#allocation2 + $0x18] sm:$0xff] %v2063
        %v2067 = vld [vmem:[#allocation2 + $0x8] sm:$0xff]
        %v2068 = vld [vmem:[#allocation2 + $0x10] sm:$0xff]
        %v2069 = vld [vmem:[#allocation2 + $0x18] sm:$0xff]
        %v2070 = vld [vmem:[#allocation2] sm:$0xff]
        %v2071 = vpack.c.bf16 %v2070, %v2070
        %v2072 = vpack.c.bf16 %v2067, %v2067
        %v2073 = vpack.c.bf16 %v2068, %v2068
        %v2074 = vpack.c.bf16 %v2069, %v2069
        %v2079 = vunpack.c.l.b16 %v2071
        %v2080 = vunpack.c.l.b16 %v2072
        %v2081 = vunpack.c.l.b16 %v2073
        %v2082 = vunpack.c.l.b16 %v2074
        %v2083 = vpack.c.b16 %v2080, %v2079
        %v2084 = vpack.c.b16 %v2082, %v2081
        %2085 = vrot.lane.b32.xlu0 %v2083, 42
        %v2086 = vpop.permute.xlu0 %2085
        %2087 = vrot.lane.b32.xlu0 %v2084, 42
        %v2088 = vpop.permute.xlu0 %2087
        %v2089 = vrot.slane %v2086, 4
        %v2090 = vrot.slane %v2088, 4
        %v2091 = vsel %vm560, %v2089, %v2090
        %v2092 = vsel %vm562, %v2086, %v2091
        %v2093 = vsel %vm562, %v2088, %v2090
        %2096 = vst [vmem:[#allocation3] sm:$0xff] %v2092
        %2097 = vst [vmem:[#allocation3 + $0x8] sm:$0xf] %v2093
        %v2098 = vld [vmem:[#allocation2] sm:$0xff]
        %v2099 = vld [vmem:[#allocation2 + $0x8] sm:$0xff]
        %v2100 = vld [vmem:[#allocation2 + $0x10] sm:$0xff]
        %v2101 = vld [vmem:[#allocation2 + $0x18] sm:$0xff]
        %v2102 = vpack.c.bf16 %v2098, %v2098
        %v2103 = vpack.c.bf16 %v2099, %v2099
        %v2104 = vpack.c.bf16 %v2100, %v2100
        %v2105 = vpack.c.bf16 %v2101, %v2101
        %v2110 = vunpack.c.l.b16 %v2102
        %v2111 = vunpack.c.l.b16 %v2103
        %v2112 = vunpack.c.l.b16 %v2104
        %v2113 = vunpack.c.l.b16 %v2105
        %v2114 = vpack.c.b16 %v2111, %v2110
        %v2115 = vpack.c.b16 %v2113, %v2112
        %2116 = vrot.lane.b32.xlu0 %v2114, 41
        %v2117 = vpop.permute.xlu0 %2116
        %2118 = vrot.lane.b32.xlu0 %v2115, 41
        %v2119 = vpop.permute.xlu0 %2118
        %v2120 = vrot.slane %v2117, 4
        %v2121 = vrot.slane %v2119, 4
        %v2122 = vsel %vm560, %v2120, %v2121
        %v2123 = vsel %vm594, %v2117, %v2122
        %v2124 = vsel %vm594, %v2119, %v2121
        %2127 = vst [vmem:[#allocation3 + $0xc] sm:$0xff] %v2123
        %2128 = vst [vmem:[#allocation3 + $0x14] sm:$0xf] %v2124
        %v2129 = vld [vmem:[#allocation2] sm:$0xff]
        %v2130 = vld [vmem:[#allocation2 + $0x8] sm:$0xff]
        %v2131 = vld [vmem:[#allocation2 + $0x10] sm:$0xff]
        %v2132 = vld [vmem:[#allocation2 + $0x18] sm:$0xff]
        %v2133 = vpack.c.bf16 %v2129, %v2129
        %v2134 = vpack.c.bf16 %v2130, %v2130
        %v2135 = vpack.c.bf16 %v2131, %v2131
        %v2136 = vpack.c.bf16 %v2132, %v2132
        %v2141 = vunpack.c.l.b16 %v2133
        %v2142 = vunpack.c.l.b16 %v2134
        %v2143 = vunpack.c.l.b16 %v2135
        %v2144 = vunpack.c.l.b16 %v2136
        %v2145 = vpack.c.b16 %v2142, %v2141
        %v2146 = vpack.c.b16 %v2144, %v2143
        %2147 = vrot.lane.b32.xlu0 %v2145, 40
        %v2148 = vpop.permute.xlu0 %2147
        %2149 = vrot.lane.b32.xlu0 %v2146, 40
        %v2150 = vpop.permute.xlu0 %2149
        %v2151 = vrot.slane %v2148, 4
        %v2152 = vrot.slane %v2150, 4
        %v2153 = vsel %vm560, %v2151, %v2152
        %v2154 = vsel %vm626, %v2148, %v2153
        %v2155 = vsel %vm626, %v2150, %v2152
        %2158 = vst [vmem:[#allocation3 + $0x18] sm:$0xff] %v2154
        %2159 = vst [vmem:[#allocation3 + $0x20] sm:$0xf] %v2155
        %v2160 = vld [vmem:[#allocation2] sm:$0xff]
        %v2161 = vld [vmem:[#allocation2 + $0x8] sm:$0xff]
        %v2162 = vld [vmem:[#allocation2 + $0x10] sm:$0xff]
        %v2163 = vld [vmem:[#allocation2 + $0x18] sm:$0xff]
        %v2164 = vpack.c.bf16 %v2160, %v2160
        %v2165 = vpack.c.bf16 %v2161, %v2161
        %v2166 = vpack.c.bf16 %v2162, %v2162
        %v2167 = vpack.c.bf16 %v2163, %v2163
        %v2172 = vunpack.c.l.b16 %v2164
        %v2173 = vunpack.c.l.b16 %v2165
        %v2174 = vunpack.c.l.b16 %v2166
        %v2175 = vunpack.c.l.b16 %v2167
        %v2176 = vpack.c.b16 %v2173, %v2172
        %v2177 = vpack.c.b16 %v2175, %v2174
        %2178 = vrot.lane.b32.xlu0 %v2176, 39
        %v2179 = vpop.permute.xlu0 %2178
        %2180 = vrot.lane.b32.xlu0 %v2177, 39
        %v2181 = vpop.permute.xlu0 %2180
        %v2182 = vrot.slane %v2179, 4
        %v2183 = vrot.slane %v2181, 4
        %v2184 = vsel %vm560, %v2182, %v2183
        %v2185 = vsel %vm658, %v2179, %v2184
        %v2186 = vsel %vm658, %v2181, %v2183
        %2189 = vst [vmem:[#allocation3 + $0x24] sm:$0xff] %v2185
        %2190 = vst [vmem:[#allocation3 + $0x2c] sm:$0xf] %v2186
        %v2191 = vld [vmem:[#allocation2] sm:$0xff]
        %v2192 = vld [vmem:[#allocation2 + $0x8] sm:$0xff]
        %v2193 = vld [vmem:[#allocation2 + $0x10] sm:$0xff]
        %v2194 = vld [vmem:[#allocation2 + $0x18] sm:$0xff]
        %v2195 = vpack.c.bf16 %v2191, %v2191
        %v2196 = vpack.c.bf16 %v2192, %v2192
        %v2197 = vpack.c.bf16 %v2193, %v2193
        %v2198 = vpack.c.bf16 %v2194, %v2194
        %v2203 = vunpack.c.l.b16 %v2195
        %v2204 = vunpack.c.l.b16 %v2196
        %v2205 = vunpack.c.l.b16 %v2197
        %v2206 = vunpack.c.l.b16 %v2198
        %v2207 = vpack.c.b16 %v2204, %v2203
        %v2208 = vpack.c.b16 %v2206, %v2205
        %2209 = vrot.lane.b32.xlu0 %v2207, 38
        %v2210 = vpop.permute.xlu0 %2209
        %2211 = vrot.lane.b32.xlu0 %v2208, 38
        %v2212 = vpop.permute.xlu0 %2211
        %v2213 = vrot.slane %v2210, 4
        %v2214 = vrot.slane %v2212, 4
        %v2215 = vsel %vm560, %v2213, %v2214
        %v2216 = vsel %vm690, %v2210, %v2215
        %v2217 = vsel %vm690, %v2212, %v2214
        %2220 = vst [vmem:[#allocation3 + $0x30] sm:$0xff] %v2216
        %2221 = vst [vmem:[#allocation3 + $0x38] sm:$0xf] %v2217
        %v2222 = vld [vmem:[#allocation2] sm:$0xff]
        %v2223 = vld [vmem:[#allocation2 + $0x8] sm:$0xff]
        %v2224 = vld [vmem:[#allocation2 + $0x10] sm:$0xff]
        %v2225 = vld [vmem:[#allocation2 + $0x18] sm:$0xff]
        %v2226 = vpack.c.bf16 %v2222, %v2222
        %v2227 = vpack.c.bf16 %v2223, %v2223
        %v2228 = vpack.c.bf16 %v2224, %v2224
        %v2229 = vpack.c.bf16 %v2225, %v2225
        %v2234 = vunpack.c.l.b16 %v2226
        %v2235 = vunpack.c.l.b16 %v2227
        %v2236 = vunpack.c.l.b16 %v2228
        %v2237 = vunpack.c.l.b16 %v2229
        %v2238 = vpack.c.b16 %v2235, %v2234
        %v2239 = vpack.c.b16 %v2237, %v2236
        %2240 = vrot.lane.b32.xlu0 %v2238, 22
        %v2241 = vpop.permute.xlu0 %2240
        %2242 = vrot.lane.b32.xlu0 %v2239, 22
        %v2243 = vpop.permute.xlu0 %2242
        %v2244 = vrot.slane %v2241, 4
        %v2245 = vrot.slane %v2243, 4
        %v2246 = vsel %vm560, %v2244, %v2245
        %v2247 = vsel %vm722, %v2241, %v2246
        %v2248 = vsel %vm722, %v2243, %v2245
        %2251 = vst [vmem:[#allocation3 + $0x3c] sm:$0xff] %v2247
        %2252 = vst [vmem:[#allocation3 + $0x44] sm:$0xf] %v2248
        %v2253 = vld [vmem:[#allocation2] sm:$0xff]
        %v2254 = vld [vmem:[#allocation2 + $0x8] sm:$0xff]
        %v2255 = vld [vmem:[#allocation2 + $0x10] sm:$0xff]
        %v2256 = vld [vmem:[#allocation2 + $0x18] sm:$0xff]
        %v2257 = vpack.c.bf16 %v2253, %v2253
        %v2258 = vpack.c.bf16 %v2254, %v2254
        %v2259 = vpack.c.bf16 %v2255, %v2255
        %v2260 = vpack.c.bf16 %v2256, %v2256
        %v2265 = vunpack.c.l.b16 %v2257
        %v2266 = vunpack.c.l.b16 %v2258
        %v2267 = vunpack.c.l.b16 %v2259
        %v2268 = vunpack.c.l.b16 %v2260
        %v2269 = vpack.c.b16 %v2266, %v2265
        %v2270 = vpack.c.b16 %v2268, %v2267
        %2271 = vrot.lane.b32.xlu0 %v2269, 21
        %v2272 = vpop.permute.xlu0 %2271
        %2273 = vrot.lane.b32.xlu0 %v2270, 21
        %v2274 = vpop.permute.xlu0 %2273
        %v2275 = vrot.slane %v2272, 4
        %v2276 = vrot.slane %v2274, 4
        %v2277 = vsel %vm560, %v2275, %v2276
        %v2278 = vsel %vm754, %v2272, %v2277
        %v2279 = vsel %vm754, %v2274, %v2276
        %2282 = vst [vmem:[#allocation3 + $0x48] sm:$0xff] %v2278
        %2283 = vst [vmem:[#allocation3 + $0x50] sm:$0xf] %v2279
        %v2284 = vld [vmem:[#allocation2] sm:$0xff]
        %v2285 = vld [vmem:[#allocation2 + $0x8] sm:$0xff]
        %v2286 = vld [vmem:[#allocation2 + $0x10] sm:$0xff]
        %v2287 = vld [vmem:[#allocation2 + $0x18] sm:$0xff]
        %v2288 = vpack.c.bf16 %v2284, %v2284
        %v2289 = vpack.c.bf16 %v2285, %v2285
        %v2290 = vpack.c.bf16 %v2286, %v2286
        %v2291 = vpack.c.bf16 %v2287, %v2287
        %v2296 = vunpack.c.l.b16 %v2288
        %v2297 = vunpack.c.l.b16 %v2289
        %v2298 = vunpack.c.l.b16 %v2290
        %v2299 = vunpack.c.l.b16 %v2291
        %v2300 = vpack.c.b16 %v2297, %v2296
        %v2301 = vpack.c.b16 %v2299, %v2298
        %2302 = vrot.lane.b32.xlu0 %v2300, 20
        %v2303 = vpop.permute.xlu0 %2302
        %2304 = vrot.lane.b32.xlu0 %v2301, 20
        %v2305 = vpop.permute.xlu0 %2304
        %v2306 = vrot.slane %v2303, 4
        %v2307 = vrot.slane %v2305, 4
        %v2308 = vsel %vm560, %v2306, %v2307
        %v2309 = vsel %vm786, %v2303, %v2308
        %v2310 = vsel %vm786, %v2305, %v2307
        %2313 = vst [vmem:[#allocation3 + $0x54] sm:$0xff] %v2309
        %2314 = vst [vmem:[#allocation3 + $0x5c] sm:$0xf] %v2310
        %v2315 = vld [vmem:[#allocation2] sm:$0xff]
        %v2316 = vld [vmem:[#allocation2 + $0x8] sm:$0xff]
        %v2317 = vld [vmem:[#allocation2 + $0x10] sm:$0xff]
        %v2318 = vld [vmem:[#allocation2 + $0x18] sm:$0xff]
        %v2319 = vpack.c.bf16 %v2315, %v2315
        %v2320 = vpack.c.bf16 %v2316, %v2316
        %v2321 = vpack.c.bf16 %v2317, %v2317
        %v2322 = vpack.c.bf16 %v2318, %v2318
        %v2327 = vunpack.c.l.b16 %v2319
        %v2328 = vunpack.c.l.b16 %v2320
        %v2329 = vunpack.c.l.b16 %v2321
        %v2330 = vunpack.c.l.b16 %v2322
        %v2331 = vpack.c.b16 %v2328, %v2327
        %v2332 = vpack.c.b16 %v2330, %v2329
        %2333 = vrot.lane.b32.xlu0 %v2331, 19
        %v2334 = vpop.permute.xlu0 %2333
        %2335 = vrot.lane.b32.xlu0 %v2332, 19
        %v2336 = vpop.permute.xlu0 %2335
        %v2337 = vrot.slane %v2334, 4
        %v2338 = vrot.slane %v2336, 4
        %v2339 = vsel %vm560, %v2337, %v2338
        %v2340 = vsel %vm818, %v2334, %v2339
        %v2341 = vsel %vm818, %v2336, %v2338
        %2344 = vst [vmem:[#allocation3 + $0x60] sm:$0xff] %v2340
        %2345 = vst [vmem:[#allocation3 + $0x68] sm:$0xf] %v2341
        %v2346 = vld [vmem:[#allocation2] sm:$0xff]
        %v2347 = vld [vmem:[#allocation2 + $0x8] sm:$0xff]
        %v2348 = vld [vmem:[#allocation2 + $0x10] sm:$0xff]
        %v2349 = vld [vmem:[#allocation2 + $0x18] sm:$0xff]
        %v2350 = vpack.c.bf16 %v2346, %v2346
        %v2351 = vpack.c.bf16 %v2347, %v2347
        %v2352 = vpack.c.bf16 %v2348, %v2348
        %v2353 = vpack.c.bf16 %v2349, %v2349
        %v2358 = vunpack.c.l.b16 %v2350
        %v2359 = vunpack.c.l.b16 %v2351
        %v2360 = vunpack.c.l.b16 %v2352
        %v2361 = vunpack.c.l.b16 %v2353
        %v2362 = vpack.c.b16 %v2359, %v2358
        %v2363 = vpack.c.b16 %v2361, %v2360
        %2364 = vrot.lane.b32.xlu0 %v2362, 18
        %v2365 = vpop.permute.xlu0 %2364
        %2366 = vrot.lane.b32.xlu0 %v2363, 18
        %v2367 = vpop.permute.xlu0 %2366
        %v2368 = vrot.slane %v2365, 4
        %v2369 = vrot.slane %v2367, 4
        %v2370 = vsel %vm560, %v2368, %v2369
        %v2371 = vsel %vm850, %v2365, %v2370
        %v2372 = vsel %vm850, %v2367, %v2369
        %2375 = vst [vmem:[#allocation3 + $0x6c] sm:$0xff] %v2371
        %2376 = vst [vmem:[#allocation3 + $0x74] sm:$0xf] %v2372
        %v2377 = vld [vmem:[#allocation2] sm:$0xff]
        %v2378 = vld [vmem:[#allocation2 + $0x8] sm:$0xff]
        %v2379 = vld [vmem:[#allocation2 + $0x10] sm:$0xff]
        %v2380 = vld [vmem:[#allocation2 + $0x18] sm:$0xff]
        %v2381 = vpack.c.bf16 %v2377, %v2377
        %v2382 = vpack.c.bf16 %v2378, %v2378
        %v2383 = vpack.c.bf16 %v2379, %v2379
        %v2384 = vpack.c.bf16 %v2380, %v2380
        %v2389 = vunpack.c.l.b16 %v2381
        %v2390 = vunpack.c.l.b16 %v2382
        %v2391 = vunpack.c.l.b16 %v2383
        %v2392 = vunpack.c.l.b16 %v2384
        %v2393 = vpack.c.b16 %v2390, %v2389
        %v2394 = vpack.c.b16 %v2392, %v2391
        %2395 = vrot.lane.b32.xlu0 %v2393, 2
        %v2396 = vpop.permute.xlu0 %2395
        %2397 = vrot.lane.b32.xlu0 %v2394, 2
        %v2398 = vpop.permute.xlu0 %2397
        %v2399 = vrot.slane %v2396, 4
        %v2400 = vrot.slane %v2398, 4
        %v2401 = vsel %vm560, %v2399, %v2400
        %v2402 = vsel %vm882, %v2396, %v2401
        %v2403 = vsel %vm882, %v2398, %v2400
        %2406 = vst [vmem:[#allocation3 + $0x78] sm:$0xff] %v2402
        %2407 = vst [vmem:[#allocation3 + $0x80] sm:$0xf] %v2403
        %v2408 = vld [vmem:[#allocation2] sm:$0xff]
        %v2409 = vld [vmem:[#allocation2 + $0x8] sm:$0xff]
        %v2410 = vld [vmem:[#allocation2 + $0x10] sm:$0xff]
        %v2411 = vld [vmem:[#allocation2 + $0x18] sm:$0xff]
        %v2412 = vpack.c.bf16 %v2408, %v2408
        %v2413 = vpack.c.bf16 %v2409, %v2409
        %v2414 = vpack.c.bf16 %v2410, %v2410
        %v2415 = vpack.c.bf16 %v2411, %v2411
        %v2420 = vunpack.c.l.b16 %v2412
        %v2421 = vunpack.c.l.b16 %v2413
        %v2422 = vunpack.c.l.b16 %v2414
        %v2423 = vunpack.c.l.b16 %v2415
        %v2424 = vpack.c.b16 %v2421, %v2420
        %v2425 = vpack.c.b16 %v2423, %v2422
        %2426 = vrot.lane.b32.xlu0 %v2424, 1
        %v2427 = vpop.permute.xlu0 %2426
        %2428 = vrot.lane.b32.xlu0 %v2425, 1
        %v2429 = vpop.permute.xlu0 %2428
        %v2430 = vrot.slane %v2427, 4
        %v2431 = vrot.slane %v2429, 4
        %v2432 = vsel %vm560, %v2430, %v2431
        %v2433 = vsel %vm914, %v2427, %v2432
        %v2434 = vsel %vm914, %v2429, %v2431
        %2437 = vst [vmem:[#allocation3 + $0x84] sm:$0xff] %v2433
        %2438 = vst [vmem:[#allocation3 + $0x8c] sm:$0xf] %v2434
        %v2439 = vld [vmem:[#allocation2 + $0x8] sm:$0xff]
        %v2440 = vld [vmem:[#allocation2 + $0x10] sm:$0xff]
        %v2441 = vld [vmem:[#allocation2 + $0x18] sm:$0xff]
        %v2442 = vpack.c.bf16 %v2439, %v2439
        %v2443 = vpack.c.bf16 %v2440, %v2440
        %v2444 = vpack.c.bf16 %v2441, %v2441
        %v2448 = vunpack.c.l.b16 %v2442
        %v2449 = vunpack.c.l.b16 %v2443
        %v2450 = vunpack.c.l.b16 %v2444
        %v2451 = vpack.c.b16 %v2449, %v2448
        %v2452 = vpack.c.b16 %v2450, %v2450
        %2455 = vst [vmem:[#allocation3 + $0x90] sm:$0xff] %v2451
        %2456 = vst [vmem:[#allocation3 + $0x98] sm:$0xf] %v2452
        %v2457 = vld [vmem:[#allocation2 + $0x8] sm:$0xff]
        %v2458 = vld [vmem:[#allocation2 + $0x10] sm:$0xff]
        %v2459 = vld [vmem:[#allocation2 + $0x18] sm:$0xff]
        %v2460 = vld [vmem:[#allocation2 + $0x20] sm:$0xff]
        %v2461 = vpack.c.bf16 %v2457, %v2457
        %v2462 = vpack.c.bf16 %v2458, %v2458
        %v2463 = vpack.c.bf16 %v2459, %v2459
        %v2464 = vpack.c.bf16 %v2460, %v2460
        %v2469 = vunpack.c.l.b16 %v2461
        %v2470 = vunpack.c.l.b16 %v2462
        %v2471 = vunpack.c.l.b16 %v2463
        %v2472 = vunpack.c.l.b16 %v2464
        %v2473 = vpack.c.b16 %v2470, %v2469
        %v2474 = vpack.c.b16 %v2472, %v2471
        %2475 = vrot.lane.b32.xlu0 %v2473, 127
        %v2476 = vpop.permute.xlu0 %2475
        %2477 = vrot.lane.b32.xlu0 %v2474, 127
        %v2478 = vpop.permute.xlu0 %2477
        %v2479 = vrot.slane %v2476, 4
        %v2480 = vrot.slane %v2478, 4
        %v2481 = vsel %vm560, %v2479, %v2480
        %v2482 = vsel %vm964, %v2476, %v2481
        %v2483 = vsel %vm964, %v2478, %v2480
        %2486 = vst [vmem:[#allocation3 + $0x9c] sm:$0xff] %v2482
        %2487 = vst [vmem:[#allocation3 + $0xa4] sm:$0xf] %v2483
        %v2488 = vld [vmem:[#allocation2 + $0x8] sm:$0xff]
        %v2489 = vld [vmem:[#allocation2 + $0x10] sm:$0xff]
        %v2490 = vld [vmem:[#allocation2 + $0x18] sm:$0xff]
        %v2491 = vld [vmem:[#allocation2 + $0x20] sm:$0xff]
        %v2492 = vpack.c.bf16 %v2488, %v2488
        %v2493 = vpack.c.bf16 %v2489, %v2489
        %v2494 = vpack.c.bf16 %v2490, %v2490
        %v2495 = vpack.c.bf16 %v2491, %v2491
        %v2500 = vunpack.c.l.b16 %v2492
        %v2501 = vunpack.c.l.b16 %v2493
        %v2502 = vunpack.c.l.b16 %v2494
        %v2503 = vunpack.c.l.b16 %v2495
        %v2504 = vpack.c.b16 %v2501, %v2500
        %v2505 = vpack.c.b16 %v2503, %v2502
        %2506 = vrot.lane.b32.xlu0 %v2504, 126
        %v2507 = vpop.permute.xlu0 %2506
        %2508 = vrot.lane.b32.xlu0 %v2505, 126
        %v2509 = vpop.permute.xlu0 %2508
        %v2510 = vrot.slane %v2507, 4
        %v2511 = vrot.slane %v2509, 4
        %v2512 = vsel %vm560, %v2510, %v2511
        %v2513 = vsel %vm996, %v2507, %v2512
        %v2514 = vsel %vm996, %v2509, %v2511
        %2517 = vst [vmem:[#allocation3 + $0xa8] sm:$0xff] %v2513
        %2518 = vst [vmem:[#allocation3 + $0xb0] sm:$0xf] %v2514
        %v2519 = vld [vmem:[#allocation2 + $0x8] sm:$0xff]
        %v2520 = vld [vmem:[#allocation2 + $0x10] sm:$0xff]
        %v2521 = vld [vmem:[#allocation2 + $0x18] sm:$0xff]
        %v2522 = vld [vmem:[#allocation2 + $0x20] sm:$0xff]
        %v2523 = vpack.c.bf16 %v2519, %v2519
        %v2524 = vpack.c.bf16 %v2520, %v2520
        %v2525 = vpack.c.bf16 %v2521, %v2521
        %v2526 = vpack.c.bf16 %v2522, %v2522
        %v2531 = vunpack.c.l.b16 %v2523
        %v2532 = vunpack.c.l.b16 %v2524
        %v2533 = vunpack.c.l.b16 %v2525
        %v2534 = vunpack.c.l.b16 %v2526
        %v2535 = vpack.c.b16 %v2532, %v2531
        %v2536 = vpack.c.b16 %v2534, %v2533
        %2537 = vrot.lane.b32.xlu0 %v2535, 110
        %v2538 = vpop.permute.xlu0 %2537
        %2539 = vrot.lane.b32.xlu0 %v2536, 110
        %v2540 = vpop.permute.xlu0 %2539
        %v2541 = vrot.slane %v2538, 4
        %v2542 = vrot.slane %v2540, 4
        %v2543 = vsel %vm560, %v2541, %v2542
        %v2544 = vsel %vm1028, %v2538, %v2543
        %v2545 = vsel %vm1028, %v2540, %v2542
        %2548 = vst [vmem:[#allocation3 + $0xb4] sm:$0xff] %v2544
        %2549 = vst [vmem:[#allocation3 + $0xbc] sm:$0xf] %v2545
        %v2550 = vld [vmem:[#allocation2 + $0x8] sm:$0xff]
        %v2551 = vld [vmem:[#allocation2 + $0x10] sm:$0xff]
        %v2552 = vld [vmem:[#allocation2 + $0x18] sm:$0xff]
        %v2553 = vld [vmem:[#allocation2 + $0x20] sm:$0xff]
        %v2554 = vpack.c.bf16 %v2550, %v2550
        %v2555 = vpack.c.bf16 %v2551, %v2551
        %v2556 = vpack.c.bf16 %v2552, %v2552
        %v2557 = vpack.c.bf16 %v2553, %v2553
        %v2562 = vunpack.c.l.b16 %v2554
        %v2563 = vunpack.c.l.b16 %v2555
        %v2564 = vunpack.c.l.b16 %v2556
        %v2565 = vunpack.c.l.b16 %v2557
        %v2566 = vpack.c.b16 %v2563, %v2562
        %v2567 = vpack.c.b16 %v2565, %v2564
        %2568 = vrot.lane.b32.xlu0 %v2566, 109
        %v2569 = vpop.permute.xlu0 %2568
        %2570 = vrot.lane.b32.xlu0 %v2567, 109
        %v2571 = vpop.permute.xlu0 %2570
        %v2572 = vrot.slane %v2569, 4
        %v2573 = vrot.slane %v2571, 4
        %v2574 = vsel %vm560, %v2572, %v2573
        %v2575 = vsel %vm1060, %v2569, %v2574
        %v2576 = vsel %vm1060, %v2571, %v2573
        %2579 = vst [vmem:[#allocation3 + $0xc0] sm:$0xff] %v2575
        %2580 = vst [vmem:[#allocation3 + $0xc8] sm:$0xf] %v2576
        %v2581 = vld [vmem:[#allocation2 + $0x8] sm:$0xff]
        %v2582 = vld [vmem:[#allocation2 + $0x10] sm:$0xff]
        %v2583 = vld [vmem:[#allocation2 + $0x18] sm:$0xff]
        %v2584 = vld [vmem:[#allocation2 + $0x20] sm:$0xff]
        %v2585 = vpack.c.bf16 %v2581, %v2581
        %v2586 = vpack.c.bf16 %v2582, %v2582
        %v2587 = vpack.c.bf16 %v2583, %v2583
        %v2588 = vpack.c.bf16 %v2584, %v2584
        %v2593 = vunpack.c.l.b16 %v2585
        %v2594 = vunpack.c.l.b16 %v2586
        %v2595 = vunpack.c.l.b16 %v2587
        %v2596 = vunpack.c.l.b16 %v2588
        %v2597 = vpack.c.b16 %v2594, %v2593
        %v2598 = vpack.c.b16 %v2596, %v2595
        %2599 = vrot.lane.b32.xlu0 %v2597, 108
        %v2600 = vpop.permute.xlu0 %2599
        %2601 = vrot.lane.b32.xlu0 %v2598, 108
        %v2602 = vpop.permute.xlu0 %2601
        %v2603 = vrot.slane %v2600, 4
        %v2604 = vrot.slane %v2602, 4
        %v2605 = vsel %vm560, %v2603, %v2604
        %v2606 = vsel %vm1092, %v2600, %v2605
        %v2607 = vsel %vm1092, %v2602, %v2604
        %2610 = vst [vmem:[#allocation3 + $0xcc] sm:$0xff] %v2606
        %2611 = vst [vmem:[#allocation3 + $0xd4] sm:$0xf] %v2607
        %v2612 = vld [vmem:[#allocation2 + $0x8] sm:$0xff]
        %v2613 = vld [vmem:[#allocation2 + $0x10] sm:$0xff]
        %v2614 = vld [vmem:[#allocation2 + $0x18] sm:$0xff]
        %v2615 = vld [vmem:[#allocation2 + $0x20] sm:$0xff]
        %v2616 = vpack.c.bf16 %v2612, %v2612
        %v2617 = vpack.c.bf16 %v2613, %v2613
        %v2618 = vpack.c.bf16 %v2614, %v2614
        %v2619 = vpack.c.bf16 %v2615, %v2615
        %v2624 = vunpack.c.l.b16 %v2616
        %v2625 = vunpack.c.l.b16 %v2617
        %v2626 = vunpack.c.l.b16 %v2618
        %v2627 = vunpack.c.l.b16 %v2619
        %v2628 = vpack.c.b16 %v2625, %v2624
        %v2629 = vpack.c.b16 %v2627, %v2626
        %2630 = vrot.lane.b32.xlu0 %v2628, 107
        %v2631 = vpop.permute.xlu0 %2630
        %2632 = vrot.lane.b32.xlu0 %v2629, 107
        %v2633 = vpop.permute.xlu0 %2632
        %v2634 = vrot.slane %v2631, 4
        %v2635 = vrot.slane %v2633, 4
        %v2636 = vsel %vm560, %v2634, %v2635
        %v2637 = vsel %vm1124, %v2631, %v2636
        %v2638 = vsel %vm1124, %v2633, %v2635
        %2641 = vst [vmem:[#allocation3 + $0xd8] sm:$0xff] %v2637
        %2642 = vst [vmem:[#allocation3 + $0xe0] sm:$0xf] %v2638
        %v2643 = vld [vmem:[#allocation2 + $0x8] sm:$0xff]
        %v2644 = vld [vmem:[#allocation2 + $0x10] sm:$0xff]
        %v2645 = vld [vmem:[#allocation2 + $0x18] sm:$0xff]
        %v2646 = vld [vmem:[#allocation2 + $0x20] sm:$0xff]
        %v2647 = vpack.c.bf16 %v2643, %v2643
        %v2648 = vpack.c.bf16 %v2644, %v2644
        %v2649 = vpack.c.bf16 %v2645, %v2645
        %v2650 = vpack.c.bf16 %v2646, %v2646
        %v2655 = vunpack.c.l.b16 %v2647
        %v2656 = vunpack.c.l.b16 %v2648
        %v2657 = vunpack.c.l.b16 %v2649
        %v2658 = vunpack.c.l.b16 %v2650
        %v2659 = vpack.c.b16 %v2656, %v2655
        %v2660 = vpack.c.b16 %v2658, %v2657
        %2661 = vrot.lane.b32.xlu0 %v2659, 106
        %v2662 = vpop.permute.xlu0 %2661
        %2663 = vrot.lane.b32.xlu0 %v2660, 106
        %v2664 = vpop.permute.xlu0 %2663
        %v2665 = vrot.slane %v2662, 4
        %v2666 = vrot.slane %v2664, 4
        %v2667 = vsel %vm560, %v2665, %v2666
        %v2668 = vsel %vm1156, %v2662, %v2667
        %v2669 = vsel %vm1156, %v2664, %v2666
        %2672 = vst [vmem:[#allocation3 + $0xe4] sm:$0xff] %v2668
        %2673 = vst [vmem:[#allocation3 + $0xec] sm:$0xf] %v2669
        %v2674 = vld [vmem:[#allocation2 + $0x8] sm:$0xff]
        %v2675 = vld [vmem:[#allocation2 + $0x10] sm:$0xff]
        %v2676 = vld [vmem:[#allocation2 + $0x18] sm:$0xff]
        %v2677 = vld [vmem:[#allocation2 + $0x20] sm:$0xff]
        %v2678 = vpack.c.bf16 %v2674, %v2674
        %v2679 = vpack.c.bf16 %v2675, %v2675
        %v2680 = vpack.c.bf16 %v2676, %v2676
        %v2681 = vpack.c.bf16 %v2677, %v2677
        %v2686 = vunpack.c.l.b16 %v2678
        %v2687 = vunpack.c.l.b16 %v2679
        %v2688 = vunpack.c.l.b16 %v2680
        %v2689 = vunpack.c.l.b16 %v2681
        %v2690 = vpack.c.b16 %v2687, %v2686
        %v2691 = vpack.c.b16 %v2689, %v2688
        %2692 = vrot.lane.b32.xlu0 %v2690, 90
        %v2693 = vpop.permute.xlu0 %2692
        %2694 = vrot.lane.b32.xlu0 %v2691, 90
        %v2695 = vpop.permute.xlu0 %2694
        %v2696 = vrot.slane %v2693, 4
        %v2697 = vrot.slane %v2695, 4
        %v2698 = vsel %vm560, %v2696, %v2697
        %v2699 = vsel %vm1188, %v2693, %v2698
        %v2700 = vsel %vm1188, %v2695, %v2697
        %2703 = vst [vmem:[#allocation3 + $0xf0] sm:$0xff] %v2699
        %2704 = vst [vmem:[#allocation3 + $0xf8] sm:$0xf] %v2700
        %v2705 = vld [vmem:[#allocation2 + $0x8] sm:$0xff]
        %v2706 = vld [vmem:[#allocation2 + $0x10] sm:$0xff]
        %v2707 = vld [vmem:[#allocation2 + $0x18] sm:$0xff]
        %v2708 = vld [vmem:[#allocation2 + $0x20] sm:$0xff]
        %v2709 = vpack.c.bf16 %v2705, %v2705
        %v2710 = vpack.c.bf16 %v2706, %v2706
        %v2711 = vpack.c.bf16 %v2707, %v2707
        %v2712 = vpack.c.bf16 %v2708, %v2708
        %v2717 = vunpack.c.l.b16 %v2709
        %v2718 = vunpack.c.l.b16 %v2710
        %v2719 = vunpack.c.l.b16 %v2711
        %v2720 = vunpack.c.l.b16 %v2712
        %v2721 = vpack.c.b16 %v2718, %v2717
        %v2722 = vpack.c.b16 %v2720, %v2719
        %2723 = vrot.lane.b32.xlu0 %v2721, 89
        %v2724 = vpop.permute.xlu0 %2723
        %2725 = vrot.lane.b32.xlu0 %v2722, 89
        %v2726 = vpop.permute.xlu0 %2725
        %v2727 = vrot.slane %v2724, 4
        %v2728 = vrot.slane %v2726, 4
        %v2729 = vsel %vm560, %v2727, %v2728
        %v2730 = vsel %vm1220, %v2724, %v2729
        %v2731 = vsel %vm1220, %v2726, %v2728
        %2734 = vst [vmem:[#allocation3 + $0xfc] sm:$0xff] %v2730
        %2735 = vst [vmem:[#allocation3 + $0x104] sm:$0xf] %v2731
        %v2736 = vld [vmem:[#allocation2 + $0x8] sm:$0xff]
        %v2737 = vld [vmem:[#allocation2 + $0x10] sm:$0xff]
        %v2738 = vld [vmem:[#allocation2 + $0x18] sm:$0xff]
        %v2739 = vld [vmem:[#allocation2 + $0x20] sm:$0xff]
        %v2740 = vpack.c.bf16 %v2736, %v2736
        %v2741 = vpack.c.bf16 %v2737, %v2737
        %v2742 = vpack.c.bf16 %v2738, %v2738
        %v2743 = vpack.c.bf16 %v2739, %v2739
        %v2748 = vunpack.c.l.b16 %v2740
        %v2749 = vunpack.c.l.b16 %v2741
        %v2750 = vunpack.c.l.b16 %v2742
        %v2751 = vunpack.c.l.b16 %v2743
        %v2752 = vpack.c.b16 %v2749, %v2748
        %v2753 = vpack.c.b16 %v2751, %v2750
        %2754 = vrot.lane.b32.xlu0 %v2752, 88
        %v2755 = vpop.permute.xlu0 %2754
        %2756 = vrot.lane.b32.xlu0 %v2753, 88
        %v2757 = vpop.permute.xlu0 %2756
        %v2758 = vrot.slane %v2755, 4
        %v2759 = vrot.slane %v2757, 4
        %v2760 = vsel %vm560, %v2758, %v2759
        %v2761 = vsel %vm1252, %v2755, %v2760
        %v2762 = vsel %vm1252, %v2757, %v2759
        %2765 = vst [vmem:[#allocation3 + $0x108] sm:$0xff] %v2761
        %2766 = vst [vmem:[#allocation3 + $0x110] sm:$0xf] %v2762
        %v2767 = vld [vmem:[#allocation2 + $0x8] sm:$0xff]
        %v2768 = vld [vmem:[#allocation2 + $0x10] sm:$0xff]
        %v2769 = vld [vmem:[#allocation2 + $0x18] sm:$0xff]
        %v2770 = vld [vmem:[#allocation2 + $0x20] sm:$0xff]
        %v2771 = vpack.c.bf16 %v2767, %v2767
        %v2772 = vpack.c.bf16 %v2768, %v2768
        %v2773 = vpack.c.bf16 %v2769, %v2769
        %v2774 = vpack.c.bf16 %v2770, %v2770
        %v2779 = vunpack.c.l.b16 %v2771
        %v2780 = vunpack.c.l.b16 %v2772
        %v2781 = vunpack.c.l.b16 %v2773
        %v2782 = vunpack.c.l.b16 %v2774
        %v2783 = vpack.c.b16 %v2780, %v2779
        %v2784 = vpack.c.b16 %v2782, %v2781
        %2785 = vrot.lane.b32.xlu0 %v2783, 87
        %v2786 = vpop.permute.xlu0 %2785
        %2787 = vrot.lane.b32.xlu0 %v2784, 87
        %v2788 = vpop.permute.xlu0 %2787
        %v2789 = vrot.slane %v2786, 4
        %v2790 = vrot.slane %v2788, 4
        %v2791 = vsel %vm560, %v2789, %v2790
        %v2792 = vsel %vm1284, %v2786, %v2791
        %v2793 = vsel %vm1284, %v2788, %v2790
        %2796 = vst [vmem:[#allocation3 + $0x114] sm:$0xff] %v2792
        %2797 = vst [vmem:[#allocation3 + $0x11c] sm:$0xf] %v2793
        %v2798 = vld [vmem:[#allocation2 + $0x8] sm:$0xff]
        %v2799 = vld [vmem:[#allocation2 + $0x10] sm:$0xff]
        %v2800 = vld [vmem:[#allocation2 + $0x18] sm:$0xff]
        %v2801 = vld [vmem:[#allocation2 + $0x20] sm:$0xff]
        %v2802 = vpack.c.bf16 %v2798, %v2798
        %v2803 = vpack.c.bf16 %v2799, %v2799
        %v2804 = vpack.c.bf16 %v2800, %v2800
        %v2805 = vpack.c.bf16 %v2801, %v2801
        %v2810 = vunpack.c.l.b16 %v2802
        %v2811 = vunpack.c.l.b16 %v2803
        %v2812 = vunpack.c.l.b16 %v2804
        %v2813 = vunpack.c.l.b16 %v2805
        %v2814 = vpack.c.b16 %v2811, %v2810
        %v2815 = vpack.c.b16 %v2813, %v2812
        %2816 = vrot.lane.b32.xlu0 %v2814, 86
        %v2817 = vpop.permute.xlu0 %2816
        %2818 = vrot.lane.b32.xlu0 %v2815, 86
        %v2819 = vpop.permute.xlu0 %2818
        %v2820 = vrot.slane %v2817, 4
        %v2821 = vrot.slane %v2819, 4
        %v2822 = vsel %vm560, %v2820, %v2821
        %v2823 = vsel %vm1316, %v2817, %v2822
        %v2824 = vsel %vm1316, %v2819, %v2821
        %2827 = vst [vmem:[#allocation3 + $0x120] sm:$0xff] %v2823
        %2828 = vst [vmem:[#allocation3 + $0x128] sm:$0xf] %v2824
        %s2829 = scalar_lea.vmem %s4, 8
        %v2830 = vld [vmem:[%s2829] sm:$0xff]
        %v2831 = vld [vmem:[#allocation3] sm:$0xff]
        %v2832 = vld [vmem:[#allocation3 + $0x8] sm:$0xf]
        %v2833 = vld [vmem:[#allocation3 + $0xc] sm:$0xff]
        %v2834 = vld [vmem:[#allocation3 + $0x14] sm:$0xf]
        %v2835 = vld [vmem:[#allocation3 + $0x18] sm:$0xff]
        %v2836 = vld [vmem:[#allocation3 + $0x20] sm:$0xf]
        %v2837 = vld [vmem:[#allocation3 + $0x24] sm:$0xff]
        %v2838 = vld [vmem:[#allocation3 + $0x2c] sm:$0xf]
        %v2839 = vld [vmem:[#allocation3 + $0x30] sm:$0xff]
        %v2840 = vld [vmem:[#allocation3 + $0x38] sm:$0xf]
        %v2841 = vld [vmem:[#allocation3 + $0x3c] sm:$0xff]
        %v2842 = vld [vmem:[#allocation3 + $0x44] sm:$0xf]
        %v2843 = vld [vmem:[#allocation3 + $0x48] sm:$0xff]
        %v2844 = vld [vmem:[#allocation3 + $0x50] sm:$0xf]
        %v2845 = vld [vmem:[#allocation3 + $0x54] sm:$0xff]
        %v2846 = vld [vmem:[#allocation3 + $0x5c] sm:$0xf]
        %v2847 = vld [vmem:[#allocation3 + $0x60] sm:$0xff]
        %v2848 = vld [vmem:[#allocation3 + $0x68] sm:$0xf]
        %v2849 = vld [vmem:[#allocation3 + $0x6c] sm:$0xff]
        %v2850 = vld [vmem:[#allocation3 + $0x74] sm:$0xf]
        %v2851 = vld [vmem:[#allocation3 + $0x78] sm:$0xff]
        %v2852 = vld [vmem:[#allocation3 + $0x80] sm:$0xf]
        %v2853 = vld [vmem:[#allocation3 + $0x84] sm:$0xff]
        %v2854 = vld [vmem:[#allocation3 + $0x8c] sm:$0xf]
        %v2855 = vld [vmem:[#allocation3 + $0x90] sm:$0xff]
        %v2856 = vld [vmem:[#allocation3 + $0x98] sm:$0xf]
        %v2857 = vld [vmem:[#allocation3 + $0x9c] sm:$0xff]
        %v2858 = vld [vmem:[#allocation3 + $0xa4] sm:$0xf]
        %v2859 = vld [vmem:[#allocation3 + $0xa8] sm:$0xff]
        %v2860 = vld [vmem:[#allocation3 + $0xb0] sm:$0xf]
        %v2861 = vld [vmem:[#allocation3 + $0xb4] sm:$0xff]
        %v2862 = vld [vmem:[#allocation3 + $0xbc] sm:$0xf]
        %v2863 = vld [vmem:[#allocation3 + $0xc0] sm:$0xff]
        %v2864 = vld [vmem:[#allocation3 + $0xc8] sm:$0xf]
        %v2865 = vld [vmem:[#allocation3 + $0xcc] sm:$0xff]
        %v2866 = vld [vmem:[#allocation3 + $0xd4] sm:$0xf]
        %v2867 = vld [vmem:[#allocation3 + $0xd8] sm:$0xff]
        %v2868 = vld [vmem:[#allocation3 + $0xe0] sm:$0xf]
        %v2869 = vld [vmem:[#allocation3 + $0xe4] sm:$0xff]
        %v2870 = vld [vmem:[#allocation3 + $0xec] sm:$0xf]
        %v2871 = vld [vmem:[#allocation3 + $0xf0] sm:$0xff]
        %v2872 = vld [vmem:[#allocation3 + $0xf8] sm:$0xf]
        %v2873 = vld [vmem:[#allocation3 + $0xfc] sm:$0xff]
        %v2874 = vld [vmem:[#allocation3 + $0x104] sm:$0xf]
        %v2875 = vld [vmem:[#allocation3 + $0x108] sm:$0xff]
        %v2876 = vld [vmem:[#allocation3 + $0x110] sm:$0xf]
        %v2877 = vld [vmem:[#allocation3 + $0x114] sm:$0xff]
        %v2878 = vld [vmem:[#allocation3 + $0x11c] sm:$0xf]
        %v2879 = vld [vmem:[#allocation3 + $0x120] sm:$0xff]
        %v2880 = vld [vmem:[#allocation3 + $0x128] sm:$0xf]
        %v2882 = vunpack.c.l.b16 %v2830
        %v2883 = vunpack.c.h.b16 %v2830
        %v2884 = vpack.c.b16 %v2882, %v2882
        %v2885 = vpack.c.b16 %v2883, %v2883
        %v2937 = vunpack.c.l.b16 %v2831
        %v2938 = vunpack.c.h.b16 %v2831
        %v2939 = vunpack.c.l.b16 %v2832
        %v2940 = vunpack.c.l.b16 %v2833
        %v2941 = vunpack.c.h.b16 %v2833
        %v2942 = vunpack.c.l.b16 %v2834
        %v2943 = vunpack.c.l.b16 %v2835
        %v2944 = vunpack.c.h.b16 %v2835
        %v2945 = vunpack.c.l.b16 %v2836
        %v2946 = vunpack.c.l.b16 %v2837
        %v2947 = vunpack.c.h.b16 %v2837
        %v2948 = vunpack.c.l.b16 %v2838
        %v2949 = vunpack.c.l.b16 %v2839
        %v2950 = vunpack.c.h.b16 %v2839
        %v2951 = vunpack.c.l.b16 %v2840
        %v2952 = vunpack.c.l.b16 %v2841
        %v2953 = vunpack.c.h.b16 %v2841
        %v2954 = vunpack.c.l.b16 %v2842
        %v2955 = vunpack.c.l.b16 %v2843
        %v2956 = vunpack.c.h.b16 %v2843
        %v2957 = vunpack.c.l.b16 %v2844
        %v2958 = vunpack.c.l.b16 %v2845
        %v2959 = vunpack.c.h.b16 %v2845
        %v2960 = vunpack.c.l.b16 %v2846
        %v2961 = vunpack.c.l.b16 %v2847
        %v2962 = vunpack.c.h.b16 %v2847
        %v2963 = vunpack.c.l.b16 %v2848
        %v2964 = vunpack.c.l.b16 %v2849
        %v2965 = vunpack.c.h.b16 %v2849
        %v2966 = vunpack.c.l.b16 %v2850
        %v2967 = vunpack.c.l.b16 %v2851
        %v2968 = vunpack.c.h.b16 %v2851
        %v2969 = vunpack.c.l.b16 %v2852
        %v2970 = vunpack.c.l.b16 %v2853
        %v2971 = vunpack.c.h.b16 %v2853
        %v2972 = vunpack.c.l.b16 %v2854
        %v2973 = vunpack.c.l.b16 %v2855
        %v2974 = vunpack.c.h.b16 %v2855
        %v2975 = vunpack.c.l.b16 %v2856
        %v2976 = vunpack.c.l.b16 %v2857
        %v2977 = vunpack.c.h.b16 %v2857
        %v2978 = vunpack.c.l.b16 %v2858
        %v2979 = vunpack.c.l.b16 %v2859
        %v2980 = vunpack.c.h.b16 %v2859
        %v2981 = vunpack.c.l.b16 %v2860
        %v2982 = vunpack.c.l.b16 %v2861
        %v2983 = vunpack.c.h.b16 %v2861
        %v2984 = vunpack.c.l.b16 %v2862
        %v2985 = vunpack.c.l.b16 %v2863
        %v2986 = vunpack.c.h.b16 %v2863
        %v2987 = vunpack.c.l.b16 %v2864
        %v2988 = vunpack.c.l.b16 %v2865
        %v2989 = vunpack.c.h.b16 %v2865
        %v2990 = vunpack.c.l.b16 %v2866
        %v2991 = vunpack.c.l.b16 %v2867
        %v2992 = vunpack.c.h.b16 %v2867
        %v2993 = vunpack.c.l.b16 %v2868
        %v2994 = vunpack.c.l.b16 %v2869
        %v2995 = vunpack.c.h.b16 %v2869
        %v2996 = vunpack.c.l.b16 %v2870
        %v2997 = vunpack.c.l.b16 %v2871
        %v2998 = vunpack.c.h.b16 %v2871
        %v2999 = vunpack.c.l.b16 %v2872
        %v3000 = vunpack.c.l.b16 %v2873
        %v3001 = vunpack.c.h.b16 %v2873
        %v3002 = vunpack.c.l.b16 %v2874
        %v3003 = vunpack.c.l.b16 %v2875
        %v3004 = vunpack.c.h.b16 %v2875
        %v3005 = vunpack.c.l.b16 %v2876
        %v3006 = vunpack.c.l.b16 %v2877
        %v3007 = vunpack.c.h.b16 %v2877
        %v3008 = vunpack.c.l.b16 %v2878
        %v3009 = vunpack.c.l.b16 %v2879
        %v3010 = vunpack.c.h.b16 %v2879
        %v3011 = vunpack.c.l.b16 %v2880
        %v3012 = vpack.c.b16 %v2940, %v2937
        %v3013 = vpack.c.b16 %v2941, %v2938
        %v3014 = vpack.c.b16 %v2942, %v2939
        %v3015 = vpack.c.b16 %v2946, %v2943
        %v3016 = vpack.c.b16 %v2947, %v2944
        %v3017 = vpack.c.b16 %v2948, %v2945
        %v3018 = vpack.c.b16 %v2952, %v2949
        %v3019 = vpack.c.b16 %v2953, %v2950
        %v3020 = vpack.c.b16 %v2954, %v2951
        %v3021 = vpack.c.b16 %v2958, %v2955
        %v3022 = vpack.c.b16 %v2959, %v2956
        %v3023 = vpack.c.b16 %v2960, %v2957
        %v3024 = vpack.c.b16 %v2964, %v2961
        %v3025 = vpack.c.b16 %v2965, %v2962
        %v3026 = vpack.c.b16 %v2966, %v2963
        %v3027 = vpack.c.b16 %v2970, %v2967
        %v3028 = vpack.c.b16 %v2971, %v2968
        %v3029 = vpack.c.b16 %v2972, %v2969
        %v3030 = vpack.c.b16 %v2976, %v2973
        %v3031 = vpack.c.b16 %v2977, %v2974
        %v3032 = vpack.c.b16 %v2978, %v2975
        %v3033 = vpack.c.b16 %v2982, %v2979
        %v3034 = vpack.c.b16 %v2983, %v2980
        %v3035 = vpack.c.b16 %v2984, %v2981
        %v3036 = vpack.c.b16 %v2988, %v2985
        %v3037 = vpack.c.b16 %v2989, %v2986
        %v3038 = vpack.c.b16 %v2990, %v2987
        %v3039 = vpack.c.b16 %v2994, %v2991
        %v3040 = vpack.c.b16 %v2995, %v2992
        %v3041 = vpack.c.b16 %v2996, %v2993
        %v3042 = vpack.c.b16 %v3000, %v2997
        %v3043 = vpack.c.b16 %v3001, %v2998
        %v3044 = vpack.c.b16 %v3002, %v2999
        %v3045 = vpack.c.b16 %v3006, %v3003
        %v3046 = vpack.c.b16 %v3007, %v3004
        %v3047 = vpack.c.b16 %v3008, %v3005
        %v3048 = vpack.c.b16 %v3009, %v3009
        %v3049 = vpack.c.b16 %v3010, %v3010
        %v3050 = vpack.c.b16 %v3011, %v3011
        %v3088 = vsel %vm1580, %v2885, 0
        %v3091 = vsel %vm1584, %v3048, 0
        %v3094 = vsel %vm1584, %v3049, 0
        %v3097 = vsel %vm1584, %v3050, 0
        %3099 = vmatprep.subr.bf16.mxu0 %v3013
        %3100 = vmatpush1.bf16.msra.mxu0 %v3012
        %3101 = vmatprep.subr.bf16.mxu0 %v3016
        %3102 = vmatpush1.bf16.msra.mxu0 %v3015
        %3103 = vmatprep.subr.bf16.mxu0 %v3019
        %3104 = vmatpush1.bf16.msra.mxu0 %v3018
        %3105 = vmatprep.subr.bf16.mxu0 %v3022
        %3106 = vmatpush1.bf16.msra.mxu0 %v3021
        %3107 = vmatprep.subr.bf16.mxu0 %v3025
        %3108 = vmatpush1.bf16.msra.mxu0 %v3024
        %3109 = vmatprep.subr.bf16.mxu0 %v3028
        %3110 = vmatpush1.bf16.msra.mxu0 %v3027
        %3111 = vmatprep.subr.bf16.mxu0 %v3031
        %3112 = vmatpush1.bf16.msra.mxu0 %v3030
        %3113 = vmatprep.subr.bf16.mxu0 %v3034
        %3114 = vmatpush1.bf16.msra.mxu0 %v3033
        %3115 = vmatprep.subr.bf16.mxu0 %v3037
        %3116 = vmatpush1.bf16.msra.mxu0 %v3036
        %3117 = vmatprep.subr.bf16.mxu0 %v3040
        %3118 = vmatpush1.bf16.msra.mxu0 %v3039
        %3119 = vmatprep.subr.bf16.mxu0 %v3043
        %3120 = vmatpush1.bf16.msra.mxu0 %v3042
        %3121 = vmatprep.subr.bf16.mxu0 %v3046
        %3122 = vmatpush1.bf16.msra.mxu0 %v3045
        %3123 = vmatprep.subr.bf16.mxu0 %v3094
        %3124 = vmatpush1.bf16.msra.mxu0 %v3091
        %3125 = vmatprep.subr.bf16.mxu0 0
        %3126 = vmatpush1.bf16.msra.mxu0 0
        %3127 = vmatprep.subr.bf16.mxu0 0
        %3128 = vmatpush1.bf16.msra.mxu0 0
        %3129 = vmatprep.subr.bf16.mxu0 0
        %3130 = vmatpush1.bf16.msra.mxu0 0
        %3131 = vmatprep.mubr.bf16.mxu0 %v3088
        %3132 = vmatmul.mubr.bf16.gmra.mrb[0].mxu0 %v2884
        %v3133 = vpop.f32.mrb[0].mxu0
        %v3134 = vadd.f32 0.0, %v3133
        %v3135 = vpop.f32.mrb[0].mxu0
        %v3136 = vadd.f32 0.0, %v3135
        %v3137 = vpop.f32.mrb[0].mxu0
        %v3138 = vpop.f32.mrb[0].mxu0
        %3139 = vdwg.mxu0
        %3140 = vmatprep.subr.bf16.mxu0 0
        %3141 = vmatpush1.bf16.msra.mxu0 %v3014
        %3142 = vmatprep.subr.bf16.mxu0 0
        %3143 = vmatpush1.bf16.msra.mxu0 %v3017
        %3144 = vmatprep.subr.bf16.mxu0 0
        %3145 = vmatpush1.bf16.msra.mxu0 %v3020
        %3146 = vmatprep.subr.bf16.mxu0 0
        %3147 = vmatpush1.bf16.msra.mxu0 %v3023
        %3148 = vmatprep.subr.bf16.mxu0 0
        %3149 = vmatpush1.bf16.msra.mxu0 %v3026
        %3150 = vmatprep.subr.bf16.mxu0 0
        %3151 = vmatpush1.bf16.msra.mxu0 %v3029
        %3152 = vmatprep.subr.bf16.mxu0 0
        %3153 = vmatpush1.bf16.msra.mxu0 %v3032
        %3154 = vmatprep.subr.bf16.mxu0 0
        %3155 = vmatpush1.bf16.msra.mxu0 %v3035
        %3156 = vmatprep.subr.bf16.mxu0 0
        %3157 = vmatpush1.bf16.msra.mxu0 %v3038
        %3158 = vmatprep.subr.bf16.mxu0 0
        %3159 = vmatpush1.bf16.msra.mxu0 %v3041
        %3160 = vmatprep.subr.bf16.mxu0 0
        %3161 = vmatpush1.bf16.msra.mxu0 %v3044
        %3162 = vmatprep.subr.bf16.mxu0 0
        %3163 = vmatpush1.bf16.msra.mxu0 %v3047
        %3164 = vmatprep.subr.bf16.mxu0 0
        %3165 = vmatpush1.bf16.msra.mxu0 %v3097
        %3166 = vmatprep.subr.bf16.mxu0 0
        %3167 = vmatpush1.bf16.msra.mxu0 0
        %3168 = vmatprep.subr.bf16.mxu0 0
        %3169 = vmatpush1.bf16.msra.mxu0 0
        %3170 = vmatprep.subr.bf16.mxu0 0
        %3171 = vmatpush1.bf16.msra.mxu0 0
        %3172 = vmatprep.mubr.bf16.mxu0 %v3088
        %3173 = vmatmul.mubr.bf16.gmra.mrb[0].mxu0 %v2884
        %v3174 = vpop.f32.mrb[0].mxu0
        %v3175 = vadd.f32 0.0, %v3174
        %v3176 = vpop.f32.mrb[0].mxu0
        %v3177 = vpop.f32.mrb[0].mxu0
        %v3178 = vpop.f32.mrb[0].mxu0
        %3179 = vdwg.mxu0
        %s3180 = sld [smem:[#allocation6 + $0x1]]
        %s3181 = scalar_lea.vmem %s6, 8
        %v3182 = vld [vmem:[%s3181] sm:$0xff]
        %v3183 = vmul.f32 %v3134, %v3134
        %v3184 = vmul.f32 %v3136, %v3136
        %v3185 = vmul.f32 %v3175, %v3175
        %3187 = vset.pattern.permute.xlu0 0
        %3188 = vperm.xlu0 %3187, %v3182
        %v3189 = vpop.permute.xlu0 %3188
        %v3191 = vlaneseq
        %v3192 = vshrl.u32 %v3191, 7
        %v3193 = vsub.s32 0, %v3192
        %v3194 = vrot.slane %v3183, %v3193
        %v3195 = vlaneseq
        %v3196 = vshrl.u32 %v3195, 7
        %v3197 = vsub.s32 0, %v3196
        %v3198 = vrot.slane %v3184, %v3197
        %v3199 = vlaneseq
        %v3200 = vshrl.u32 %v3199, 7
        %v3201 = vsub.s32 0, %v3200
        %v3202 = vrot.slane %v3185, %v3201
        %v3203 = vmul.f32 %v3189, %v3194
        %v3204 = vmul.f32 %v3189, %v3198
        %v3205 = vmul.f32 %v3189, %v3202
        %3206 = vset.pattern.permute.xlu0 1
        %3207 = vperm.xlu0 %3206, %v3182
        %v3208 = vpop.permute.xlu0 %3207
        %v3210 = vlaneseq
        %v3211 = vshrl.u32 %v3210, 7
        %v3212 = vsub.s32 1, %v3211
        %v3213 = vrot.slane %v3183, %v3212
        %v3214 = vlaneseq
        %v3215 = vshrl.u32 %v3214, 7
        %v3216 = vsub.s32 1, %v3215
        %v3217 = vrot.slane %v3184, %v3216
        %v3218 = vlaneseq
        %v3219 = vshrl.u32 %v3218, 7
        %v3220 = vsub.s32 1, %v3219
        %v3221 = vrot.slane %v3185, %v3220
        %v3222 = vmul.f32 %v3208, %v3213
        %v3223 = vmul.f32 %v3208, %v3217
        %v3224 = vmul.f32 %v3208, %v3221
        %v3225 = vadd.f32 %v3203, %v3222
        %v3226 = vadd.f32 %v3204, %v3223
        %v3227 = vadd.f32 %v3205, %v3224
        %3228 = vset.pattern.permute.xlu0 2
        %3229 = vperm.xlu0 %3228, %v3182
        %v3230 = vpop.permute.xlu0 %3229
        %v3232 = vlaneseq
        %v3233 = vshrl.u32 %v3232, 7
        %v3234 = vsub.s32 2, %v3233
        %v3235 = vrot.slane %v3183, %v3234
        %v3236 = vlaneseq
        %v3237 = vshrl.u32 %v3236, 7
        %v3238 = vsub.s32 2, %v3237
        %v3239 = vrot.slane %v3184, %v3238
        %v3240 = vlaneseq
        %v3241 = vshrl.u32 %v3240, 7
        %v3242 = vsub.s32 2, %v3241
        %v3243 = vrot.slane %v3185, %v3242
        %v3244 = vmul.f32 %v3230, %v3235
        %v3245 = vmul.f32 %v3230, %v3239
        %v3246 = vmul.f32 %v3230, %v3243
        %v3247 = vadd.f32 %v3225, %v3244
        %v3248 = vadd.f32 %v3226, %v3245
        %v3249 = vadd.f32 %v3227, %v3246
        %3250 = vset.pattern.permute.xlu0 3
        %3251 = vperm.xlu0 %3250, %v3182
        %v3252 = vpop.permute.xlu0 %3251
        %v3254 = vlaneseq
        %v3255 = vshrl.u32 %v3254, 7
        %v3256 = vsub.s32 3, %v3255
        %v3257 = vrot.slane %v3183, %v3256
        %v3258 = vlaneseq
        %v3259 = vshrl.u32 %v3258, 7
        %v3260 = vsub.s32 3, %v3259
        %v3261 = vrot.slane %v3184, %v3260
        %v3262 = vlaneseq
        %v3263 = vshrl.u32 %v3262, 7
        %v3264 = vsub.s32 3, %v3263
        %v3265 = vrot.slane %v3185, %v3264
        %v3266 = vmul.f32 %v3252, %v3257
        %v3267 = vmul.f32 %v3252, %v3261
        %v3268 = vmul.f32 %v3252, %v3265
        %v3269 = vadd.f32 %v3247, %v3266
        %v3270 = vadd.f32 %v3248, %v3267
        %v3271 = vadd.f32 %v3249, %v3268
        %s3272 = scalar_lea.vmem %s7, 8
        %v3273 = vld [vmem:[%s3272] sm:$0xff]
        %3275 = vset.pattern.permute.xlu0 0
        %3276 = vperm.xlu0 %3275, %v3273
        %v3277 = vpop.permute.xlu0 %3276
        %v3279 = vadd.f32 %v3269, %v3277
        %v3280 = vadd.f32 %v3270, %v3277
        %v3281 = vadd.f32 %v3271, %v3277
        %v3282 = vrsqrt.pop %v3279
        %v3283 = vrsqrt.pop %v3280
        %v3284 = vrsqrt.pop %v3281
        %v3285 = vmul.f32 %v3134, %v3282
        %v3286 = vmul.f32 %v3136, %v3283
        %v3287 = vmul.f32 %v3175, %v3284
        %vm3288 = vcmp.ge.f32.partialorder %v3285, 0.0
        %vm3289 = vcmp.ge.f32.partialorder %v3286, 0.0
        %vm3290 = vcmp.ge.f32.partialorder %v3287, 0.0
        %v3291 = vstv %s3180
        %v3292 = vmul.f32 %v3291, %v3285
        %v3293 = vmul.f32 %v3291, %v3286
        %v3294 = vmul.f32 %v3291, %v3287
        %v3295 = vsel %vm3288, %v3285, %v3292
        %v3296 = vsel %vm3289, %v3286, %v3293
        %v3297 = vsel %vm3290, %v3287, %v3294
        %s3298 = scalar_lea.vmem %s5, 8
        %v3299 = vld [vmem:[%s3298] sm:$0xff]
        %3301 = vset.pattern.permute.xlu0 0
        %3302 = vperm.xlu0 %3301, %v3299
        %v3303 = vpop.permute.xlu0 %3302
        %v3305 = vlaneseq
        %v3306 = vshrl.u32 %v3305, 7
        %v3307 = vsub.s32 0, %v3306
        %v3308 = vrot.slane %v3295, %v3307
        %v3309 = vlaneseq
        %v3310 = vshrl.u32 %v3309, 7
        %v3311 = vsub.s32 0, %v3310
        %v3312 = vrot.slane %v3296, %v3311
        %v3313 = vlaneseq
        %v3314 = vshrl.u32 %v3313, 7
        %v3315 = vsub.s32 0, %v3314
        %v3316 = vrot.slane %v3297, %v3315
        %v3317 = vmul.f32 %v3303, %v3308
        %v3318 = vmul.f32 %v3303, %v3312
        %v3319 = vmul.f32 %v3303, %v3316
        %3320 = vset.pattern.permute.xlu0 1
        %3321 = vperm.xlu0 %3320, %v3299
        %v3322 = vpop.permute.xlu0 %3321
        %v3324 = vlaneseq
        %v3325 = vshrl.u32 %v3324, 7
        %v3326 = vsub.s32 1, %v3325
        %v3327 = vrot.slane %v3295, %v3326
        %v3328 = vlaneseq
        %v3329 = vshrl.u32 %v3328, 7
        %v3330 = vsub.s32 1, %v3329
        %v3331 = vrot.slane %v3296, %v3330
        %v3332 = vlaneseq
        %v3333 = vshrl.u32 %v3332, 7
        %v3334 = vsub.s32 1, %v3333
        %v3335 = vrot.slane %v3297, %v3334
        %v3336 = vmul.f32 %v3322, %v3327
        %v3337 = vmul.f32 %v3322, %v3331
        %v3338 = vmul.f32 %v3322, %v3335
        %v3339 = vadd.f32 %v3317, %v3336
        %v3340 = vadd.f32 %v3318, %v3337
        %v3341 = vadd.f32 %v3319, %v3338
        %3342 = vset.pattern.permute.xlu0 2
        %3343 = vperm.xlu0 %3342, %v3299
        %v3344 = vpop.permute.xlu0 %3343
        %v3346 = vlaneseq
        %v3347 = vshrl.u32 %v3346, 7
        %v3348 = vsub.s32 2, %v3347
        %v3349 = vrot.slane %v3295, %v3348
        %v3350 = vlaneseq
        %v3351 = vshrl.u32 %v3350, 7
        %v3352 = vsub.s32 2, %v3351
        %v3353 = vrot.slane %v3296, %v3352
        %v3354 = vlaneseq
        %v3355 = vshrl.u32 %v3354, 7
        %v3356 = vsub.s32 2, %v3355
        %v3357 = vrot.slane %v3297, %v3356
        %v3358 = vmul.f32 %v3344, %v3349
        %v3359 = vmul.f32 %v3344, %v3353
        %v3360 = vmul.f32 %v3344, %v3357
        %v3361 = vadd.f32 %v3339, %v3358
        %v3362 = vadd.f32 %v3340, %v3359
        %v3363 = vadd.f32 %v3341, %v3360
        %3364 = vset.pattern.permute.xlu0 3
        %3365 = vperm.xlu0 %3364, %v3299
        %v3366 = vpop.permute.xlu0 %3365
        %v3368 = vlaneseq
        %v3369 = vshrl.u32 %v3368, 7
        %v3370 = vsub.s32 3, %v3369
        %v3371 = vrot.slane %v3295, %v3370
        %v3372 = vlaneseq
        %v3373 = vshrl.u32 %v3372, 7
        %v3374 = vsub.s32 3, %v3373
        %v3375 = vrot.slane %v3296, %v3374
        %v3376 = vlaneseq
        %v3377 = vshrl.u32 %v3376, 7
        %v3378 = vsub.s32 3, %v3377
        %v3379 = vrot.slane %v3297, %v3378
        %v3380 = vmul.f32 %v3366, %v3371
        %v3381 = vmul.f32 %v3366, %v3375
        %v3382 = vmul.f32 %v3366, %v3379
        %v3383 = vadd.f32 %v3361, %v3380
        %v3384 = vadd.f32 %v3362, %v3381
        %v3385 = vadd.f32 %v3363, %v3382
        %s3386 = scalar_lea.vmem %s8, 8
        %v3387 = vld [vmem:[%s3386] sm:$0xff]
        %v3388 = vmul.f32 %v3383, %v3383
        %v3389 = vmul.f32 %v3384, %v3384
        %v3390 = vmul.f32 %v3385, %v3385
        %3392 = vset.pattern.permute.xlu0 0
        %3393 = vperm.xlu0 %3392, %v3387
        %v3394 = vpop.permute.xlu0 %3393
        %v3396 = vlaneseq
        %v3397 = vshrl.u32 %v3396, 7
        %v3398 = vsub.s32 0, %v3397
        %v3399 = vrot.slane %v3388, %v3398
        %v3400 = vlaneseq
        %v3401 = vshrl.u32 %v3400, 7
        %v3402 = vsub.s32 0, %v3401
        %v3403 = vrot.slane %v3389, %v3402
        %v3404 = vlaneseq
        %v3405 = vshrl.u32 %v3404, 7
        %v3406 = vsub.s32 0, %v3405
        %v3407 = vrot.slane %v3390, %v3406
        %v3408 = vmul.f32 %v3394, %v3399
        %v3409 = vmul.f32 %v3394, %v3403
        %v3410 = vmul.f32 %v3394, %v3407
        %3411 = vset.pattern.permute.xlu0 1
        %3412 = vperm.xlu0 %3411, %v3387
        %v3413 = vpop.permute.xlu0 %3412
        %v3415 = vlaneseq
        %v3416 = vshrl.u32 %v3415, 7
        %v3417 = vsub.s32 1, %v3416
        %v3418 = vrot.slane %v3388, %v3417
        %v3419 = vlaneseq
        %v3420 = vshrl.u32 %v3419, 7
        %v3421 = vsub.s32 1, %v3420
        %v3422 = vrot.slane %v3389, %v3421
        %v3423 = vlaneseq
        %v3424 = vshrl.u32 %v3423, 7
        %v3425 = vsub.s32 1, %v3424
        %v3426 = vrot.slane %v3390, %v3425
        %v3427 = vmul.f32 %v3413, %v3418
        %v3428 = vmul.f32 %v3413, %v3422
        %v3429 = vmul.f32 %v3413, %v3426
        %v3430 = vadd.f32 %v3408, %v3427
        %v3431 = vadd.f32 %v3409, %v3428
        %v3432 = vadd.f32 %v3410, %v3429
        %3433 = vset.pattern.permute.xlu0 2
        %3434 = vperm.xlu0 %3433, %v3387
        %v3435 = vpop.permute.xlu0 %3434
        %v3437 = vlaneseq
        %v3438 = vshrl.u32 %v3437, 7
        %v3439 = vsub.s32 2, %v3438
        %v3440 = vrot.slane %v3388, %v3439
        %v3441 = vlaneseq
        %v3442 = vshrl.u32 %v3441, 7
        %v3443 = vsub.s32 2, %v3442
        %v3444 = vrot.slane %v3389, %v3443
        %v3445 = vlaneseq
        %v3446 = vshrl.u32 %v3445, 7
        %v3447 = vsub.s32 2, %v3446
        %v3448 = vrot.slane %v3390, %v3447
        %v3449 = vmul.f32 %v3435, %v3440
        %v3450 = vmul.f32 %v3435, %v3444
        %v3451 = vmul.f32 %v3435, %v3448
        %v3452 = vadd.f32 %v3430, %v3449
        %v3453 = vadd.f32 %v3431, %v3450
        %v3454 = vadd.f32 %v3432, %v3451
        %3455 = vset.pattern.permute.xlu0 3
        %3456 = vperm.xlu0 %3455, %v3387
        %v3457 = vpop.permute.xlu0 %3456
        %v3459 = vlaneseq
        %v3460 = vshrl.u32 %v3459, 7
        %v3461 = vsub.s32 3, %v3460
        %v3462 = vrot.slane %v3388, %v3461
        %v3463 = vlaneseq
        %v3464 = vshrl.u32 %v3463, 7
        %v3465 = vsub.s32 3, %v3464
        %v3466 = vrot.slane %v3389, %v3465
        %v3467 = vlaneseq
        %v3468 = vshrl.u32 %v3467, 7
        %v3469 = vsub.s32 3, %v3468
        %v3470 = vrot.slane %v3390, %v3469
        %v3471 = vmul.f32 %v3457, %v3462
        %v3472 = vmul.f32 %v3457, %v3466
        %v3473 = vmul.f32 %v3457, %v3470
        %v3474 = vadd.f32 %v3452, %v3471
        %v3475 = vadd.f32 %v3453, %v3472
        %v3476 = vadd.f32 %v3454, %v3473
        %s3477 = scalar_lea.vmem %s9, 8
        %v3478 = vld [vmem:[%s3477] sm:$0xff]
        %3480 = vset.pattern.permute.xlu0 0
        %3481 = vperm.xlu0 %3480, %v3478
        %v3482 = vpop.permute.xlu0 %3481
        %v3484 = vadd.f32 %v3474, %v3482
        %v3485 = vadd.f32 %v3475, %v3482
        %v3486 = vadd.f32 %v3476, %v3482
        %v3487 = vrsqrt.pop %v3484
        %v3488 = vrsqrt.pop %v3485
        %v3489 = vrsqrt.pop %v3486
        %v3490 = vmul.f32 %v3383, %v3487
        %v3491 = vmul.f32 %v3384, %v3488
        %v3492 = vmul.f32 %v3385, %v3489
        %v3493 = vadd.f32 %v3490, %v2067
        %v3494 = vadd.f32 %v3491, %v2068
        %v3495 = vadd.f32 %v3492, %v2069
        %vm3496 = vcmp.ge.f32.partialorder %v3493, 0.0
        %vm3497 = vcmp.ge.f32.partialorder %v3494, 0.0
        %vm3498 = vcmp.ge.f32.partialorder %v3495, 0.0
        %v3499 = vmul.f32 %v3291, %v3493
        %v3500 = vmul.f32 %v3291, %v3494
        %v3501 = vmul.f32 %v3291, %v3495
        %v3502 = vsel %vm3496, %v3493, %v3499
        %v3503 = vsel %vm3497, %v3494, %v3500
        %v3504 = vsel %vm3498, %v3495, %v3501
        %v3505 = vmul.f32 %v3502, %v1999
        %v3506 = vmul.f32 %v3503, %v2003
        %v3507 = vmul.f32 %v3504, %v2007
        %v3508 = vadd.f32 %v3505, %v3506
        %v3509 = vadd.f32 %v3508, %v3507
        %3510 = vadd.xlane.f32.xlu0 %v3509
        %v3511 = vpop.xlane.xlu0 %3510
        %v3512 = vmul.f32 %v3511, 0.00390625
        %s3513 = scalar_lea.vmem %s10, 8
        %v3514 = vld [vmem:[%s3513] sm:$0xff]
        %v3515 = vmul.f32 %v3514, %v3512
        %v3516 = vsel %vm2021, %v3515, 0.0
        %v3517 = vrot.slane %v3516, 4
        %v3518 = vadd.f32 %v3516, %v3517
        %v3519 = vrot.slane %v3518, 2
        %v3520 = vadd.f32 %v3518, %v3519
        %v3521 = vrot.slane %v3520, 1
        %v3522 = vadd.f32 %v3520, %v3521
        %s3523 = scalar_lea.vmem %s11, 1
        %v3524 = vld [vmem:[%s3523] sm:$0x1]
        %v3525 = vmul.f32 %v2030, %v3524
        %v3526 = vadd.f32 %v3522, %v3525
        %s3527 = scalar_lea.vmem %s12, 1
        %v3528 = vld [vmem:[%s3527] sm:$0x1]
        %v3529 = vadd.f32 %v3526, %v3528
        %v3530 = vmax.f32 %v3529, 0.0
        %s3531 = scalar_lea.vmem %s13, 8
        %v3532 = vld [vmem:[%s3531] sm:$0xff]
        %v3533 = vlaneseq
        %v3534 = vshrl.u32 %v3533, 7
        %v3535 = vsub.s32 0, %v3534
        %v3536 = vrot.slane %v3530, %v3535
        %v3537 = vmul.f32 %v3532, %v3536
        %v3538 = vsel %vm2021, %v3537, 0.0
        %3539 = vadd.xlane.f32.xlu0 %v3538
        %v3540 = vpop.xlane.xlu0 %3539
        %s3541 = scalar_lea.vmem %s14, 8
        %v3542 = vld [vmem:[%s3541] sm:$0xff]
        %v3543 = vadd.f32 %v3540, %v3542
        %v3544 = vxor.u32 %v3543, 2147483648
        %v3545 = vmul.f32 %v3544, 1.442695
        %v3546 = vpow.pop %v3545
        %v3547 = vadd.f32 %v3546, 1.0
        %v3548 = vrcp.pop %v3547
        %v3549 = vmul.f32 1.0, %v3548
        %3551 = vset.pattern.permute.xlu0 0
        %3552 = vperm.xlu0 %3551, %v3549
        %v3553 = vpop.permute.xlu0 %3552
        %v3555 = vmul.f32 %v3502, %v3553
        %v3556 = vmul.f32 %v3503, %v3553
        %v3557 = vmul.f32 %v3504, %v3553
        %v3558 = vmul.f32 %v3555, %v1999
        %v3559 = vmul.f32 %v3556, %v2003
        %v3560 = vmul.f32 %v3557, %v2007
        %3561 = vst [vmem:[#allocation2 + $0x8] sm:$0xff] %v3558
        %3562 = vst [vmem:[#allocation2 + $0x10] sm:$0xff] %v3559
        %3563 = vst [vmem:[#allocation2 + $0x18] sm:$0xff] %v3560
        %v3564 = vld [vmem:[#allocation2 + $0x8] sm:$0xff]
        %v3565 = vld [vmem:[#allocation2 + $0x10] sm:$0xff]
        %v3566 = vld [vmem:[#allocation2 + $0x18] sm:$0xff]
        %3567 = vst [vmem:[%s521] sm:$0xff] %v3564
        %3568 = vst [vmem:[%s521 + $0x8] sm:$0xff] %v3565
        %3569 = vst [vmem:[%s521 + $0x10] sm:$0xff] %v3566
        %p3570 = scmp.lt.s32.totalorder %s28, 1
        %s3571 = scalar_select %p3570, %s28, 1
        %s3572 = smul.addr %s3571, 3
        %s3573 = smul.addr %s3572, 8
        %s3574 = scalar_lea.vmem %s15, %s3573
        // Predicated region
        $region89: #{_lambda_.1} parent=79 // pred_check
          %p3575 = pneg %p366
        $region90: #{_lambda_.1} parent=79 // pred_check_branch
          %3577 = sbr.rel (%p3575) target = $region92
        $region91: #{_lambda_.1} parent=79 // pred_region
          _
        $region92: #{_lambda_.1} parent=79 // pred_fallthru
          _
      $region80: #{_lambda_.1} parent=5 // pred_fallthru
        _
      %p3578 = scmp.le.s32.totalorder 2, %s23
      // Predicated region
      $region93: #{_lambda_.1} parent=5 // pred_check
        %p3579 = pneg %p3578
      $region94: #{_lambda_.1} parent=5 // pred_check_branch
        %3581 = sbr.rel (%p3579) target = $region96
      $region95: #{_lambda_.1} parent=5 // pred_region
        %s3582 = ssub.s32 %s23, 2
        // Predicated region
        $region97: #{_lambda_.1} parent=95 // pred_check
          %p3583 = pneg %p372
        $region98: #{_lambda_.1} parent=95 // pred_check_branch
          %3585 = sbr.rel (%p3583) target = $region100
        $region99: #{_lambda_.1} parent=95 // pred_region
          %p3586 = scmp.lt.s32.totalorder %s29, 1
          %s3587 = scalar_select %p3586, %s29, 1
          %s3588 = smul.addr %s3587, 3
          %s3589 = smul.addr %s3588, 8
          %s3590 = scalar_lea.vmem %s15, %s3589
        $region100: #{_lambda_.1} parent=95 // pred_fallthru
          _
      $region96: #{_lambda_.1} parent=5 // pred_fallthru
        _
    $region6: #{_lambda_.1} parent=1 // loop_footer
      %s27 = sadd.s32 1, %s23
    $region7: #{_lambda_.1} parent=1 // loop_footer_branch
      %22 = sbr.rel target = $region3
    $region8: #{_lambda_.1} parent=1 // loop_exit
      _
    %3591 = vsyncpa [#allocation5], 1
    %s3592 = scalar_lea.sflag [#allocation5], 1
    %3593 = vsyncpa %s3592, 1
    %3594 = vsyncpa [#allocation7], 1

</llo_original>
